<compile_context>
chip_gen: v7x
topology: tpu7x:2x2x1
jax: 0.10.0
libtpu: 0.0.40
codegen_flags: <defaults>
</compile_context>

<pallas_src>
import jax
import jax.numpy as jnp
from jax.experimental import pallas as pl
from jax.experimental.pallas import tpu as pltpu

# ----------------------- hyperparameters (small, synthetic) -----------------
BATCH     = 2
WINDOW    = 16      # hparams.window
N_MULTIV  = 8       # hparams.n_multiv (sequence length for self-attention)
N_KERNELS = 32      # hparams.n_kernels
W_KERNEL  = 1       # hparams.w_kernel
D_MODEL   = 32      # hparams.d_model
D_INNER   = 64      # hparams.d_inner
N_HEAD    = 4       # hparams.n_head
D_K       = 8       # hparams.d_k
D_V       = 8       # hparams.d_v
N_LAYERS  = 2       # hparams.n_layers
LN_EPS    = 1e-5    # PyTorch LayerNorm default eps

HDK    = N_HEAD * D_K                      # 32
HDV    = N_HEAD * D_V                      # 32
QKV_W  = 2 * HDK + HDV                     # 96 (fused q|k|v lane width)
VEC_W  = max(QKV_W, D_INNER, D_MODEL)      # 96 (per-layer vector slab width)
GLOB_W = max(N_KERNELS, D_MODEL)           # 32 (global bias slab width)

# Order in which packed weight arrays are passed to the fused pallas_call / kernel.
WEIGHT_ORDER = ["wconv", "win", "wout", "bglob", "wqkv", "wfc", "w1", "w2", "vecs"]


def _layer_norm(x, gamma, beta):
    # var = E[x^2] - mean^2 : two independent reductions instead of a dependent two-pass.
    mean = jnp.mean(x, axis=-1, keepdims=True)
    msq = jnp.mean(x * x, axis=-1, keepdims=True)
    var = msq - mean * mean
    return (x - mean) * jax.lax.rsqrt(var + LN_EPS) * gamma + beta


# --------------------- single fused forward kernel (whole batch) -------------
def fused_forward_kernel(x_ref, wconv_ref, win_ref, wout_ref, bglob_ref,
                         wqkv_ref, wfc_ref, w1_ref, w2_ref, vecs_ref, o_ref):
    bglob = bglob_ref[...]                         # (3, GLOB_W): [bconv, bin, bout]
    x = x_ref[...]                                 # (B*M, W) pre-transposed rows

    # Conv2d(1, n_kernels, (window, 1)) + ReLU  ==  row-major dot over the window axis.
    h = jnp.maximum(jnp.dot(x, wconv_ref[...], preferred_element_type=jnp.float32)
                    + bglob[0:1, :N_KERNELS], 0.0)          # (B*M, n_kernels)
    # TODO(synk): dropout after conv / in attention / FFN is identity here (eval mode).
    e = (jnp.dot(h, win_ref[...], preferred_element_type=jnp.float32)
         + bglob[1:2, :D_MODEL])                            # (B*M, d_model)

    for l in range(N_LAYERS):                      # static unroll, weights VMEM-resident
        vec = vecs_ref[l]                          # (8, VEC_W) packed per-layer vectors

        # Fused Q|K|V projection: one matmul per layer; wq/bq pre-scaled by 1/sqrt(d_k).
        qkv = (jnp.dot(e, wqkv_ref[l], preferred_element_type=jnp.float32)
               + vec[0:1, :QKV_W])                          # (B*M, 96)
        q = qkv[:, :HDK]
        k = qkv[:, HDK:2 * HDK]
        v = qkv[:, 2 * HDK:]

        # Attention scores / PV per (batch, head); everything else stays row-stacked.
        batch_heads = []
        for b in range(BATCH):                     # static unroll (B=2)
            r0 = b * N_MULTIV
            per_head = []
            for hd in range(N_HEAD):               # static unroll (H=4)
                qh = q[r0:r0 + N_MULTIV, hd * D_K:(hd + 1) * D_K]
                kh = k[r0:r0 + N_MULTIV, hd * D_K:(hd + 1) * D_K]
                vh = v[r0:r0 + N_MULTIV, hd * D_V:(hd + 1) * D_V]
                # scores: contract last dims directly (no transpose of kh)
                s = jax.lax.dot_general(qh, kh, (((1,), (1,)), ((), ())),
                                        preferred_element_type=jnp.float32)   # (M, M)
                s = s - jnp.max(s, axis=-1, keepdims=True)   # stable softmax (dim=-1)
                p = jnp.exp(s)
                p = p * pl.reciprocal(jnp.sum(p, axis=-1, keepdims=True), approx=True)
                per_head.append(jnp.dot(p, vh, preferred_element_type=jnp.float32))
            batch_heads.append(jnp.concatenate(per_head, axis=-1))   # (M, H*D_V)
        heads = jnp.concatenate(batch_heads, axis=0)                 # (B*M, H*D_V)

        # fc(concat(heads)): ONE matmul against the full W_fc.
        fc = (jnp.dot(heads, wfc_ref[l], preferred_element_type=jnp.float32)
              + vec[1:2, :D_MODEL])
        e = _layer_norm(fc + e, vec[2:3, :D_MODEL], vec[3:4, :D_MODEL])

        # Position-wise FFN (Conv1d k=1 == Linear), residual + LayerNorm.
        f = jnp.maximum(jnp.dot(e, w1_ref[l], preferred_element_type=jnp.float32)
                        + vec[4:5, :D_INNER], 0.0)
        f = jnp.dot(f, w2_ref[l], preferred_element_type=jnp.float32) + vec[5:6, :D_MODEL]
        e = _layer_norm(f + e, vec[6:7, :D_MODEL], vec[7:8, :D_MODEL])

    o_ref[...] = (jnp.dot(e, wout_ref[...], preferred_element_type=jnp.float32)
                  + bglob[2:3, :N_KERNELS])                  # (B*M, n_kernels)


# ----------------------------- wrapper ---------------------------------------
def single_global_selfattn_forward(x, params):
    """x: (B, window, n_multiv) float32.  Returns (enc_output,) like PyTorch."""
    B, W, M = x.shape
    # Fold the module's transpose(1,2) into the (tiny, 2 KiB) wrapper-side layout so
    # the in-kernel conv is a plain row-major dot.
    x_rows = jnp.swapaxes(x, 1, 2).reshape(B * M, W)
    weights = [params[name] for name in WEIGHT_ORDER]
    n_in = 1 + len(weights)
    out = pl.pallas_call(
        fused_forward_kernel,
        out_shape=jax.ShapeDtypeStruct((B * M, N_KERNELS), jnp.float32),
        in_specs=[pl.BlockSpec(memory_space=pltpu.MemorySpace.VMEM)] * n_in,
        out_specs=pl.BlockSpec(memory_space=pltpu.MemorySpace.VMEM),
    )(x_rows, *weights)
    return (out.reshape(B, M, N_KERNELS),)


# ----------------------------- parameters -------------------------------------
def init_params(key):
    keys = iter(jax.random.split(key, 64))

    def nrm(shape, scale=0.1):
        return (scale * jax.random.normal(next(keys), shape)).astype(jnp.float32)

    inv_temp = 1.0 / (float(D_K) ** 0.5)   # folded into wq/bq; NOT applied in-kernel

    # Q/K/V projections fused along the output (lane) axis.
    wq = nrm((N_LAYERS, D_MODEL, HDK)) * inv_temp
    wk = nrm((N_LAYERS, D_MODEL, HDK))
    wv = nrm((N_LAYERS, D_MODEL, HDV))
    wqkv = jnp.concatenate([wq, wk, wv], axis=-1)            # (L, d_model, 96)

    bq = nrm((N_LAYERS, 1, HDK)) * inv_temp
    bk = nrm((N_LAYERS, 1, HDK))
    bv = nrm((N_LAYERS, 1, HDV))
    bqkv = jnp.concatenate([bq, bk, bv], axis=-1)            # (L, 1, 96)

    bfc = nrm((N_LAYERS, 1, D_MODEL))
    g1  = jnp.ones((N_LAYERS, 1, D_MODEL), jnp.float32)
    b1  = jnp.zeros((N_LAYERS, 1, D_MODEL), jnp.float32)
    bb1 = nrm((N_LAYERS, 1, D_INNER))
    bb2 = nrm((N_LAYERS, 1, D_MODEL))
    g2  = jnp.ones((N_LAYERS, 1, D_MODEL), jnp.float32)
    b2  = jnp.zeros((N_LAYERS, 1, D_MODEL), jnp.float32)

    def padv(v, width):   # (L,1,w) -> (L,1,width)
        return jnp.pad(v, ((0, 0), (0, 0), (0, width - v.shape[-1])))

    # All per-layer vectors packed into one (L, 8, VEC_W) slab (row order matters).
    vecs = jnp.concatenate(
        [padv(v, VEC_W) for v in (bqkv, bfc, g1, b1, bb1, bb2, g2, b2)], axis=1)

    def padg(v, width):   # (1,w) -> (1,width)
        return jnp.pad(v, ((0, 0), (0, width - v.shape[-1])))

    bconv = nrm((1, N_KERNELS))
    bin_  = nrm((1, D_MODEL))
    bout  = nrm((1, N_KERNELS))
    bglob = jnp.concatenate([padg(v, GLOB_W) for v in (bconv, bin_, bout)], axis=0)  # (3, 32)

    params = {
        # conv2 weight (n_kernels, 1, window, 1) stored pre-transposed -> (window, n_kernels)
        "wconv": nrm((WINDOW, N_KERNELS)),
        "win":   nrm((N_KERNELS, D_MODEL)),           # in_linear weight.T
        "wout":  nrm((D_MODEL, N_KERNELS)),           # out_linear weight.T
        "bglob": bglob,                               # rows: bconv | bin | bout
        "wqkv":  wqkv,                                # fused Q|K|V (q part pre-scaled)
        "wfc":   nrm((N_LAYERS, HDV, D_MODEL)),
        "w1":    nrm((N_LAYERS, D_MODEL, D_INNER)),
        "w2":    nrm((N_LAYERS, D_INNER, D_MODEL)),
        "vecs":  vecs,                                # packed per-layer vectors
    }
    return params


if __name__ == "__main__":
    key = jax.random.PRNGKey(0)
    k_x, k_p = jax.random.split(key)
    x = jax.random.normal(k_x, (BATCH, WINDOW, N_MULTIV), dtype=jnp.float32)
    params = init_params(k_p)

    (out,) = single_global_selfattn_forward(x, params)
    out = jax.block_until_ready(out)
    assert out.shape == (BATCH, N_MULTIV, N_KERNELS), out.shape
    assert bool(jnp.all(jnp.isfinite(out)))
    print("KERNEL_OK")
</pallas_src>

<mosaic_0001>
module attributes {stable_mosaic.version = 11 : i64} {
  func.func @fused_forward_kernel(%arg0: memref<16x16xf32, #tpu.memory_space<vmem>>, %arg1: memref<16x32xf32, #tpu.memory_space<vmem>>, %arg2: memref<32x32xf32, #tpu.memory_space<vmem>>, %arg3: memref<32x32xf32, #tpu.memory_space<vmem>>, %arg4: memref<3x32xf32, #tpu.memory_space<vmem>>, %arg5: memref<2x32x96xf32, #tpu.memory_space<vmem>>, %arg6: memref<2x32x32xf32, #tpu.memory_space<vmem>>, %arg7: memref<2x32x64xf32, #tpu.memory_space<vmem>>, %arg8: memref<2x64x32xf32, #tpu.memory_space<vmem>>, %arg9: memref<2x8x96xf32, #tpu.memory_space<vmem>>, %arg10: memref<16x32xf32, #tpu.memory_space<vmem>>) attributes {dimension_semantics = [], scalar_prefetch = 0 : i64, scratch_operands = 0 : i64, tpu.core_type = #tpu.core_type<tc>} {
    %c0 = arith.constant 0 : index
    %c0_0 = arith.constant 0 : index
    %0 = vector.load %arg4[%c0, %c0_0] : memref<3x32xf32, #tpu.memory_space<vmem>>, vector<3x32xf32>
    %c0_1 = arith.constant 0 : index
    %c0_2 = arith.constant 0 : index
    %1 = vector.load %arg0[%c0_1, %c0_2] : memref<16x16xf32, #tpu.memory_space<vmem>>, vector<16x16xf32>
    %c0_3 = arith.constant 0 : index
    %c0_4 = arith.constant 0 : index
    %2 = vector.load %arg1[%c0_3, %c0_4] : memref<16x32xf32, #tpu.memory_space<vmem>>, vector<16x32xf32>
    %cst = arith.constant dense<0.000000e+00> : vector<16x32xf32>
    %3 = tpu.matmul %1, %2, %cst {dimension_numbers = #tpu.dot_dimension_numbers<[1], [0], [0], [1], [0, 0, 1, 1], [], []>} : vector<16x16xf32>, vector<16x32xf32>, vector<16x32xf32> -> vector<16x32xf32>
    %4 = vector.extract_strided_slice %0 {offsets = [0, 0], sizes = [1, 32], strides = [1, 1]} : vector<3x32xf32> to vector<1x32xf32>
    %5 = vector.broadcast %4 : vector<1x32xf32> to vector<16x32xf32>
    %6 = arith.addf %3, %5 : vector<16x32xf32>
    %cst_5 = arith.constant 0.000000e+00 : f32
    %7 = vector.broadcast %cst_5 : f32 to vector<16x32xf32>
    %8 = arith.maximumf %6, %7 : vector<16x32xf32>
    %c0_6 = arith.constant 0 : index
    %c0_7 = arith.constant 0 : index
    %9 = vector.load %arg2[%c0_6, %c0_7] : memref<32x32xf32, #tpu.memory_space<vmem>>, vector<32x32xf32>
    %cst_8 = arith.constant dense<0.000000e+00> : vector<16x32xf32>
    %10 = tpu.matmul %8, %9, %cst_8 {dimension_numbers = #tpu.dot_dimension_numbers<[1], [0], [0], [1], [0, 0, 1, 1], [], []>} : vector<16x32xf32>, vector<32x32xf32>, vector<16x32xf32> -> vector<16x32xf32>
    %11 = vector.extract_strided_slice %0 {offsets = [1, 0], sizes = [1, 32], strides = [1, 1]} : vector<3x32xf32> to vector<1x32xf32>
    %12 = vector.broadcast %11 : vector<1x32xf32> to vector<16x32xf32>
    %13 = arith.addf %10, %12 : vector<16x32xf32>
    %c0_9 = arith.constant 0 : index
    %c0_10 = arith.constant 0 : index
    %c0_11 = arith.constant 0 : index
    %14 = vector.load %arg9[%c0_9, %c0_10, %c0_11] : memref<2x8x96xf32, #tpu.memory_space<vmem>>, vector<1x8x96xf32>
    %15 = vector.shape_cast %14 : vector<1x8x96xf32> to vector<8x96xf32>
    %c0_12 = arith.constant 0 : index
    %c0_13 = arith.constant 0 : index
    %c0_14 = arith.constant 0 : index
    %16 = vector.load %arg5[%c0_12, %c0_13, %c0_14] : memref<2x32x96xf32, #tpu.memory_space<vmem>>, vector<1x32x96xf32>
    %17 = vector.shape_cast %16 : vector<1x32x96xf32> to vector<32x96xf32>
    %cst_15 = arith.constant dense<0.000000e+00> : vector<16x96xf32>
    %18 = tpu.matmul %13, %17, %cst_15 {dimension_numbers = #tpu.dot_dimension_numbers<[1], [0], [0], [1], [0, 0, 1, 1], [], []>} : vector<16x32xf32>, vector<32x96xf32>, vector<16x96xf32> -> vector<16x96xf32>
    %19 = vector.extract_strided_slice %15 {offsets = [0, 0], sizes = [1, 96], strides = [1, 1]} : vector<8x96xf32> to vector<1x96xf32>
    %20 = vector.broadcast %19 : vector<1x96xf32> to vector<16x96xf32>
    %21 = arith.addf %18, %20 : vector<16x96xf32>
    %22 = vector.extract_strided_slice %21 {offsets = [0, 0], sizes = [16, 32], strides = [1, 1]} : vector<16x96xf32> to vector<16x32xf32>
    %23 = vector.extract_strided_slice %21 {offsets = [0, 32], sizes = [16, 32], strides = [1, 1]} : vector<16x96xf32> to vector<16x32xf32>
    %24 = vector.extract_strided_slice %21 {offsets = [0, 64], sizes = [16, 32], strides = [1, 1]} : vector<16x96xf32> to vector<16x32xf32>
    %25 = vector.extract_strided_slice %22 {offsets = [0, 0], sizes = [8, 8], strides = [1, 1]} : vector<16x32xf32> to vector<8x8xf32>
    %26 = vector.extract_strided_slice %23 {offsets = [0, 0], sizes = [8, 8], strides = [1, 1]} : vector<16x32xf32> to vector<8x8xf32>
    %27 = vector.extract_strided_slice %24 {offsets = [0, 0], sizes = [8, 8], strides = [1, 1]} : vector<16x32xf32> to vector<8x8xf32>
    %cst_16 = arith.constant dense<0.000000e+00> : vector<8x8xf32>
    %28 = tpu.matmul %25, %26, %cst_16 {dimension_numbers = #tpu.dot_dimension_numbers<[1], [1], [0], [0], [0, 0, 1, 0], [], []>} : vector<8x8xf32>, vector<8x8xf32>, vector<8x8xf32> -> vector<8x8xf32>
    %cst_17 = arith.constant dense<0xFF800000> : vector<8xf32>
    %29 = vector.multi_reduction <maximumf>, %28, %cst_17 [1] : vector<8x8xf32> to vector<8xf32>
    %30 = vector.shape_cast %29 : vector<8xf32> to vector<8x1xf32>
    %31 = vector.broadcast %30 : vector<8x1xf32> to vector<8x8xf32>
    %32 = arith.subf %28, %31 : vector<8x8xf32>
    %33 = math.exp %32 : vector<8x8xf32>
    %cst_18 = arith.constant dense<0.000000e+00> : vector<8xf32>
    %34 = vector.multi_reduction <add>, %33, %cst_18 [1] : vector<8x8xf32> to vector<8xf32>
    %35 = vector.shape_cast %34 : vector<8xf32> to vector<8x1xf32>
    %36 = tpu.reciprocal %35 {approx = true} : vector<8x1xf32> -> vector<8x1xf32>
    %37 = vector.broadcast %36 : vector<8x1xf32> to vector<8x8xf32>
    %38 = arith.mulf %33, %37 : vector<8x8xf32>
    %cst_19 = arith.constant dense<0.000000e+00> : vector<8x8xf32>
    %39 = tpu.matmul %38, %27, %cst_19 {dimension_numbers = #tpu.dot_dimension_numbers<[1], [0], [0], [1], [0, 0, 1, 1], [], []>} : vector<8x8xf32>, vector<8x8xf32>, vector<8x8xf32> -> vector<8x8xf32>
    %40 = vector.extract_strided_slice %22 {offsets = [0, 8], sizes = [8, 8], strides = [1, 1]} : vector<16x32xf32> to vector<8x8xf32>
    %41 = vector.extract_strided_slice %23 {offsets = [0, 8], sizes = [8, 8], strides = [1, 1]} : vector<16x32xf32> to vector<8x8xf32>
    %42 = vector.extract_strided_slice %24 {offsets = [0, 8], sizes = [8, 8], strides = [1, 1]} : vector<16x32xf32> to vector<8x8xf32>
    %cst_20 = arith.constant dense<0.000000e+00> : vector<8x8xf32>
    %43 = tpu.matmul %40, %41, %cst_20 {dimension_numbers = #tpu.dot_dimension_numbers<[1], [1], [0], [0], [0, 0, 1, 0], [], []>} : vector<8x8xf32>, vector<8x8xf32>, vector<8x8xf32> -> vector<8x8xf32>
    %cst_21 = arith.constant dense<0xFF800000> : vector<8xf32>
    %44 = vector.multi_reduction <maximumf>, %43, %cst_21 [1] : vector<8x8xf32> to vector<8xf32>
    %45 = vector.shape_cast %44 : vector<8xf32> to vector<8x1xf32>
    %46 = vector.broadcast %45 : vector<8x1xf32> to vector<8x8xf32>
    %47 = arith.subf %43, %46 : vector<8x8xf32>
    %48 = math.exp %47 : vector<8x8xf32>
    %cst_22 = arith.constant dense<0.000000e+00> : vector<8xf32>
    %49 = vector.multi_reduction <add>, %48, %cst_22 [1] : vector<8x8xf32> to vector<8xf32>
    %50 = vector.shape_cast %49 : vector<8xf32> to vector<8x1xf32>
    %51 = tpu.reciprocal %50 {approx = true} : vector<8x1xf32> -> vector<8x1xf32>
    %52 = vector.broadcast %51 : vector<8x1xf32> to vector<8x8xf32>
    %53 = arith.mulf %48, %52 : vector<8x8xf32>
    %cst_23 = arith.constant dense<0.000000e+00> : vector<8x8xf32>
    %54 = tpu.matmul %53, %42, %cst_23 {dimension_numbers = #tpu.dot_dimension_numbers<[1], [0], [0], [1], [0, 0, 1, 1], [], []>} : vector<8x8xf32>, vector<8x8xf32>, vector<8x8xf32> -> vector<8x8xf32>
    %55 = vector.extract_strided_slice %22 {offsets = [0, 16], sizes = [8, 8], strides = [1, 1]} : vector<16x32xf32> to vector<8x8xf32>
    %56 = vector.extract_strided_slice %23 {offsets = [0, 16], sizes = [8, 8], strides = [1, 1]} : vector<16x32xf32> to vector<8x8xf32>
    %57 = vector.extract_strided_slice %24 {offsets = [0, 16], sizes = [8, 8], strides = [1, 1]} : vector<16x32xf32> to vector<8x8xf32>
    %cst_24 = arith.constant dense<0.000000e+00> : vector<8x8xf32>
    %58 = tpu.matmul %55, %56, %cst_24 {dimension_numbers = #tpu.dot_dimension_numbers<[1], [1], [0], [0], [0, 0, 1, 0], [], []>} : vector<8x8xf32>, vector<8x8xf32>, vector<8x8xf32> -> vector<8x8xf32>
    %cst_25 = arith.constant dense<0xFF800000> : vector<8xf32>
    %59 = vector.multi_reduction <maximumf>, %58, %cst_25 [1] : vector<8x8xf32> to vector<8xf32>
    %60 = vector.shape_cast %59 : vector<8xf32> to vector<8x1xf32>
    %61 = vector.broadcast %60 : vector<8x1xf32> to vector<8x8xf32>
    %62 = arith.subf %58, %61 : vector<8x8xf32>
    %63 = math.exp %62 : vector<8x8xf32>
    %cst_26 = arith.constant dense<0.000000e+00> : vector<8xf32>
    %64 = vector.multi_reduction <add>, %63, %cst_26 [1] : vector<8x8xf32> to vector<8xf32>
    %65 = vector.shape_cast %64 : vector<8xf32> to vector<8x1xf32>
    %66 = tpu.reciprocal %65 {approx = true} : vector<8x1xf32> -> vector<8x1xf32>
    %67 = vector.broadcast %66 : vector<8x1xf32> to vector<8x8xf32>
    %68 = arith.mulf %63, %67 : vector<8x8xf32>
    %cst_27 = arith.constant dense<0.000000e+00> : vector<8x8xf32>
    %69 = tpu.matmul %68, %57, %cst_27 {dimension_numbers = #tpu.dot_dimension_numbers<[1], [0], [0], [1], [0, 0, 1, 1], [], []>} : vector<8x8xf32>, vector<8x8xf32>, vector<8x8xf32> -> vector<8x8xf32>
    %70 = vector.extract_strided_slice %22 {offsets = [0, 24], sizes = [8, 8], strides = [1, 1]} : vector<16x32xf32> to vector<8x8xf32>
    %71 = vector.extract_strided_slice %23 {offsets = [0, 24], sizes = [8, 8], strides = [1, 1]} : vector<16x32xf32> to vector<8x8xf32>
    %72 = vector.extract_strided_slice %24 {offsets = [0, 24], sizes = [8, 8], strides = [1, 1]} : vector<16x32xf32> to vector<8x8xf32>
    %cst_28 = arith.constant dense<0.000000e+00> : vector<8x8xf32>
    %73 = tpu.matmul %70, %71, %cst_28 {dimension_numbers = #tpu.dot_dimension_numbers<[1], [1], [0], [0], [0, 0, 1, 0], [], []>} : vector<8x8xf32>, vector<8x8xf32>, vector<8x8xf32> -> vector<8x8xf32>
    %cst_29 = arith.constant dense<0xFF800000> : vector<8xf32>
    %74 = vector.multi_reduction <maximumf>, %73, %cst_29 [1] : vector<8x8xf32> to vector<8xf32>
    %75 = vector.shape_cast %74 : vector<8xf32> to vector<8x1xf32>
    %76 = vector.broadcast %75 : vector<8x1xf32> to vector<8x8xf32>
    %77 = arith.subf %73, %76 : vector<8x8xf32>
    %78 = math.exp %77 : vector<8x8xf32>
    %cst_30 = arith.constant dense<0.000000e+00> : vector<8xf32>
    %79 = vector.multi_reduction <add>, %78, %cst_30 [1] : vector<8x8xf32> to vector<8xf32>
    %80 = vector.shape_cast %79 : vector<8xf32> to vector<8x1xf32>
    %81 = tpu.reciprocal %80 {approx = true} : vector<8x1xf32> -> vector<8x1xf32>
    %82 = vector.broadcast %81 : vector<8x1xf32> to vector<8x8xf32>
    %83 = arith.mulf %78, %82 : vector<8x8xf32>
    %cst_31 = arith.constant dense<0.000000e+00> : vector<8x8xf32>
    %84 = tpu.matmul %83, %72, %cst_31 {dimension_numbers = #tpu.dot_dimension_numbers<[1], [0], [0], [1], [0, 0, 1, 1], [], []>} : vector<8x8xf32>, vector<8x8xf32>, vector<8x8xf32> -> vector<8x8xf32>
    %85 = tpu.concatenate %39, %54, %69, %84 in 1 : vector<8x8xf32>, vector<8x8xf32>, vector<8x8xf32>, vector<8x8xf32> -> vector<8x32xf32>
    %86 = vector.extract_strided_slice %22 {offsets = [8, 0], sizes = [8, 8], strides = [1, 1]} : vector<16x32xf32> to vector<8x8xf32>
    %87 = vector.extract_strided_slice %23 {offsets = [8, 0], sizes = [8, 8], strides = [1, 1]} : vector<16x32xf32> to vector<8x8xf32>
    %88 = vector.extract_strided_slice %24 {offsets = [8, 0], sizes = [8, 8], strides = [1, 1]} : vector<16x32xf32> to vector<8x8xf32>
    %cst_32 = arith.constant dense<0.000000e+00> : vector<8x8xf32>
    %89 = tpu.matmul %86, %87, %cst_32 {dimension_numbers = #tpu.dot_dimension_numbers<[1], [1], [0], [0], [0, 0, 1, 0], [], []>} : vector<8x8xf32>, vector<8x8xf32>, vector<8x8xf32> -> vector<8x8xf32>
    %cst_33 = arith.constant dense<0xFF800000> : vector<8xf32>
    %90 = vector.multi_reduction <maximumf>, %89, %cst_33 [1] : vector<8x8xf32> to vector<8xf32>
    %91 = vector.shape_cast %90 : vector<8xf32> to vector<8x1xf32>
    %92 = vector.broadcast %91 : vector<8x1xf32> to vector<8x8xf32>
    %93 = arith.subf %89, %92 : vector<8x8xf32>
    %94 = math.exp %93 : vector<8x8xf32>
    %cst_34 = arith.constant dense<0.000000e+00> : vector<8xf32>
    %95 = vector.multi_reduction <add>, %94, %cst_34 [1] : vector<8x8xf32> to vector<8xf32>
    %96 = vector.shape_cast %95 : vector<8xf32> to vector<8x1xf32>
    %97 = tpu.reciprocal %96 {approx = true} : vector<8x1xf32> -> vector<8x1xf32>
    %98 = vector.broadcast %97 : vector<8x1xf32> to vector<8x8xf32>
    %99 = arith.mulf %94, %98 : vector<8x8xf32>
    %cst_35 = arith.constant dense<0.000000e+00> : vector<8x8xf32>
    %100 = tpu.matmul %99, %88, %cst_35 {dimension_numbers = #tpu.dot_dimension_numbers<[1], [0], [0], [1], [0, 0, 1, 1], [], []>} : vector<8x8xf32>, vector<8x8xf32>, vector<8x8xf32> -> vector<8x8xf32>
    %101 = vector.extract_strided_slice %22 {offsets = [8, 8], sizes = [8, 8], strides = [1, 1]} : vector<16x32xf32> to vector<8x8xf32>
    %102 = vector.extract_strided_slice %23 {offsets = [8, 8], sizes = [8, 8], strides = [1, 1]} : vector<16x32xf32> to vector<8x8xf32>
    %103 = vector.extract_strided_slice %24 {offsets = [8, 8], sizes = [8, 8], strides = [1, 1]} : vector<16x32xf32> to vector<8x8xf32>
    %cst_36 = arith.constant dense<0.000000e+00> : vector<8x8xf32>
    %104 = tpu.matmul %101, %102, %cst_36 {dimension_numbers = #tpu.dot_dimension_numbers<[1], [1], [0], [0], [0, 0, 1, 0], [], []>} : vector<8x8xf32>, vector<8x8xf32>, vector<8x8xf32> -> vector<8x8xf32>
    %cst_37 = arith.constant dense<0xFF800000> : vector<8xf32>
    %105 = vector.multi_reduction <maximumf>, %104, %cst_37 [1] : vector<8x8xf32> to vector<8xf32>
    %106 = vector.shape_cast %105 : vector<8xf32> to vector<8x1xf32>
    %107 = vector.broadcast %106 : vector<8x1xf32> to vector<8x8xf32>
    %108 = arith.subf %104, %107 : vector<8x8xf32>
    %109 = math.exp %108 : vector<8x8xf32>
    %cst_38 = arith.constant dense<0.000000e+00> : vector<8xf32>
    %110 = vector.multi_reduction <add>, %109, %cst_38 [1] : vector<8x8xf32> to vector<8xf32>
    %111 = vector.shape_cast %110 : vector<8xf32> to vector<8x1xf32>
    %112 = tpu.reciprocal %111 {approx = true} : vector<8x1xf32> -> vector<8x1xf32>
    %113 = vector.broadcast %112 : vector<8x1xf32> to vector<8x8xf32>
    %114 = arith.mulf %109, %113 : vector<8x8xf32>
    %cst_39 = arith.constant dense<0.000000e+00> : vector<8x8xf32>
    %115 = tpu.matmul %114, %103, %cst_39 {dimension_numbers = #tpu.dot_dimension_numbers<[1], [0], [0], [1], [0, 0, 1, 1], [], []>} : vector<8x8xf32>, vector<8x8xf32>, vector<8x8xf32> -> vector<8x8xf32>
    %116 = vector.extract_strided_slice %22 {offsets = [8, 16], sizes = [8, 8], strides = [1, 1]} : vector<16x32xf32> to vector<8x8xf32>
    %117 = vector.extract_strided_slice %23 {offsets = [8, 16], sizes = [8, 8], strides = [1, 1]} : vector<16x32xf32> to vector<8x8xf32>
    %118 = vector.extract_strided_slice %24 {offsets = [8, 16], sizes = [8, 8], strides = [1, 1]} : vector<16x32xf32> to vector<8x8xf32>
    %cst_40 = arith.constant dense<0.000000e+00> : vector<8x8xf32>
    %119 = tpu.matmul %116, %117, %cst_40 {dimension_numbers = #tpu.dot_dimension_numbers<[1], [1], [0], [0], [0, 0, 1, 0], [], []>} : vector<8x8xf32>, vector<8x8xf32>, vector<8x8xf32> -> vector<8x8xf32>
    %cst_41 = arith.constant dense<0xFF800000> : vector<8xf32>
    %120 = vector.multi_reduction <maximumf>, %119, %cst_41 [1] : vector<8x8xf32> to vector<8xf32>
    %121 = vector.shape_cast %120 : vector<8xf32> to vector<8x1xf32>
    %122 = vector.broadcast %121 : vector<8x1xf32> to vector<8x8xf32>
    %123 = arith.subf %119, %122 : vector<8x8xf32>
    %124 = math.exp %123 : vector<8x8xf32>
    %cst_42 = arith.constant dense<0.000000e+00> : vector<8xf32>
    %125 = vector.multi_reduction <add>, %124, %cst_42 [1] : vector<8x8xf32> to vector<8xf32>
    %126 = vector.shape_cast %125 : vector<8xf32> to vector<8x1xf32>
    %127 = tpu.reciprocal %126 {approx = true} : vector<8x1xf32> -> vector<8x1xf32>
    %128 = vector.broadcast %127 : vector<8x1xf32> to vector<8x8xf32>
    %129 = arith.mulf %124, %128 : vector<8x8xf32>
    %cst_43 = arith.constant dense<0.000000e+00> : vector<8x8xf32>
    %130 = tpu.matmul %129, %118, %cst_43 {dimension_numbers = #tpu.dot_dimension_numbers<[1], [0], [0], [1], [0, 0, 1, 1], [], []>} : vector<8x8xf32>, vector<8x8xf32>, vector<8x8xf32> -> vector<8x8xf32>
    %131 = vector.extract_strided_slice %22 {offsets = [8, 24], sizes = [8, 8], strides = [1, 1]} : vector<16x32xf32> to vector<8x8xf32>
    %132 = vector.extract_strided_slice %23 {offsets = [8, 24], sizes = [8, 8], strides = [1, 1]} : vector<16x32xf32> to vector<8x8xf32>
    %133 = vector.extract_strided_slice %24 {offsets = [8, 24], sizes = [8, 8], strides = [1, 1]} : vector<16x32xf32> to vector<8x8xf32>
    %cst_44 = arith.constant dense<0.000000e+00> : vector<8x8xf32>
    %134 = tpu.matmul %131, %132, %cst_44 {dimension_numbers = #tpu.dot_dimension_numbers<[1], [1], [0], [0], [0, 0, 1, 0], [], []>} : vector<8x8xf32>, vector<8x8xf32>, vector<8x8xf32> -> vector<8x8xf32>
    %cst_45 = arith.constant dense<0xFF800000> : vector<8xf32>
    %135 = vector.multi_reduction <maximumf>, %134, %cst_45 [1] : vector<8x8xf32> to vector<8xf32>
    %136 = vector.shape_cast %135 : vector<8xf32> to vector<8x1xf32>
    %137 = vector.broadcast %136 : vector<8x1xf32> to vector<8x8xf32>
    %138 = arith.subf %134, %137 : vector<8x8xf32>
    %139 = math.exp %138 : vector<8x8xf32>
    %cst_46 = arith.constant dense<0.000000e+00> : vector<8xf32>
    %140 = vector.multi_reduction <add>, %139, %cst_46 [1] : vector<8x8xf32> to vector<8xf32>
    %141 = vector.shape_cast %140 : vector<8xf32> to vector<8x1xf32>
    %142 = tpu.reciprocal %141 {approx = true} : vector<8x1xf32> -> vector<8x1xf32>
    %143 = vector.broadcast %142 : vector<8x1xf32> to vector<8x8xf32>
    %144 = arith.mulf %139, %143 : vector<8x8xf32>
    %cst_47 = arith.constant dense<0.000000e+00> : vector<8x8xf32>
    %145 = tpu.matmul %144, %133, %cst_47 {dimension_numbers = #tpu.dot_dimension_numbers<[1], [0], [0], [1], [0, 0, 1, 1], [], []>} : vector<8x8xf32>, vector<8x8xf32>, vector<8x8xf32> -> vector<8x8xf32>
    %146 = tpu.concatenate %100, %115, %130, %145 in 1 : vector<8x8xf32>, vector<8x8xf32>, vector<8x8xf32>, vector<8x8xf32> -> vector<8x32xf32>
    %147 = tpu.concatenate %85, %146 in 0 : vector<8x32xf32>, vector<8x32xf32> -> vector<16x32xf32>
    %c0_48 = arith.constant 0 : index
    %c0_49 = arith.constant 0 : index
    %c0_50 = arith.constant 0 : index
    %148 = vector.load %arg6[%c0_48, %c0_49, %c0_50] : memref<2x32x32xf32, #tpu.memory_space<vmem>>, vector<1x32x32xf32>
    %149 = vector.shape_cast %148 : vector<1x32x32xf32> to vector<32x32xf32>
    %cst_51 = arith.constant dense<0.000000e+00> : vector<16x32xf32>
    %150 = tpu.matmul %147, %149, %cst_51 {dimension_numbers = #tpu.dot_dimension_numbers<[1], [0], [0], [1], [0, 0, 1, 1], [], []>} : vector<16x32xf32>, vector<32x32xf32>, vector<16x32xf32> -> vector<16x32xf32>
    %151 = vector.extract_strided_slice %15 {offsets = [1, 0], sizes = [1, 32], strides = [1, 1]} : vector<8x96xf32> to vector<1x32xf32>
    %152 = vector.broadcast %151 : vector<1x32xf32> to vector<16x32xf32>
    %153 = arith.addf %150, %152 : vector<16x32xf32>
    %154 = arith.addf %153, %13 : vector<16x32xf32>
    %155 = vector.extract_strided_slice %15 {offsets = [2, 0], sizes = [1, 32], strides = [1, 1]} : vector<8x96xf32> to vector<1x32xf32>
    %156 = vector.extract_strided_slice %15 {offsets = [3, 0], sizes = [1, 32], strides = [1, 1]} : vector<8x96xf32> to vector<1x32xf32>
    %cst_52 = arith.constant dense<0.000000e+00> : vector<16xf32>
    %157 = vector.multi_reduction <add>, %154, %cst_52 [1] : vector<16x32xf32> to vector<16xf32>
    %158 = vector.shape_cast %157 : vector<16xf32> to vector<16x1xf32>
    %cst_53 = arith.constant 3.200000e+01 : f32
    %159 = vector.broadcast %cst_53 : f32 to vector<16x1xf32>
    %160 = arith.divf %158, %159 : vector<16x1xf32>
    %161 = arith.mulf %154, %154 : vector<16x32xf32>
    %cst_54 = arith.constant dense<0.000000e+00> : vector<16xf32>
    %162 = vector.multi_reduction <add>, %161, %cst_54 [1] : vector<16x32xf32> to vector<16xf32>
    %163 = vector.shape_cast %162 : vector<16xf32> to vector<16x1xf32>
    %cst_55 = arith.constant 3.200000e+01 : f32
    %164 = vector.broadcast %cst_55 : f32 to vector<16x1xf32>
    %165 = arith.divf %163, %164 : vector<16x1xf32>
    %166 = arith.mulf %160, %160 : vector<16x1xf32>
    %167 = arith.subf %165, %166 : vector<16x1xf32>
    %168 = vector.broadcast %160 : vector<16x1xf32> to vector<16x32xf32>
    %169 = arith.subf %154, %168 : vector<16x32xf32>
    %cst_56 = arith.constant 9.99999974E-6 : f32
    %170 = vector.broadcast %cst_56 : f32 to vector<16x1xf32>
    %171 = arith.addf %167, %170 : vector<16x1xf32>
    %172 = math.rsqrt %171 : vector<16x1xf32>
    %173 = vector.broadcast %172 : vector<16x1xf32> to vector<16x32xf32>
    %174 = arith.mulf %169, %173 : vector<16x32xf32>
    %175 = vector.broadcast %155 : vector<1x32xf32> to vector<16x32xf32>
    %176 = arith.mulf %174, %175 : vector<16x32xf32>
    %177 = vector.broadcast %156 : vector<1x32xf32> to vector<16x32xf32>
    %178 = arith.addf %176, %177 : vector<16x32xf32>
    %c0_57 = arith.constant 0 : index
    %c0_58 = arith.constant 0 : index
    %c0_59 = arith.constant 0 : index
    %179 = vector.load %arg7[%c0_57, %c0_58, %c0_59] : memref<2x32x64xf32, #tpu.memory_space<vmem>>, vector<1x32x64xf32>
    %180 = vector.shape_cast %179 : vector<1x32x64xf32> to vector<32x64xf32>
    %cst_60 = arith.constant dense<0.000000e+00> : vector<16x64xf32>
    %181 = tpu.matmul %178, %180, %cst_60 {dimension_numbers = #tpu.dot_dimension_numbers<[1], [0], [0], [1], [0, 0, 1, 1], [], []>} : vector<16x32xf32>, vector<32x64xf32>, vector<16x64xf32> -> vector<16x64xf32>
    %182 = vector.extract_strided_slice %15 {offsets = [4, 0], sizes = [1, 64], strides = [1, 1]} : vector<8x96xf32> to vector<1x64xf32>
    %183 = vector.broadcast %182 : vector<1x64xf32> to vector<16x64xf32>
    %184 = arith.addf %181, %183 : vector<16x64xf32>
    %cst_61 = arith.constant 0.000000e+00 : f32
    %185 = vector.broadcast %cst_61 : f32 to vector<16x64xf32>
    %186 = arith.maximumf %184, %185 : vector<16x64xf32>
    %c0_62 = arith.constant 0 : index
    %c0_63 = arith.constant 0 : index
    %c0_64 = arith.constant 0 : index
    %187 = vector.load %arg8[%c0_62, %c0_63, %c0_64] : memref<2x64x32xf32, #tpu.memory_space<vmem>>, vector<1x64x32xf32>
    %188 = vector.shape_cast %187 : vector<1x64x32xf32> to vector<64x32xf32>
    %cst_65 = arith.constant dense<0.000000e+00> : vector<16x32xf32>
    %189 = tpu.matmul %186, %188, %cst_65 {dimension_numbers = #tpu.dot_dimension_numbers<[1], [0], [0], [1], [0, 0, 1, 1], [], []>} : vector<16x64xf32>, vector<64x32xf32>, vector<16x32xf32> -> vector<16x32xf32>
    %190 = vector.extract_strided_slice %15 {offsets = [5, 0], sizes = [1, 32], strides = [1, 1]} : vector<8x96xf32> to vector<1x32xf32>
    %191 = vector.broadcast %190 : vector<1x32xf32> to vector<16x32xf32>
    %192 = arith.addf %189, %191 : vector<16x32xf32>
    %193 = arith.addf %192, %178 : vector<16x32xf32>
    %194 = vector.extract_strided_slice %15 {offsets = [6, 0], sizes = [1, 32], strides = [1, 1]} : vector<8x96xf32> to vector<1x32xf32>
    %195 = vector.extract_strided_slice %15 {offsets = [7, 0], sizes = [1, 32], strides = [1, 1]} : vector<8x96xf32> to vector<1x32xf32>
    %cst_66 = arith.constant dense<0.000000e+00> : vector<16xf32>
    %196 = vector.multi_reduction <add>, %193, %cst_66 [1] : vector<16x32xf32> to vector<16xf32>
    %197 = vector.shape_cast %196 : vector<16xf32> to vector<16x1xf32>
    %cst_67 = arith.constant 3.200000e+01 : f32
    %198 = vector.broadcast %cst_67 : f32 to vector<16x1xf32>
    %199 = arith.divf %197, %198 : vector<16x1xf32>
    %200 = arith.mulf %193, %193 : vector<16x32xf32>
    %cst_68 = arith.constant dense<0.000000e+00> : vector<16xf32>
    %201 = vector.multi_reduction <add>, %200, %cst_68 [1] : vector<16x32xf32> to vector<16xf32>
    %202 = vector.shape_cast %201 : vector<16xf32> to vector<16x1xf32>
    %cst_69 = arith.constant 3.200000e+01 : f32
    %203 = vector.broadcast %cst_69 : f32 to vector<16x1xf32>
    %204 = arith.divf %202, %203 : vector<16x1xf32>
    %205 = arith.mulf %199, %199 : vector<16x1xf32>
    %206 = arith.subf %204, %205 : vector<16x1xf32>
    %207 = vector.broadcast %199 : vector<16x1xf32> to vector<16x32xf32>
    %208 = arith.subf %193, %207 : vector<16x32xf32>
    %cst_70 = arith.constant 9.99999974E-6 : f32
    %209 = vector.broadcast %cst_70 : f32 to vector<16x1xf32>
    %210 = arith.addf %206, %209 : vector<16x1xf32>
    %211 = math.rsqrt %210 : vector<16x1xf32>
    %212 = vector.broadcast %211 : vector<16x1xf32> to vector<16x32xf32>
    %213 = arith.mulf %208, %212 : vector<16x32xf32>
    %214 = vector.broadcast %194 : vector<1x32xf32> to vector<16x32xf32>
    %215 = arith.mulf %213, %214 : vector<16x32xf32>
    %216 = vector.broadcast %195 : vector<1x32xf32> to vector<16x32xf32>
    %217 = arith.addf %215, %216 : vector<16x32xf32>
    %c1 = arith.constant 1 : index
    %c0_71 = arith.constant 0 : index
    %c0_72 = arith.constant 0 : index
    %218 = vector.load %arg9[%c1, %c0_71, %c0_72] : memref<2x8x96xf32, #tpu.memory_space<vmem>>, vector<1x8x96xf32>
    %219 = vector.shape_cast %218 : vector<1x8x96xf32> to vector<8x96xf32>
    %c1_73 = arith.constant 1 : index
    %c0_74 = arith.constant 0 : index
    %c0_75 = arith.constant 0 : index
    %220 = vector.load %arg5[%c1_73, %c0_74, %c0_75] : memref<2x32x96xf32, #tpu.memory_space<vmem>>, vector<1x32x96xf32>
    %221 = vector.shape_cast %220 : vector<1x32x96xf32> to vector<32x96xf32>
    %cst_76 = arith.constant dense<0.000000e+00> : vector<16x96xf32>
    %222 = tpu.matmul %217, %221, %cst_76 {dimension_numbers = #tpu.dot_dimension_numbers<[1], [0], [0], [1], [0, 0, 1, 1], [], []>} : vector<16x32xf32>, vector<32x96xf32>, vector<16x96xf32> -> vector<16x96xf32>
    %223 = vector.extract_strided_slice %219 {offsets = [0, 0], sizes = [1, 96], strides = [1, 1]} : vector<8x96xf32> to vector<1x96xf32>
    %224 = vector.broadcast %223 : vector<1x96xf32> to vector<16x96xf32>
    %225 = arith.addf %222, %224 : vector<16x96xf32>
    %226 = vector.extract_strided_slice %225 {offsets = [0, 0], sizes = [16, 32], strides = [1, 1]} : vector<16x96xf32> to vector<16x32xf32>
    %227 = vector.extract_strided_slice %225 {offsets = [0, 32], sizes = [16, 32], strides = [1, 1]} : vector<16x96xf32> to vector<16x32xf32>
    %228 = vector.extract_strided_slice %225 {offsets = [0, 64], sizes = [16, 32], strides = [1, 1]} : vector<16x96xf32> to vector<16x32xf32>
    %229 = vector.extract_strided_slice %226 {offsets = [0, 0], sizes = [8, 8], strides = [1, 1]} : vector<16x32xf32> to vector<8x8xf32>
    %230 = vector.extract_strided_slice %227 {offsets = [0, 0], sizes = [8, 8], strides = [1, 1]} : vector<16x32xf32> to vector<8x8xf32>
    %231 = vector.extract_strided_slice %228 {offsets = [0, 0], sizes = [8, 8], strides = [1, 1]} : vector<16x32xf32> to vector<8x8xf32>
    %cst_77 = arith.constant dense<0.000000e+00> : vector<8x8xf32>
    %232 = tpu.matmul %229, %230, %cst_77 {dimension_numbers = #tpu.dot_dimension_numbers<[1], [1], [0], [0], [0, 0, 1, 0], [], []>} : vector<8x8xf32>, vector<8x8xf32>, vector<8x8xf32> -> vector<8x8xf32>
    %cst_78 = arith.constant dense<0xFF800000> : vector<8xf32>
    %233 = vector.multi_reduction <maximumf>, %232, %cst_78 [1] : vector<8x8xf32> to vector<8xf32>
    %234 = vector.shape_cast %233 : vector<8xf32> to vector<8x1xf32>
    %235 = vector.broadcast %234 : vector<8x1xf32> to vector<8x8xf32>
    %236 = arith.subf %232, %235 : vector<8x8xf32>
    %237 = math.exp %236 : vector<8x8xf32>
    %cst_79 = arith.constant dense<0.000000e+00> : vector<8xf32>
    %238 = vector.multi_reduction <add>, %237, %cst_79 [1] : vector<8x8xf32> to vector<8xf32>
    %239 = vector.shape_cast %238 : vector<8xf32> to vector<8x1xf32>
    %240 = tpu.reciprocal %239 {approx = true} : vector<8x1xf32> -> vector<8x1xf32>
    %241 = vector.broadcast %240 : vector<8x1xf32> to vector<8x8xf32>
    %242 = arith.mulf %237, %241 : vector<8x8xf32>
    %cst_80 = arith.constant dense<0.000000e+00> : vector<8x8xf32>
    %243 = tpu.matmul %242, %231, %cst_80 {dimension_numbers = #tpu.dot_dimension_numbers<[1], [0], [0], [1], [0, 0, 1, 1], [], []>} : vector<8x8xf32>, vector<8x8xf32>, vector<8x8xf32> -> vector<8x8xf32>
    %244 = vector.extract_strided_slice %226 {offsets = [0, 8], sizes = [8, 8], strides = [1, 1]} : vector<16x32xf32> to vector<8x8xf32>
    %245 = vector.extract_strided_slice %227 {offsets = [0, 8], sizes = [8, 8], strides = [1, 1]} : vector<16x32xf32> to vector<8x8xf32>
    %246 = vector.extract_strided_slice %228 {offsets = [0, 8], sizes = [8, 8], strides = [1, 1]} : vector<16x32xf32> to vector<8x8xf32>
    %cst_81 = arith.constant dense<0.000000e+00> : vector<8x8xf32>
    %247 = tpu.matmul %244, %245, %cst_81 {dimension_numbers = #tpu.dot_dimension_numbers<[1], [1], [0], [0], [0, 0, 1, 0], [], []>} : vector<8x8xf32>, vector<8x8xf32>, vector<8x8xf32> -> vector<8x8xf32>
    %cst_82 = arith.constant dense<0xFF800000> : vector<8xf32>
    %248 = vector.multi_reduction <maximumf>, %247, %cst_82 [1] : vector<8x8xf32> to vector<8xf32>
    %249 = vector.shape_cast %248 : vector<8xf32> to vector<8x1xf32>
    %250 = vector.broadcast %249 : vector<8x1xf32> to vector<8x8xf32>
    %251 = arith.subf %247, %250 : vector<8x8xf32>
    %252 = math.exp %251 : vector<8x8xf32>
    %cst_83 = arith.constant dense<0.000000e+00> : vector<8xf32>
    %253 = vector.multi_reduction <add>, %252, %cst_83 [1] : vector<8x8xf32> to vector<8xf32>
    %254 = vector.shape_cast %253 : vector<8xf32> to vector<8x1xf32>
    %255 = tpu.reciprocal %254 {approx = true} : vector<8x1xf32> -> vector<8x1xf32>
    %256 = vector.broadcast %255 : vector<8x1xf32> to vector<8x8xf32>
    %257 = arith.mulf %252, %256 : vector<8x8xf32>
    %cst_84 = arith.constant dense<0.000000e+00> : vector<8x8xf32>
    %258 = tpu.matmul %257, %246, %cst_84 {dimension_numbers = #tpu.dot_dimension_numbers<[1], [0], [0], [1], [0, 0, 1, 1], [], []>} : vector<8x8xf32>, vector<8x8xf32>, vector<8x8xf32> -> vector<8x8xf32>
    %259 = vector.extract_strided_slice %226 {offsets = [0, 16], sizes = [8, 8], strides = [1, 1]} : vector<16x32xf32> to vector<8x8xf32>
    %260 = vector.extract_strided_slice %227 {offsets = [0, 16], sizes = [8, 8], strides = [1, 1]} : vector<16x32xf32> to vector<8x8xf32>
    %261 = vector.extract_strided_slice %228 {offsets = [0, 16], sizes = [8, 8], strides = [1, 1]} : vector<16x32xf32> to vector<8x8xf32>
    %cst_85 = arith.constant dense<0.000000e+00> : vector<8x8xf32>
    %262 = tpu.matmul %259, %260, %cst_85 {dimension_numbers = #tpu.dot_dimension_numbers<[1], [1], [0], [0], [0, 0, 1, 0], [], []>} : vector<8x8xf32>, vector<8x8xf32>, vector<8x8xf32> -> vector<8x8xf32>
    %cst_86 = arith.constant dense<0xFF800000> : vector<8xf32>
    %263 = vector.multi_reduction <maximumf>, %262, %cst_86 [1] : vector<8x8xf32> to vector<8xf32>
    %264 = vector.shape_cast %263 : vector<8xf32> to vector<8x1xf32>
    %265 = vector.broadcast %264 : vector<8x1xf32> to vector<8x8xf32>
    %266 = arith.subf %262, %265 : vector<8x8xf32>
    %267 = math.exp %266 : vector<8x8xf32>
    %cst_87 = arith.constant dense<0.000000e+00> : vector<8xf32>
    %268 = vector.multi_reduction <add>, %267, %cst_87 [1] : vector<8x8xf32> to vector<8xf32>
    %269 = vector.shape_cast %268 : vector<8xf32> to vector<8x1xf32>
    %270 = tpu.reciprocal %269 {approx = true} : vector<8x1xf32> -> vector<8x1xf32>
    %271 = vector.broadcast %270 : vector<8x1xf32> to vector<8x8xf32>
    %272 = arith.mulf %267, %271 : vector<8x8xf32>
    %cst_88 = arith.constant dense<0.000000e+00> : vector<8x8xf32>
    %273 = tpu.matmul %272, %261, %cst_88 {dimension_numbers = #tpu.dot_dimension_numbers<[1], [0], [0], [1], [0, 0, 1, 1], [], []>} : vector<8x8xf32>, vector<8x8xf32>, vector<8x8xf32> -> vector<8x8xf32>
    %274 = vector.extract_strided_slice %226 {offsets = [0, 24], sizes = [8, 8], strides = [1, 1]} : vector<16x32xf32> to vector<8x8xf32>
    %275 = vector.extract_strided_slice %227 {offsets = [0, 24], sizes = [8, 8], strides = [1, 1]} : vector<16x32xf32> to vector<8x8xf32>
    %276 = vector.extract_strided_slice %228 {offsets = [0, 24], sizes = [8, 8], strides = [1, 1]} : vector<16x32xf32> to vector<8x8xf32>
    %cst_89 = arith.constant dense<0.000000e+00> : vector<8x8xf32>
    %277 = tpu.matmul %274, %275, %cst_89 {dimension_numbers = #tpu.dot_dimension_numbers<[1], [1], [0], [0], [0, 0, 1, 0], [], []>} : vector<8x8xf32>, vector<8x8xf32>, vector<8x8xf32> -> vector<8x8xf32>
    %cst_90 = arith.constant dense<0xFF800000> : vector<8xf32>
    %278 = vector.multi_reduction <maximumf>, %277, %cst_90 [1] : vector<8x8xf32> to vector<8xf32>
    %279 = vector.shape_cast %278 : vector<8xf32> to vector<8x1xf32>
    %280 = vector.broadcast %279 : vector<8x1xf32> to vector<8x8xf32>
    %281 = arith.subf %277, %280 : vector<8x8xf32>
    %282 = math.exp %281 : vector<8x8xf32>
    %cst_91 = arith.constant dense<0.000000e+00> : vector<8xf32>
    %283 = vector.multi_reduction <add>, %282, %cst_91 [1] : vector<8x8xf32> to vector<8xf32>
    %284 = vector.shape_cast %283 : vector<8xf32> to vector<8x1xf32>
    %285 = tpu.reciprocal %284 {approx = true} : vector<8x1xf32> -> vector<8x1xf32>
    %286 = vector.broadcast %285 : vector<8x1xf32> to vector<8x8xf32>
    %287 = arith.mulf %282, %286 : vector<8x8xf32>
    %cst_92 = arith.constant dense<0.000000e+00> : vector<8x8xf32>
    %288 = tpu.matmul %287, %276, %cst_92 {dimension_numbers = #tpu.dot_dimension_numbers<[1], [0], [0], [1], [0, 0, 1, 1], [], []>} : vector<8x8xf32>, vector<8x8xf32>, vector<8x8xf32> -> vector<8x8xf32>
    %289 = tpu.concatenate %243, %258, %273, %288 in 1 : vector<8x8xf32>, vector<8x8xf32>, vector<8x8xf32>, vector<8x8xf32> -> vector<8x32xf32>
    %290 = vector.extract_strided_slice %226 {offsets = [8, 0], sizes = [8, 8], strides = [1, 1]} : vector<16x32xf32> to vector<8x8xf32>
    %291 = vector.extract_strided_slice %227 {offsets = [8, 0], sizes = [8, 8], strides = [1, 1]} : vector<16x32xf32> to vector<8x8xf32>
    %292 = vector.extract_strided_slice %228 {offsets = [8, 0], sizes = [8, 8], strides = [1, 1]} : vector<16x32xf32> to vector<8x8xf32>
    %cst_93 = arith.constant dense<0.000000e+00> : vector<8x8xf32>
    %293 = tpu.matmul %290, %291, %cst_93 {dimension_numbers = #tpu.dot_dimension_numbers<[1], [1], [0], [0], [0, 0, 1, 0], [], []>} : vector<8x8xf32>, vector<8x8xf32>, vector<8x8xf32> -> vector<8x8xf32>
    %cst_94 = arith.constant dense<0xFF800000> : vector<8xf32>
    %294 = vector.multi_reduction <maximumf>, %293, %cst_94 [1] : vector<8x8xf32> to vector<8xf32>
    %295 = vector.shape_cast %294 : vector<8xf32> to vector<8x1xf32>
    %296 = vector.broadcast %295 : vector<8x1xf32> to vector<8x8xf32>
    %297 = arith.subf %293, %296 : vector<8x8xf32>
    %298 = math.exp %297 : vector<8x8xf32>
    %cst_95 = arith.constant dense<0.000000e+00> : vector<8xf32>
    %299 = vector.multi_reduction <add>, %298, %cst_95 [1] : vector<8x8xf32> to vector<8xf32>
    %300 = vector.shape_cast %299 : vector<8xf32> to vector<8x1xf32>
    %301 = tpu.reciprocal %300 {approx = true} : vector<8x1xf32> -> vector<8x1xf32>
    %302 = vector.broadcast %301 : vector<8x1xf32> to vector<8x8xf32>
    %303 = arith.mulf %298, %302 : vector<8x8xf32>
    %cst_96 = arith.constant dense<0.000000e+00> : vector<8x8xf32>
    %304 = tpu.matmul %303, %292, %cst_96 {dimension_numbers = #tpu.dot_dimension_numbers<[1], [0], [0], [1], [0, 0, 1, 1], [], []>} : vector<8x8xf32>, vector<8x8xf32>, vector<8x8xf32> -> vector<8x8xf32>
    %305 = vector.extract_strided_slice %226 {offsets = [8, 8], sizes = [8, 8], strides = [1, 1]} : vector<16x32xf32> to vector<8x8xf32>
    %306 = vector.extract_strided_slice %227 {offsets = [8, 8], sizes = [8, 8], strides = [1, 1]} : vector<16x32xf32> to vector<8x8xf32>
    %307 = vector.extract_strided_slice %228 {offsets = [8, 8], sizes = [8, 8], strides = [1, 1]} : vector<16x32xf32> to vector<8x8xf32>
    %cst_97 = arith.constant dense<0.000000e+00> : vector<8x8xf32>
    %308 = tpu.matmul %305, %306, %cst_97 {dimension_numbers = #tpu.dot_dimension_numbers<[1], [1], [0], [0], [0, 0, 1, 0], [], []>} : vector<8x8xf32>, vector<8x8xf32>, vector<8x8xf32> -> vector<8x8xf32>
    %cst_98 = arith.constant dense<0xFF800000> : vector<8xf32>
    %309 = vector.multi_reduction <maximumf>, %308, %cst_98 [1] : vector<8x8xf32> to vector<8xf32>
    %310 = vector.shape_cast %309 : vector<8xf32> to vector<8x1xf32>
    %311 = vector.broadcast %310 : vector<8x1xf32> to vector<8x8xf32>
    %312 = arith.subf %308, %311 : vector<8x8xf32>
    %313 = math.exp %312 : vector<8x8xf32>
    %cst_99 = arith.constant dense<0.000000e+00> : vector<8xf32>
    %314 = vector.multi_reduction <add>, %313, %cst_99 [1] : vector<8x8xf32> to vector<8xf32>
    %315 = vector.shape_cast %314 : vector<8xf32> to vector<8x1xf32>
    %316 = tpu.reciprocal %315 {approx = true} : vector<8x1xf32> -> vector<8x1xf32>
    %317 = vector.broadcast %316 : vector<8x1xf32> to vector<8x8xf32>
    %318 = arith.mulf %313, %317 : vector<8x8xf32>
    %cst_100 = arith.constant dense<0.000000e+00> : vector<8x8xf32>
    %319 = tpu.matmul %318, %307, %cst_100 {dimension_numbers = #tpu.dot_dimension_numbers<[1], [0], [0], [1], [0, 0, 1, 1], [], []>} : vector<8x8xf32>, vector<8x8xf32>, vector<8x8xf32> -> vector<8x8xf32>
    %320 = vector.extract_strided_slice %226 {offsets = [8, 16], sizes = [8, 8], strides = [1, 1]} : vector<16x32xf32> to vector<8x8xf32>
    %321 = vector.extract_strided_slice %227 {offsets = [8, 16], sizes = [8, 8], strides = [1, 1]} : vector<16x32xf32> to vector<8x8xf32>
    %322 = vector.extract_strided_slice %228 {offsets = [8, 16], sizes = [8, 8], strides = [1, 1]} : vector<16x32xf32> to vector<8x8xf32>
    %cst_101 = arith.constant dense<0.000000e+00> : vector<8x8xf32>
    %323 = tpu.matmul %320, %321, %cst_101 {dimension_numbers = #tpu.dot_dimension_numbers<[1], [1], [0], [0], [0, 0, 1, 0], [], []>} : vector<8x8xf32>, vector<8x8xf32>, vector<8x8xf32> -> vector<8x8xf32>
    %cst_102 = arith.constant dense<0xFF800000> : vector<8xf32>
    %324 = vector.multi_reduction <maximumf>, %323, %cst_102 [1] : vector<8x8xf32> to vector<8xf32>
    %325 = vector.shape_cast %324 : vector<8xf32> to vector<8x1xf32>
    %326 = vector.broadcast %325 : vector<8x1xf32> to vector<8x8xf32>
    %327 = arith.subf %323, %326 : vector<8x8xf32>
    %328 = math.exp %327 : vector<8x8xf32>
    %cst_103 = arith.constant dense<0.000000e+00> : vector<8xf32>
    %329 = vector.multi_reduction <add>, %328, %cst_103 [1] : vector<8x8xf32> to vector<8xf32>
    %330 = vector.shape_cast %329 : vector<8xf32> to vector<8x1xf32>
    %331 = tpu.reciprocal %330 {approx = true} : vector<8x1xf32> -> vector<8x1xf32>
    %332 = vector.broadcast %331 : vector<8x1xf32> to vector<8x8xf32>
    %333 = arith.mulf %328, %332 : vector<8x8xf32>
    %cst_104 = arith.constant dense<0.000000e+00> : vector<8x8xf32>
    %334 = tpu.matmul %333, %322, %cst_104 {dimension_numbers = #tpu.dot_dimension_numbers<[1], [0], [0], [1], [0, 0, 1, 1], [], []>} : vector<8x8xf32>, vector<8x8xf32>, vector<8x8xf32> -> vector<8x8xf32>
    %335 = vector.extract_strided_slice %226 {offsets = [8, 24], sizes = [8, 8], strides = [1, 1]} : vector<16x32xf32> to vector<8x8xf32>
    %336 = vector.extract_strided_slice %227 {offsets = [8, 24], sizes = [8, 8], strides = [1, 1]} : vector<16x32xf32> to vector<8x8xf32>
    %337 = vector.extract_strided_slice %228 {offsets = [8, 24], sizes = [8, 8], strides = [1, 1]} : vector<16x32xf32> to vector<8x8xf32>
    %cst_105 = arith.constant dense<0.000000e+00> : vector<8x8xf32>
    %338 = tpu.matmul %335, %336, %cst_105 {dimension_numbers = #tpu.dot_dimension_numbers<[1], [1], [0], [0], [0, 0, 1, 0], [], []>} : vector<8x8xf32>, vector<8x8xf32>, vector<8x8xf32> -> vector<8x8xf32>
    %cst_106 = arith.constant dense<0xFF800000> : vector<8xf32>
    %339 = vector.multi_reduction <maximumf>, %338, %cst_106 [1] : vector<8x8xf32> to vector<8xf32>
    %340 = vector.shape_cast %339 : vector<8xf32> to vector<8x1xf32>
    %341 = vector.broadcast %340 : vector<8x1xf32> to vector<8x8xf32>
    %342 = arith.subf %338, %341 : vector<8x8xf32>
    %343 = math.exp %342 : vector<8x8xf32>
    %cst_107 = arith.constant dense<0.000000e+00> : vector<8xf32>
    %344 = vector.multi_reduction <add>, %343, %cst_107 [1] : vector<8x8xf32> to vector<8xf32>
    %345 = vector.shape_cast %344 : vector<8xf32> to vector<8x1xf32>
    %346 = tpu.reciprocal %345 {approx = true} : vector<8x1xf32> -> vector<8x1xf32>
    %347 = vector.broadcast %346 : vector<8x1xf32> to vector<8x8xf32>
    %348 = arith.mulf %343, %347 : vector<8x8xf32>
    %cst_108 = arith.constant dense<0.000000e+00> : vector<8x8xf32>
    %349 = tpu.matmul %348, %337, %cst_108 {dimension_numbers = #tpu.dot_dimension_numbers<[1], [0], [0], [1], [0, 0, 1, 1], [], []>} : vector<8x8xf32>, vector<8x8xf32>, vector<8x8xf32> -> vector<8x8xf32>
    %350 = tpu.concatenate %304, %319, %334, %349 in 1 : vector<8x8xf32>, vector<8x8xf32>, vector<8x8xf32>, vector<8x8xf32> -> vector<8x32xf32>
    %351 = tpu.concatenate %289, %350 in 0 : vector<8x32xf32>, vector<8x32xf32> -> vector<16x32xf32>
    %c1_109 = arith.constant 1 : index
    %c0_110 = arith.constant 0 : index
    %c0_111 = arith.constant 0 : index
    %352 = vector.load %arg6[%c1_109, %c0_110, %c0_111] : memref<2x32x32xf32, #tpu.memory_space<vmem>>, vector<1x32x32xf32>
    %353 = vector.shape_cast %352 : vector<1x32x32xf32> to vector<32x32xf32>
    %cst_112 = arith.constant dense<0.000000e+00> : vector<16x32xf32>
    %354 = tpu.matmul %351, %353, %cst_112 {dimension_numbers = #tpu.dot_dimension_numbers<[1], [0], [0], [1], [0, 0, 1, 1], [], []>} : vector<16x32xf32>, vector<32x32xf32>, vector<16x32xf32> -> vector<16x32xf32>
    %355 = vector.extract_strided_slice %219 {offsets = [1, 0], sizes = [1, 32], strides = [1, 1]} : vector<8x96xf32> to vector<1x32xf32>
    %356 = vector.broadcast %355 : vector<1x32xf32> to vector<16x32xf32>
    %357 = arith.addf %354, %356 : vector<16x32xf32>
    %358 = arith.addf %357, %217 : vector<16x32xf32>
    %359 = vector.extract_strided_slice %219 {offsets = [2, 0], sizes = [1, 32], strides = [1, 1]} : vector<8x96xf32> to vector<1x32xf32>
    %360 = vector.extract_strided_slice %219 {offsets = [3, 0], sizes = [1, 32], strides = [1, 1]} : vector<8x96xf32> to vector<1x32xf32>
    %cst_113 = arith.constant dense<0.000000e+00> : vector<16xf32>
    %361 = vector.multi_reduction <add>, %358, %cst_113 [1] : vector<16x32xf32> to vector<16xf32>
    %362 = vector.shape_cast %361 : vector<16xf32> to vector<16x1xf32>
    %cst_114 = arith.constant 3.200000e+01 : f32
    %363 = vector.broadcast %cst_114 : f32 to vector<16x1xf32>
    %364 = arith.divf %362, %363 : vector<16x1xf32>
    %365 = arith.mulf %358, %358 : vector<16x32xf32>
    %cst_115 = arith.constant dense<0.000000e+00> : vector<16xf32>
    %366 = vector.multi_reduction <add>, %365, %cst_115 [1] : vector<16x32xf32> to vector<16xf32>
    %367 = vector.shape_cast %366 : vector<16xf32> to vector<16x1xf32>
    %cst_116 = arith.constant 3.200000e+01 : f32
    %368 = vector.broadcast %cst_116 : f32 to vector<16x1xf32>
    %369 = arith.divf %367, %368 : vector<16x1xf32>
    %370 = arith.mulf %364, %364 : vector<16x1xf32>
    %371 = arith.subf %369, %370 : vector<16x1xf32>
    %372 = vector.broadcast %364 : vector<16x1xf32> to vector<16x32xf32>
    %373 = arith.subf %358, %372 : vector<16x32xf32>
    %cst_117 = arith.constant 9.99999974E-6 : f32
    %374 = vector.broadcast %cst_117 : f32 to vector<16x1xf32>
    %375 = arith.addf %371, %374 : vector<16x1xf32>
    %376 = math.rsqrt %375 : vector<16x1xf32>
    %377 = vector.broadcast %376 : vector<16x1xf32> to vector<16x32xf32>
    %378 = arith.mulf %373, %377 : vector<16x32xf32>
    %379 = vector.broadcast %359 : vector<1x32xf32> to vector<16x32xf32>
    %380 = arith.mulf %378, %379 : vector<16x32xf32>
    %381 = vector.broadcast %360 : vector<1x32xf32> to vector<16x32xf32>
    %382 = arith.addf %380, %381 : vector<16x32xf32>
    %c1_118 = arith.constant 1 : index
    %c0_119 = arith.constant 0 : index
    %c0_120 = arith.constant 0 : index
    %383 = vector.load %arg7[%c1_118, %c0_119, %c0_120] : memref<2x32x64xf32, #tpu.memory_space<vmem>>, vector<1x32x64xf32>
    %384 = vector.shape_cast %383 : vector<1x32x64xf32> to vector<32x64xf32>
    %cst_121 = arith.constant dense<0.000000e+00> : vector<16x64xf32>
    %385 = tpu.matmul %382, %384, %cst_121 {dimension_numbers = #tpu.dot_dimension_numbers<[1], [0], [0], [1], [0, 0, 1, 1], [], []>} : vector<16x32xf32>, vector<32x64xf32>, vector<16x64xf32> -> vector<16x64xf32>
    %386 = vector.extract_strided_slice %219 {offsets = [4, 0], sizes = [1, 64], strides = [1, 1]} : vector<8x96xf32> to vector<1x64xf32>
    %387 = vector.broadcast %386 : vector<1x64xf32> to vector<16x64xf32>
    %388 = arith.addf %385, %387 : vector<16x64xf32>
    %cst_122 = arith.constant 0.000000e+00 : f32
    %389 = vector.broadcast %cst_122 : f32 to vector<16x64xf32>
    %390 = arith.maximumf %388, %389 : vector<16x64xf32>
    %c1_123 = arith.constant 1 : index
    %c0_124 = arith.constant 0 : index
    %c0_125 = arith.constant 0 : index
    %391 = vector.load %arg8[%c1_123, %c0_124, %c0_125] : memref<2x64x32xf32, #tpu.memory_space<vmem>>, vector<1x64x32xf32>
    %392 = vector.shape_cast %391 : vector<1x64x32xf32> to vector<64x32xf32>
    %cst_126 = arith.constant dense<0.000000e+00> : vector<16x32xf32>
    %393 = tpu.matmul %390, %392, %cst_126 {dimension_numbers = #tpu.dot_dimension_numbers<[1], [0], [0], [1], [0, 0, 1, 1], [], []>} : vector<16x64xf32>, vector<64x32xf32>, vector<16x32xf32> -> vector<16x32xf32>
    %394 = vector.extract_strided_slice %219 {offsets = [5, 0], sizes = [1, 32], strides = [1, 1]} : vector<8x96xf32> to vector<1x32xf32>
    %395 = vector.broadcast %394 : vector<1x32xf32> to vector<16x32xf32>
    %396 = arith.addf %393, %395 : vector<16x32xf32>
    %397 = arith.addf %396, %382 : vector<16x32xf32>
    %398 = vector.extract_strided_slice %219 {offsets = [6, 0], sizes = [1, 32], strides = [1, 1]} : vector<8x96xf32> to vector<1x32xf32>
    %399 = vector.extract_strided_slice %219 {offsets = [7, 0], sizes = [1, 32], strides = [1, 1]} : vector<8x96xf32> to vector<1x32xf32>
    %cst_127 = arith.constant dense<0.000000e+00> : vector<16xf32>
    %400 = vector.multi_reduction <add>, %397, %cst_127 [1] : vector<16x32xf32> to vector<16xf32>
    %401 = vector.shape_cast %400 : vector<16xf32> to vector<16x1xf32>
    %cst_128 = arith.constant 3.200000e+01 : f32
    %402 = vector.broadcast %cst_128 : f32 to vector<16x1xf32>
    %403 = arith.divf %401, %402 : vector<16x1xf32>
    %404 = arith.mulf %397, %397 : vector<16x32xf32>
    %cst_129 = arith.constant dense<0.000000e+00> : vector<16xf32>
    %405 = vector.multi_reduction <add>, %404, %cst_129 [1] : vector<16x32xf32> to vector<16xf32>
    %406 = vector.shape_cast %405 : vector<16xf32> to vector<16x1xf32>
    %cst_130 = arith.constant 3.200000e+01 : f32
    %407 = vector.broadcast %cst_130 : f32 to vector<16x1xf32>
    %408 = arith.divf %406, %407 : vector<16x1xf32>
    %409 = arith.mulf %403, %403 : vector<16x1xf32>
    %410 = arith.subf %408, %409 : vector<16x1xf32>
    %411 = vector.broadcast %403 : vector<16x1xf32> to vector<16x32xf32>
    %412 = arith.subf %397, %411 : vector<16x32xf32>
    %cst_131 = arith.constant 9.99999974E-6 : f32
    %413 = vector.broadcast %cst_131 : f32 to vector<16x1xf32>
    %414 = arith.addf %410, %413 : vector<16x1xf32>
    %415 = math.rsqrt %414 : vector<16x1xf32>
    %416 = vector.broadcast %415 : vector<16x1xf32> to vector<16x32xf32>
    %417 = arith.mulf %412, %416 : vector<16x32xf32>
    %418 = vector.broadcast %398 : vector<1x32xf32> to vector<16x32xf32>
    %419 = arith.mulf %417, %418 : vector<16x32xf32>
    %420 = vector.broadcast %399 : vector<1x32xf32> to vector<16x32xf32>
    %421 = arith.addf %419, %420 : vector<16x32xf32>
    %c0_132 = arith.constant 0 : index
    %c0_133 = arith.constant 0 : index
    %422 = vector.load %arg3[%c0_132, %c0_133] : memref<32x32xf32, #tpu.memory_space<vmem>>, vector<32x32xf32>
    %cst_134 = arith.constant dense<0.000000e+00> : vector<16x32xf32>
    %423 = tpu.matmul %421, %422, %cst_134 {dimension_numbers = #tpu.dot_dimension_numbers<[1], [0], [0], [1], [0, 0, 1, 1], [], []>} : vector<16x32xf32>, vector<32x32xf32>, vector<16x32xf32> -> vector<16x32xf32>
    %424 = vector.extract_strided_slice %0 {offsets = [2, 0], sizes = [1, 32], strides = [1, 1]} : vector<3x32xf32> to vector<1x32xf32>
    %425 = vector.broadcast %424 : vector<1x32xf32> to vector<16x32xf32>
    %426 = arith.addf %423, %425 : vector<16x32xf32>
    %c0_135 = arith.constant 0 : index
    %c0_136 = arith.constant 0 : index
    %427 = vector.load %arg10[%c0_135, %c0_136] : memref<16x32xf32, #tpu.memory_space<vmem>>, vector<16x32xf32>
    tpu.vector_store %arg10[%c0_135, %c0_136], %426 {strides = array<i32>} : memref<16x32xf32, #tpu.memory_space<vmem>>, vector<16x32xf32>,
    return
  }
}

</mosaic_0001>

<llo_original>
// kernel: tpu_custom_call.1
$region0: #{tpu_custom_call.1}
  #allocation0 [shape = 'u32[]', space=smem, size = 0x4, offset = 0x4, fixed_abs, tag = 'smem constant byte address 0x4 - core index']
  #allocation1 [shape = 'u32[144,128]{1,0:T(1,128)}', space=vmem, size = 0x12000, scoped, tag = 'internal scratch']
  %s0 = inlined_call_operand.hbm [shape: f32[16,16], index: 0, kind: input, shape index: {}]
  %s1 = inlined_call_operand.hbm [shape: f32[16,32], index: 1, kind: input, shape index: {}]
  %s2 = inlined_call_operand.hbm [shape: f32[32,32], index: 2, kind: input, shape index: {}]
  %s3 = inlined_call_operand.hbm [shape: f32[32,32], index: 3, kind: input, shape index: {}]
  %s4 = inlined_call_operand.hbm [shape: f32[3,32], index: 4, kind: input, shape index: {}]
  %s5 = inlined_call_operand.vmem [shape: f32[2,32,96], index: 5, kind: input, shape index: {}]
  %s6 = inlined_call_operand.vmem [shape: f32[2,32,32], index: 6, kind: input, shape index: {}]
  %s7 = inlined_call_operand.vmem [shape: f32[2,32,64], index: 7, kind: input, shape index: {}]
  %s8 = inlined_call_operand.vmem [shape: f32[2,64,32], index: 8, kind: input, shape index: {}]
  %s9 = inlined_call_operand.vmem [shape: f32[2,8,96], index: 9, kind: input, shape index: {}]
  %s10 = inlined_call_operand.hbm [shape: f32[16,32], index: 10, kind: output, shape index: {}]
  %s11 = sld [smem:[#allocation0]]
  $region70: #{tpu_custom_call.1} parent=0
    _
  %s13 = ssub.s32 1, %s11
  %s14 = scalar_select 0, %s13, %s11
  $region1: #{tpu_custom_call.1} parent=0
    #allocation2 [shape = 'u8[8192]{0}', space=vmem, size = 0x2000, scoped, tag = 'input window, operand 0, single buffered']
    #allocation3 [shape = 's32[1]{0}', space=sflag, size = 0x4, scoped, tag = 'scoped memory for tpu_custom_call.1']
    #allocation4 [shape = 's32[1]{0}', space=sflag, size = 0x4, scoped, tag = 'scoped memory for tpu_custom_call.1']
    #allocation5 [shape = 'u8[8192]{0}', space=vmem, size = 0x2000, scoped, tag = 'input window, operand 1, single buffered']
    #allocation6 [shape = 's32[1]{0}', space=sflag, size = 0x4, scoped, tag = 'scoped memory for tpu_custom_call.1']
    #allocation7 [shape = 'u8[16384]{0}', space=vmem, size = 0x4000, scoped, tag = 'input window, operand 2, single buffered']
    #allocation8 [shape = 'u8[16384]{0}', space=vmem, size = 0x4000, scoped, tag = 'input window, operand 3, single buffered']
    #allocation9 [shape = 's32[1]{0}', space=sflag, size = 0x4, scoped, tag = 'scoped memory for tpu_custom_call.1']
    #allocation10 [shape = 'u8[2048]{0}', space=vmem, size = 0x800, scoped, tag = 'input window, operand 4, single buffered']
    #allocation11 [shape = 'u8[8192]{0}', space=vmem, size = 0x2000, scoped, tag = 'output window, operand 0, single buffered']
    %15 = vsyncpa [#allocation3], 0
    %16 = vsyncpa [#allocation6], 0
    %17 = vsyncpa [#allocation9], 0
    %18 = vsyncpa [#allocation4], 0
    // Predicated region
    $region2: #{tpu_custom_call.1} parent=1 // pred_check
      _
    $region3: #{tpu_custom_call.1} parent=1 // pred_check_branch
      %20 = sbr.rel (0) target = $region5
    $region4: #{tpu_custom_call.1} parent=1 // pred_region
      %s22 = ssub.s32 256, 256
      %23 = vsyncadd [#allocation3], %s22
      %s24 = sshll.u32 [#allocation2], 4
      %s25 = int_to_ptr.vmem [resolvable:$true] %s24
      %30 = dma.hbm_to_vmem [thread:$0]  %s0, 256, %s25, [#allocation3], 128, 128, 8
    $region5: #{tpu_custom_call.1} parent=1 // pred_fallthru
      _
    // Predicated region
    $region6: #{tpu_custom_call.1} parent=1 // pred_check
      _
    $region7: #{tpu_custom_call.1} parent=1 // pred_check_branch
      %32 = sbr.rel (0) target = $region9
    $region8: #{tpu_custom_call.1} parent=1 // pred_region
      %s34 = ssub.s32 256, 256
      %35 = vsyncadd [#allocation6], %s34
      %s36 = sshll.u32 [#allocation5], 4
      %s37 = int_to_ptr.vmem [resolvable:$true] %s36
      %42 = dma.hbm_to_vmem [thread:$0]  %s1, 256, %s37, [#allocation6], 128, 128, 8
    $region9: #{tpu_custom_call.1} parent=1 // pred_fallthru
      _
    // Predicated region
    $region10: #{tpu_custom_call.1} parent=1 // pred_check
      _
    $region11: #{tpu_custom_call.1} parent=1 // pred_check_branch
      %44 = sbr.rel (0) target = $region13
    $region12: #{tpu_custom_call.1} parent=1 // pred_region
      %s46 = ssub.s32 512, 512
      %47 = vsyncadd [#allocation6], %s46
      %s48 = sshll.u32 [#allocation7], 4
      %s49 = int_to_ptr.vmem [resolvable:$true] %s48
      %54 = dma.hbm_to_vmem [thread:$0]  %s2, 512, %s49, [#allocation6], 128, 128, 8
    $region13: #{tpu_custom_call.1} parent=1 // pred_fallthru
      _
    // Predicated region
    $region14: #{tpu_custom_call.1} parent=1 // pred_check
      _
    $region15: #{tpu_custom_call.1} parent=1 // pred_check_branch
      %56 = sbr.rel (0) target = $region17
    $region16: #{tpu_custom_call.1} parent=1 // pred_region
      %s58 = ssub.s32 512, 512
      %59 = vsyncadd [#allocation9], %s58
      %s60 = sshll.u32 [#allocation8], 4
      %s61 = int_to_ptr.vmem [resolvable:$true] %s60
      %66 = dma.hbm_to_vmem [thread:$0]  %s3, 512, %s61, [#allocation9], 128, 128, 8
    $region17: #{tpu_custom_call.1} parent=1 // pred_fallthru
      _
    // Predicated region
    $region18: #{tpu_custom_call.1} parent=1 // pred_check
      _
    $region19: #{tpu_custom_call.1} parent=1 // pred_check_branch
      %68 = sbr.rel (0) target = $region21
    $region20: #{tpu_custom_call.1} parent=1 // pred_region
      %s70 = ssub.s32 64, 64
      %71 = vsyncadd [#allocation9], %s70
      %s73 = sshll.u32 [#allocation10], 4
      %s74 = int_to_ptr.vmem [resolvable:$true] %s73
      %76 = dma.hbm_to_vmem [thread:$0]  %s4, 64, %s74, [#allocation9]
    $region21: #{tpu_custom_call.1} parent=1 // pred_fallthru
      _
    // Predicated region
    $region22: #{tpu_custom_call.1} parent=1 // pred_check
      _
    $region23: #{tpu_custom_call.1} parent=1 // pred_check_branch
      %78 = sbr.rel (0) target = $region25
    $region24: #{tpu_custom_call.1} parent=1 // pred_region
      _
    $region25: #{tpu_custom_call.1} parent=1 // pred_fallthru
      _
    // Predicated region
    $region26: #{tpu_custom_call.1} parent=1 // pred_check
      _
    $region27: #{tpu_custom_call.1} parent=1 // pred_check_branch
      %80 = sbr.rel (0) target = $region29
    $region28: #{tpu_custom_call.1} parent=1 // pred_region
      _
    $region29: #{tpu_custom_call.1} parent=1 // pred_fallthru
      _
    // Predicated region
    $region30: #{tpu_custom_call.1} parent=1 // pred_check
      _
    $region31: #{tpu_custom_call.1} parent=1 // pred_check_branch
      %82 = sbr.rel (0) target = $region33
    $region32: #{tpu_custom_call.1} parent=1 // pred_region
      _
    $region33: #{tpu_custom_call.1} parent=1 // pred_fallthru
      _
    // Predicated region
    $region34: #{tpu_custom_call.1} parent=1 // pred_check
      _
    $region35: #{tpu_custom_call.1} parent=1 // pred_check_branch
      %84 = sbr.rel (0) target = $region37
    $region36: #{tpu_custom_call.1} parent=1 // pred_region
      _
    $region37: #{tpu_custom_call.1} parent=1 // pred_fallthru
      _
    // Predicated region
    $region38: #{tpu_custom_call.1} parent=1 // pred_check
      _
    $region39: #{tpu_custom_call.1} parent=1 // pred_check_branch
      %86 = sbr.rel (0) target = $region41
    $region40: #{tpu_custom_call.1} parent=1 // pred_region
      _
    $region41: #{tpu_custom_call.1} parent=1 // pred_fallthru
      _
    // Predicated region
    $region42: #{tpu_custom_call.1} parent=1 // pred_check
      _
    $region43: #{tpu_custom_call.1} parent=1 // pred_check_branch
      %88 = sbr.rel (0) target = $region45
    $region44: #{tpu_custom_call.1} parent=1 // pred_region
      %89 = dma.done [#allocation3], 256
    $region45: #{tpu_custom_call.1} parent=1 // pred_fallthru
      _
    // Predicated region
    $region46: #{tpu_custom_call.1} parent=1 // pred_check
      _
    $region47: #{tpu_custom_call.1} parent=1 // pred_check_branch
      %91 = sbr.rel (0) target = $region49
    $region48: #{tpu_custom_call.1} parent=1 // pred_region
      %92 = dma.done [#allocation6], 256
    $region49: #{tpu_custom_call.1} parent=1 // pred_fallthru
      _
    // Predicated region
    $region50: #{tpu_custom_call.1} parent=1 // pred_check
      _
    $region51: #{tpu_custom_call.1} parent=1 // pred_check_branch
      %94 = sbr.rel (0) target = $region53
    $region52: #{tpu_custom_call.1} parent=1 // pred_region
      %95 = dma.done [#allocation6], 512
    $region53: #{tpu_custom_call.1} parent=1 // pred_fallthru
      _
    // Predicated region
    $region54: #{tpu_custom_call.1} parent=1 // pred_check
      _
    $region55: #{tpu_custom_call.1} parent=1 // pred_check_branch
      %97 = sbr.rel (0) target = $region57
    $region56: #{tpu_custom_call.1} parent=1 // pred_region
      %98 = dma.done [#allocation9], 512
    $region57: #{tpu_custom_call.1} parent=1 // pred_fallthru
      _
    // Predicated region
    $region58: #{tpu_custom_call.1} parent=1 // pred_check
      _
    $region59: #{tpu_custom_call.1} parent=1 // pred_check_branch
      %100 = sbr.rel (0) target = $region61
    $region60: #{tpu_custom_call.1} parent=1 // pred_region
      %101 = dma.done [#allocation9], 64
    $region61: #{tpu_custom_call.1} parent=1 // pred_fallthru
      _
    %v102 = vld [vmem:[#allocation10] sm:$0x7]
    %v103 = vld [vmem:[#allocation2] sm:$0xff]
    %v104 = vld [vmem:[#allocation2 + $0x8] sm:$0xff]
    %v105 = vld [vmem:[#allocation5] sm:$0xff]
    %v106 = vld [vmem:[#allocation5 + $0x8] sm:$0xff]
    %v107 = vlaneseq
    %v108 = vshrl.u32 %v107, 7
    %v109 = vsub.s32 0, %v108
    %v110 = vrot.slane %v102, %v109
    %vm111 = vcmask 130048
    %v113 = vsel %vm111, %v103, 0
    %v116 = vsel %vm111, %v104, 0
    %118 = vmatprep.subr.mxu0 0.0
    %119 = vmatpush1.msra.mxu0 %v105
    %120 = vmatprep.subr.mxu0 0.0
    %121 = vmatpush1.msra.mxu0 %v106
    %122 = vmatprep.subr.mxu0 0.0
    %123 = vmatpush1.msra.mxu0 0.0
    %124 = vmatprep.subr.mxu0 0.0
    %125 = vmatpush1.msra.mxu0 0.0
    %126 = vmatprep.subr.mxu0 0.0
    %127 = vmatpush1.msra.mxu0 0.0
    %128 = vmatprep.subr.mxu0 0.0
    %129 = vmatpush1.msra.mxu0 0.0
    %130 = vmatprep.subr.mxu0 0.0
    %131 = vmatpush1.msra.mxu0 0.0
    %132 = vmatprep.subr.mxu0 0.0
    %133 = vmatpush1.msra.mxu0 0.0
    %134 = vmatprep.subr.mxu0 0.0
    %135 = vmatpush1.msra.mxu0 0.0
    %136 = vmatprep.subr.mxu0 0.0
    %137 = vmatpush1.msra.mxu0 0.0
    %138 = vmatprep.subr.mxu0 0.0
    %139 = vmatpush1.msra.mxu0 0.0
    %140 = vmatprep.subr.mxu0 0.0
    %141 = vmatpush1.msra.mxu0 0.0
    %142 = vmatprep.subr.mxu0 0.0
    %143 = vmatpush1.msra.mxu0 0.0
    %144 = vmatprep.subr.mxu0 0.0
    %145 = vmatpush1.msra.mxu0 0.0
    %146 = vmatprep.subr.mxu0 0.0
    %147 = vmatpush1.msra.mxu0 0.0
    %148 = vmatprep.subr.mxu0 0.0
    %149 = vmatpush1.msra.mxu0 0.0
    %150 = vmatprep.subr.mxu0 0.0
    %151 = vmatpush1.msra.mxu0 0.0
    %152 = vmatprep.subr.mxu0 0.0
    %153 = vmatpush1.msra.mxu0 0.0
    %154 = vmatprep.subr.mxu0 0.0
    %155 = vmatpush1.msra.mxu0 0.0
    %156 = vmatprep.subr.mxu0 0.0
    %157 = vmatpush1.msra.mxu0 0.0
    %158 = vmatprep.subr.mxu0 0.0
    %159 = vmatpush1.msra.mxu0 0.0
    %160 = vmatprep.subr.mxu0 0.0
    %161 = vmatpush1.msra.mxu0 0.0
    %162 = vmatprep.subr.mxu0 0.0
    %163 = vmatpush1.msra.mxu0 0.0
    %164 = vmatprep.subr.mxu0 0.0
    %165 = vmatpush1.msra.mxu0 0.0
    %166 = vmatprep.subr.mxu0 0.0
    %167 = vmatpush1.msra.mxu0 0.0
    %168 = vmatprep.subr.mxu0 0.0
    %169 = vmatpush1.msra.mxu0 0.0
    %170 = vmatprep.subr.mxu0 0.0
    %171 = vmatpush1.msra.mxu0 0.0
    %172 = vmatprep.subr.mxu0 0.0
    %173 = vmatpush1.msra.mxu0 0.0
    %174 = vmatprep.subr.mxu0 0.0
    %175 = vmatpush1.msra.mxu0 0.0
    %176 = vmatprep.subr.mxu0 0.0
    %177 = vmatpush1.msra.mxu0 0.0
    %178 = vmatprep.subr.mxu0 0.0
    %179 = vmatpush1.msra.mxu0 0.0
    %180 = vmatprep.subr.mxu0 0.0
    %181 = vmatpush1.msra.mxu0 0.0
    %182 = vmatprep.mubr.f32.mxu0 0.0
    %183 = vmatmul.mubr.f32.gmra.mrb[0].mxu0 %v113
    %v184 = vpop.f32.mrb[0].mxu0
    %v185 = vadd.f32 %v110, %v184
    %v186 = vpop.f32.mrb[0].mxu0
    %187 = vmatprep.mubr.f32.mxu0 0.0
    %188 = vmatmul.mubr.f32.gmra.mrb[0].mxu0 %v116
    %v189 = vpop.f32.mrb[0].mxu0
    %v190 = vadd.f32 %v110, %v189
    %v191 = vpop.f32.mrb[0].mxu0
    %192 = vdwg.mxu0
    %v193 = vmax.f32 %v185, 0.0
    %v194 = vmax.f32 %v190, 0.0
    %v195 = vld [vmem:[#allocation7] sm:$0xff]
    %v196 = vld [vmem:[#allocation7 + $0x8] sm:$0xff]
    %v197 = vld [vmem:[#allocation7 + $0x10] sm:$0xff]
    %v198 = vld [vmem:[#allocation7 + $0x18] sm:$0xff]
    %v199 = vlaneseq
    %v200 = vshrl.u32 %v199, 7
    %v201 = vsub.s32 1, %v200
    %v202 = vrot.slane %v102, %v201
    %vm203 = vcmask 261120
    %v205 = vsel %vm203, %v193, 0
    %v208 = vsel %vm203, %v194, 0
    %210 = vmatprep.subr.mxu0 0.0
    %211 = vmatpush1.msra.mxu0 %v195
    %212 = vmatprep.subr.mxu0 0.0
    %213 = vmatpush1.msra.mxu0 %v196
    %214 = vmatprep.subr.mxu0 0.0
    %215 = vmatpush1.msra.mxu0 %v197
    %216 = vmatprep.subr.mxu0 0.0
    %217 = vmatpush1.msra.mxu0 %v198
    %218 = vmatprep.subr.mxu0 0.0
    %219 = vmatpush1.msra.mxu0 0.0
    %220 = vmatprep.subr.mxu0 0.0
    %221 = vmatpush1.msra.mxu0 0.0
    %222 = vmatprep.subr.mxu0 0.0
    %223 = vmatpush1.msra.mxu0 0.0
    %224 = vmatprep.subr.mxu0 0.0
    %225 = vmatpush1.msra.mxu0 0.0
    %226 = vmatprep.subr.mxu0 0.0
    %227 = vmatpush1.msra.mxu0 0.0
    %228 = vmatprep.subr.mxu0 0.0
    %229 = vmatpush1.msra.mxu0 0.0
    %230 = vmatprep.subr.mxu0 0.0
    %231 = vmatpush1.msra.mxu0 0.0
    %232 = vmatprep.subr.mxu0 0.0
    %233 = vmatpush1.msra.mxu0 0.0
    %234 = vmatprep.subr.mxu0 0.0
    %235 = vmatpush1.msra.mxu0 0.0
    %236 = vmatprep.subr.mxu0 0.0
    %237 = vmatpush1.msra.mxu0 0.0
    %238 = vmatprep.subr.mxu0 0.0
    %239 = vmatpush1.msra.mxu0 0.0
    %240 = vmatprep.subr.mxu0 0.0
    %241 = vmatpush1.msra.mxu0 0.0
    %242 = vmatprep.subr.mxu0 0.0
    %243 = vmatpush1.msra.mxu0 0.0
    %244 = vmatprep.subr.mxu0 0.0
    %245 = vmatpush1.msra.mxu0 0.0
    %246 = vmatprep.subr.mxu0 0.0
    %247 = vmatpush1.msra.mxu0 0.0
    %248 = vmatprep.subr.mxu0 0.0
    %249 = vmatpush1.msra.mxu0 0.0
    %250 = vmatprep.subr.mxu0 0.0
    %251 = vmatpush1.msra.mxu0 0.0
    %252 = vmatprep.subr.mxu0 0.0
    %253 = vmatpush1.msra.mxu0 0.0
    %254 = vmatprep.subr.mxu0 0.0
    %255 = vmatpush1.msra.mxu0 0.0
    %256 = vmatprep.subr.mxu0 0.0
    %257 = vmatpush1.msra.mxu0 0.0
    %258 = vmatprep.subr.mxu0 0.0
    %259 = vmatpush1.msra.mxu0 0.0
    %260 = vmatprep.subr.mxu0 0.0
    %261 = vmatpush1.msra.mxu0 0.0
    %262 = vmatprep.subr.mxu0 0.0
    %263 = vmatpush1.msra.mxu0 0.0
    %264 = vmatprep.subr.mxu0 0.0
    %265 = vmatpush1.msra.mxu0 0.0
    %266 = vmatprep.subr.mxu0 0.0
    %267 = vmatpush1.msra.mxu0 0.0
    %268 = vmatprep.subr.mxu0 0.0
    %269 = vmatpush1.msra.mxu0 0.0
    %270 = vmatprep.subr.mxu0 0.0
    %271 = vmatpush1.msra.mxu0 0.0
    %272 = vmatprep.subr.mxu0 0.0
    %273 = vmatpush1.msra.mxu0 0.0
    %274 = vmatprep.mubr.f32.mxu0 0.0
    %275 = vmatmul.mubr.f32.gmra.mrb[0].mxu0 %v205
    %v276 = vpop.f32.mrb[0].mxu0
    %v277 = vadd.f32 %v202, %v276
    %v278 = vpop.f32.mrb[0].mxu0
    %279 = vmatprep.mubr.f32.mxu0 0.0
    %280 = vmatmul.mubr.f32.gmra.mrb[0].mxu0 %v208
    %v281 = vpop.f32.mrb[0].mxu0
    %v282 = vadd.f32 %v202, %v281
    %v283 = vpop.f32.mrb[0].mxu0
    %284 = vdwg.mxu0
    %v285 = vld [vmem:[%s9] sm:$0xff]
    %v286 = vld [vmem:[%s5] sm:$0xff]
    %v287 = vld [vmem:[%s5 + $0x8] sm:$0xff]
    %v288 = vld [vmem:[%s5 + $0x10] sm:$0xff]
    %v289 = vld [vmem:[%s5 + $0x18] sm:$0xff]
    %v290 = vlaneseq
    %v291 = vshrl.u32 %v290, 7
    %v292 = vsub.s32 0, %v291
    %v293 = vrot.slane %v285, %v292
    %v295 = vsel %vm203, %v277, 0
    %v298 = vsel %vm203, %v282, 0
    %300 = vmatprep.subr.mxu0 0.0
    %301 = vmatpush1.msra.mxu0 %v286
    %302 = vmatprep.subr.mxu0 0.0
    %303 = vmatpush1.msra.mxu0 %v287
    %304 = vmatprep.subr.mxu0 0.0
    %305 = vmatpush1.msra.mxu0 %v288
    %306 = vmatprep.subr.mxu0 0.0
    %307 = vmatpush1.msra.mxu0 %v289
    %308 = vmatprep.subr.mxu0 0.0
    %309 = vmatpush1.msra.mxu0 0.0
    %310 = vmatprep.subr.mxu0 0.0
    %311 = vmatpush1.msra.mxu0 0.0
    %312 = vmatprep.subr.mxu0 0.0
    %313 = vmatpush1.msra.mxu0 0.0
    %314 = vmatprep.subr.mxu0 0.0
    %315 = vmatpush1.msra.mxu0 0.0
    %316 = vmatprep.subr.mxu0 0.0
    %317 = vmatpush1.msra.mxu0 0.0
    %318 = vmatprep.subr.mxu0 0.0
    %319 = vmatpush1.msra.mxu0 0.0
    %320 = vmatprep.subr.mxu0 0.0
    %321 = vmatpush1.msra.mxu0 0.0
    %322 = vmatprep.subr.mxu0 0.0
    %323 = vmatpush1.msra.mxu0 0.0
    %324 = vmatprep.subr.mxu0 0.0
    %325 = vmatpush1.msra.mxu0 0.0
    %326 = vmatprep.subr.mxu0 0.0
    %327 = vmatpush1.msra.mxu0 0.0
    %328 = vmatprep.subr.mxu0 0.0
    %329 = vmatpush1.msra.mxu0 0.0
    %330 = vmatprep.subr.mxu0 0.0
    %331 = vmatpush1.msra.mxu0 0.0
    %332 = vmatprep.subr.mxu0 0.0
    %333 = vmatpush1.msra.mxu0 0.0
    %334 = vmatprep.subr.mxu0 0.0
    %335 = vmatpush1.msra.mxu0 0.0
    %336 = vmatprep.subr.mxu0 0.0
    %337 = vmatpush1.msra.mxu0 0.0
    %338 = vmatprep.subr.mxu0 0.0
    %339 = vmatpush1.msra.mxu0 0.0
    %340 = vmatprep.subr.mxu0 0.0
    %341 = vmatpush1.msra.mxu0 0.0
    %342 = vmatprep.subr.mxu0 0.0
    %343 = vmatpush1.msra.mxu0 0.0
    %344 = vmatprep.subr.mxu0 0.0
    %345 = vmatpush1.msra.mxu0 0.0
    %346 = vmatprep.subr.mxu0 0.0
    %347 = vmatpush1.msra.mxu0 0.0
    %348 = vmatprep.subr.mxu0 0.0
    %349 = vmatpush1.msra.mxu0 0.0
    %350 = vmatprep.subr.mxu0 0.0
    %351 = vmatpush1.msra.mxu0 0.0
    %352 = vmatprep.subr.mxu0 0.0
    %353 = vmatpush1.msra.mxu0 0.0
    %354 = vmatprep.subr.mxu0 0.0
    %355 = vmatpush1.msra.mxu0 0.0
    %356 = vmatprep.subr.mxu0 0.0
    %357 = vmatpush1.msra.mxu0 0.0
    %358 = vmatprep.subr.mxu0 0.0
    %359 = vmatpush1.msra.mxu0 0.0
    %360 = vmatprep.subr.mxu0 0.0
    %361 = vmatpush1.msra.mxu0 0.0
    %362 = vmatprep.subr.mxu0 0.0
    %363 = vmatpush1.msra.mxu0 0.0
    %364 = vmatprep.mubr.f32.mxu0 0.0
    %365 = vmatmul.mubr.f32.gmra.mrb[0].mxu0 %v295
    %v366 = vpop.f32.mrb[0].mxu0
    %v367 = vadd.f32 %v293, %v366
    %v368 = vpop.f32.mrb[0].mxu0
    %369 = vmatprep.mubr.f32.mxu0 0.0
    %370 = vmatmul.mubr.f32.gmra.mrb[0].mxu0 %v298
    %v371 = vpop.f32.mrb[0].mxu0
    %v372 = vadd.f32 %v293, %v371
    %v373 = vpop.f32.mrb[0].mxu0
    %374 = vdwg.mxu0
    %376 = vrot.lane.b32.xlu0 %v367, 96
    %v377 = vpop.permute.xlu0 %376
    %vm378 = vcmask 64512
    %v379 = vsel %vm378, %v367, 0
    %v381 = vsel %vm378, %v377, 0
    %383 = vmatprep.subr.mxu0 0.0
    %384 = vmatpush1.xpose.msra.mxu0 %v381
    %385 = vmatprep.subr.mxu0 0.0
    %386 = vmatpush1.xpose.msra.mxu0 0.0
    %387 = vmatprep.subr.mxu0 0.0
    %388 = vmatpush1.xpose.msra.mxu0 0.0
    %389 = vmatprep.subr.mxu0 0.0
    %390 = vmatpush1.xpose.msra.mxu0 0.0
    %391 = vmatprep.subr.mxu0 0.0
    %392 = vmatpush1.xpose.msra.mxu0 0.0
    %393 = vmatprep.subr.mxu0 0.0
    %394 = vmatpush1.xpose.msra.mxu0 0.0
    %395 = vmatprep.subr.mxu0 0.0
    %396 = vmatpush1.xpose.msra.mxu0 0.0
    %397 = vmatprep.subr.mxu0 0.0
    %398 = vmatpush1.xpose.msra.mxu0 0.0
    %399 = vmatprep.subr.mxu0 0.0
    %400 = vmatpush1.xpose.msra.mxu0 0.0
    %401 = vmatprep.subr.mxu0 0.0
    %402 = vmatpush1.xpose.msra.mxu0 0.0
    %403 = vmatprep.subr.mxu0 0.0
    %404 = vmatpush1.xpose.msra.mxu0 0.0
    %405 = vmatprep.subr.mxu0 0.0
    %406 = vmatpush1.xpose.msra.mxu0 0.0
    %407 = vmatprep.subr.mxu0 0.0
    %408 = vmatpush1.xpose.msra.mxu0 0.0
    %409 = vmatprep.subr.mxu0 0.0
    %410 = vmatpush1.xpose.msra.mxu0 0.0
    %411 = vmatprep.subr.mxu0 0.0
    %412 = vmatpush1.xpose.msra.mxu0 0.0
    %413 = vmatprep.subr.mxu0 0.0
    %414 = vmatpush1.xpose.msra.mxu0 0.0
    %415 = vmatprep.subr.mxu0 0.0
    %416 = vmatpush1.xpose.msra.mxu0 0.0
    %417 = vmatprep.subr.mxu0 0.0
    %418 = vmatpush1.xpose.msra.mxu0 0.0
    %419 = vmatprep.subr.mxu0 0.0
    %420 = vmatpush1.xpose.msra.mxu0 0.0
    %421 = vmatprep.subr.mxu0 0.0
    %422 = vmatpush1.xpose.msra.mxu0 0.0
    %423 = vmatprep.subr.mxu0 0.0
    %424 = vmatpush1.xpose.msra.mxu0 0.0
    %425 = vmatprep.subr.mxu0 0.0
    %426 = vmatpush1.xpose.msra.mxu0 0.0
    %427 = vmatprep.subr.mxu0 0.0
    %428 = vmatpush1.xpose.msra.mxu0 0.0
    %429 = vmatprep.subr.mxu0 0.0
    %430 = vmatpush1.xpose.msra.mxu0 0.0
    %431 = vmatprep.subr.mxu0 0.0
    %432 = vmatpush1.xpose.msra.mxu0 0.0
    %433 = vmatprep.subr.mxu0 0.0
    %434 = vmatpush1.xpose.msra.mxu0 0.0
    %435 = vmatprep.subr.mxu0 0.0
    %436 = vmatpush1.xpose.msra.mxu0 0.0
    %437 = vmatprep.subr.mxu0 0.0
    %438 = vmatpush1.xpose.msra.mxu0 0.0
    %439 = vmatprep.subr.mxu0 0.0
    %440 = vmatpush1.xpose.msra.mxu0 0.0
    %441 = vmatprep.subr.mxu0 0.0
    %442 = vmatpush1.xpose.msra.mxu0 0.0
    %443 = vmatprep.subr.mxu0 0.0
    %444 = vmatpush1.xpose.msra.mxu0 0.0
    %445 = vmatprep.subr.mxu0 0.0
    %446 = vmatpush1.xpose.msra.mxu0 0.0
    %447 = vmatprep.mubr.f32.mxu0 0.0
    %448 = vmatmul.mubr.f32.gmra.mrb[0].mxu0 %v379
    %v449 = vpop.f32.mrb[0].mxu0
    %v450 = vadd.f32 0.0, %v449
    %v451 = vpop.f32.mrb[0].mxu0
    %452 = vdwg.mxu0
    %v453 = vsel %vm378, %v450, -inf
    %454 = vmax.xlane.f32.xlu0 %v453
    %v455 = vpop.xlane.xlu0 %454
    %v456 = vsub.f32 %v450, %v455
    %v457 = vmul.f32 %v456, 1.442695
    %v458 = vpow.pop %v457
    %v459 = vsel %vm378, %v458, 0.0
    %460 = vadd.xlane.f32.xlu0 %v459
    %v461 = vpop.xlane.xlu0 %460
    %v462 = vrcp.pop %v461
    %v463 = vmul.f32 %v458, %v462
    %464 = vrot.lane.b32.xlu0 %v367, 64
    %v465 = vpop.permute.xlu0 %464
    %v468 = vsel %vm378, %v463, 0
    %470 = vmatprep.subr.mxu0 0.0
    %471 = vmatpush1.msra.mxu0 %v465
    %472 = vmatprep.subr.mxu0 0.0
    %473 = vmatpush1.msra.mxu0 0.0
    %474 = vmatprep.subr.mxu0 0.0
    %475 = vmatpush1.msra.mxu0 0.0
    %476 = vmatprep.subr.mxu0 0.0
    %477 = vmatpush1.msra.mxu0 0.0
    %478 = vmatprep.subr.mxu0 0.0
    %479 = vmatpush1.msra.mxu0 0.0
    %480 = vmatprep.subr.mxu0 0.0
    %481 = vmatpush1.msra.mxu0 0.0
    %482 = vmatprep.subr.mxu0 0.0
    %483 = vmatpush1.msra.mxu0 0.0
    %484 = vmatprep.subr.mxu0 0.0
    %485 = vmatpush1.msra.mxu0 0.0
    %486 = vmatprep.subr.mxu0 0.0
    %487 = vmatpush1.msra.mxu0 0.0
    %488 = vmatprep.subr.mxu0 0.0
    %489 = vmatpush1.msra.mxu0 0.0
    %490 = vmatprep.subr.mxu0 0.0
    %491 = vmatpush1.msra.mxu0 0.0
    %492 = vmatprep.subr.mxu0 0.0
    %493 = vmatpush1.msra.mxu0 0.0
    %494 = vmatprep.subr.mxu0 0.0
    %495 = vmatpush1.msra.mxu0 0.0
    %496 = vmatprep.subr.mxu0 0.0
    %497 = vmatpush1.msra.mxu0 0.0
    %498 = vmatprep.subr.mxu0 0.0
    %499 = vmatpush1.msra.mxu0 0.0
    %500 = vmatprep.subr.mxu0 0.0
    %501 = vmatpush1.msra.mxu0 0.0
    %502 = vmatprep.subr.mxu0 0.0
    %503 = vmatpush1.msra.mxu0 0.0
    %504 = vmatprep.subr.mxu0 0.0
    %505 = vmatpush1.msra.mxu0 0.0
    %506 = vmatprep.subr.mxu0 0.0
    %507 = vmatpush1.msra.mxu0 0.0
    %508 = vmatprep.subr.mxu0 0.0
    %509 = vmatpush1.msra.mxu0 0.0
    %510 = vmatprep.subr.mxu0 0.0
    %511 = vmatpush1.msra.mxu0 0.0
    %512 = vmatprep.subr.mxu0 0.0
    %513 = vmatpush1.msra.mxu0 0.0
    %514 = vmatprep.subr.mxu0 0.0
    %515 = vmatpush1.msra.mxu0 0.0
    %516 = vmatprep.subr.mxu0 0.0
    %517 = vmatpush1.msra.mxu0 0.0
    %518 = vmatprep.subr.mxu0 0.0
    %519 = vmatpush1.msra.mxu0 0.0
    %520 = vmatprep.subr.mxu0 0.0
    %521 = vmatpush1.msra.mxu0 0.0
    %522 = vmatprep.subr.mxu0 0.0
    %523 = vmatpush1.msra.mxu0 0.0
    %524 = vmatprep.subr.mxu0 0.0
    %525 = vmatpush1.msra.mxu0 0.0
    %526 = vmatprep.subr.mxu0 0.0
    %527 = vmatpush1.msra.mxu0 0.0
    %528 = vmatprep.subr.mxu0 0.0
    %529 = vmatpush1.msra.mxu0 0.0
    %530 = vmatprep.subr.mxu0 0.0
    %531 = vmatpush1.msra.mxu0 0.0
    %532 = vmatprep.subr.mxu0 0.0
    %533 = vmatpush1.msra.mxu0 0.0
    %534 = vmatprep.mubr.f32.mxu0 0.0
    %535 = vmatmul.mubr.f32.gmra.mrb[0].mxu0 %v468
    %v536 = vpop.f32.mrb[0].mxu0
    %v537 = vadd.f32 0.0, %v536
    %v538 = vpop.f32.mrb[0].mxu0
    %539 = vdwg.mxu0
    %540 = vrot.lane.b32.xlu0 %v367, 120
    %v541 = vpop.permute.xlu0 %540
    %542 = vrot.lane.b32.xlu0 %v367, 88
    %v543 = vpop.permute.xlu0 %542
    %v544 = vsel %vm378, %v541, 0
    %v546 = vsel %vm378, %v543, 0
    %548 = vmatprep.subr.mxu0 0.0
    %549 = vmatpush1.xpose.msra.mxu0 %v546
    %550 = vmatprep.subr.mxu0 0.0
    %551 = vmatpush1.xpose.msra.mxu0 0.0
    %552 = vmatprep.subr.mxu0 0.0
    %553 = vmatpush1.xpose.msra.mxu0 0.0
    %554 = vmatprep.subr.mxu0 0.0
    %555 = vmatpush1.xpose.msra.mxu0 0.0
    %556 = vmatprep.subr.mxu0 0.0
    %557 = vmatpush1.xpose.msra.mxu0 0.0
    %558 = vmatprep.subr.mxu0 0.0
    %559 = vmatpush1.xpose.msra.mxu0 0.0
    %560 = vmatprep.subr.mxu0 0.0
    %561 = vmatpush1.xpose.msra.mxu0 0.0
    %562 = vmatprep.subr.mxu0 0.0
    %563 = vmatpush1.xpose.msra.mxu0 0.0
    %564 = vmatprep.subr.mxu0 0.0
    %565 = vmatpush1.xpose.msra.mxu0 0.0
    %566 = vmatprep.subr.mxu0 0.0
    %567 = vmatpush1.xpose.msra.mxu0 0.0
    %568 = vmatprep.subr.mxu0 0.0
    %569 = vmatpush1.xpose.msra.mxu0 0.0
    %570 = vmatprep.subr.mxu0 0.0
    %571 = vmatpush1.xpose.msra.mxu0 0.0
    %572 = vmatprep.subr.mxu0 0.0
    %573 = vmatpush1.xpose.msra.mxu0 0.0
    %574 = vmatprep.subr.mxu0 0.0
    %575 = vmatpush1.xpose.msra.mxu0 0.0
    %576 = vmatprep.subr.mxu0 0.0
    %577 = vmatpush1.xpose.msra.mxu0 0.0
    %578 = vmatprep.subr.mxu0 0.0
    %579 = vmatpush1.xpose.msra.mxu0 0.0
    %580 = vmatprep.subr.mxu0 0.0
    %581 = vmatpush1.xpose.msra.mxu0 0.0
    %582 = vmatprep.subr.mxu0 0.0
    %583 = vmatpush1.xpose.msra.mxu0 0.0
    %584 = vmatprep.subr.mxu0 0.0
    %585 = vmatpush1.xpose.msra.mxu0 0.0
    %586 = vmatprep.subr.mxu0 0.0
    %587 = vmatpush1.xpose.msra.mxu0 0.0
    %588 = vmatprep.subr.mxu0 0.0
    %589 = vmatpush1.xpose.msra.mxu0 0.0
    %590 = vmatprep.subr.mxu0 0.0
    %591 = vmatpush1.xpose.msra.mxu0 0.0
    %592 = vmatprep.subr.mxu0 0.0
    %593 = vmatpush1.xpose.msra.mxu0 0.0
    %594 = vmatprep.subr.mxu0 0.0
    %595 = vmatpush1.xpose.msra.mxu0 0.0
    %596 = vmatprep.subr.mxu0 0.0
    %597 = vmatpush1.xpose.msra.mxu0 0.0
    %598 = vmatprep.subr.mxu0 0.0
    %599 = vmatpush1.xpose.msra.mxu0 0.0
    %600 = vmatprep.subr.mxu0 0.0
    %601 = vmatpush1.xpose.msra.mxu0 0.0
    %602 = vmatprep.subr.mxu0 0.0
    %603 = vmatpush1.xpose.msra.mxu0 0.0
    %604 = vmatprep.subr.mxu0 0.0
    %605 = vmatpush1.xpose.msra.mxu0 0.0
    %606 = vmatprep.subr.mxu0 0.0
    %607 = vmatpush1.xpose.msra.mxu0 0.0
    %608 = vmatprep.subr.mxu0 0.0
    %609 = vmatpush1.xpose.msra.mxu0 0.0
    %610 = vmatprep.subr.mxu0 0.0
    %611 = vmatpush1.xpose.msra.mxu0 0.0
    %612 = vmatprep.mubr.f32.mxu0 0.0
    %613 = vmatmul.mubr.f32.gmra.mrb[0].mxu0 %v544
    %v614 = vpop.f32.mrb[0].mxu0
    %v615 = vadd.f32 0.0, %v614
    %v616 = vpop.f32.mrb[0].mxu0
    %617 = vdwg.mxu0
    %v618 = vsel %vm378, %v615, -inf
    %619 = vmax.xlane.f32.xlu0 %v618
    %v620 = vpop.xlane.xlu0 %619
    %v621 = vsub.f32 %v615, %v620
    %v622 = vmul.f32 %v621, 1.442695
    %v623 = vpow.pop %v622
    %v624 = vsel %vm378, %v623, 0.0
    %625 = vadd.xlane.f32.xlu0 %v624
    %v626 = vpop.xlane.xlu0 %625
    %v627 = vrcp.pop %v626
    %v628 = vmul.f32 %v623, %v627
    %629 = vrot.lane.b32.xlu0 %v367, 56
    %v630 = vpop.permute.xlu0 %629
    %v633 = vsel %vm378, %v628, 0
    %635 = vmatprep.subr.mxu0 0.0
    %636 = vmatpush1.msra.mxu0 %v630
    %637 = vmatprep.subr.mxu0 0.0
    %638 = vmatpush1.msra.mxu0 0.0
    %639 = vmatprep.subr.mxu0 0.0
    %640 = vmatpush1.msra.mxu0 0.0
    %641 = vmatprep.subr.mxu0 0.0
    %642 = vmatpush1.msra.mxu0 0.0
    %643 = vmatprep.subr.mxu0 0.0
    %644 = vmatpush1.msra.mxu0 0.0
    %645 = vmatprep.subr.mxu0 0.0
    %646 = vmatpush1.msra.mxu0 0.0
    %647 = vmatprep.subr.mxu0 0.0
    %648 = vmatpush1.msra.mxu0 0.0
    %649 = vmatprep.subr.mxu0 0.0
    %650 = vmatpush1.msra.mxu0 0.0
    %651 = vmatprep.subr.mxu0 0.0
    %652 = vmatpush1.msra.mxu0 0.0
    %653 = vmatprep.subr.mxu0 0.0
    %654 = vmatpush1.msra.mxu0 0.0
    %655 = vmatprep.subr.mxu0 0.0
    %656 = vmatpush1.msra.mxu0 0.0
    %657 = vmatprep.subr.mxu0 0.0
    %658 = vmatpush1.msra.mxu0 0.0
    %659 = vmatprep.subr.mxu0 0.0
    %660 = vmatpush1.msra.mxu0 0.0
    %661 = vmatprep.subr.mxu0 0.0
    %662 = vmatpush1.msra.mxu0 0.0
    %663 = vmatprep.subr.mxu0 0.0
    %664 = vmatpush1.msra.mxu0 0.0
    %665 = vmatprep.subr.mxu0 0.0
    %666 = vmatpush1.msra.mxu0 0.0
    %667 = vmatprep.subr.mxu0 0.0
    %668 = vmatpush1.msra.mxu0 0.0
    %669 = vmatprep.subr.mxu0 0.0
    %670 = vmatpush1.msra.mxu0 0.0
    %671 = vmatprep.subr.mxu0 0.0
    %672 = vmatpush1.msra.mxu0 0.0
    %673 = vmatprep.subr.mxu0 0.0
    %674 = vmatpush1.msra.mxu0 0.0
    %675 = vmatprep.subr.mxu0 0.0
    %676 = vmatpush1.msra.mxu0 0.0
    %677 = vmatprep.subr.mxu0 0.0
    %678 = vmatpush1.msra.mxu0 0.0
    %679 = vmatprep.subr.mxu0 0.0
    %680 = vmatpush1.msra.mxu0 0.0
    %681 = vmatprep.subr.mxu0 0.0
    %682 = vmatpush1.msra.mxu0 0.0
    %683 = vmatprep.subr.mxu0 0.0
    %684 = vmatpush1.msra.mxu0 0.0
    %685 = vmatprep.subr.mxu0 0.0
    %686 = vmatpush1.msra.mxu0 0.0
    %687 = vmatprep.subr.mxu0 0.0
    %688 = vmatpush1.msra.mxu0 0.0
    %689 = vmatprep.subr.mxu0 0.0
    %690 = vmatpush1.msra.mxu0 0.0
    %691 = vmatprep.subr.mxu0 0.0
    %692 = vmatpush1.msra.mxu0 0.0
    %693 = vmatprep.subr.mxu0 0.0
    %694 = vmatpush1.msra.mxu0 0.0
    %695 = vmatprep.subr.mxu0 0.0
    %696 = vmatpush1.msra.mxu0 0.0
    %697 = vmatprep.subr.mxu0 0.0
    %698 = vmatpush1.msra.mxu0 0.0
    %699 = vmatprep.mubr.f32.mxu0 0.0
    %700 = vmatmul.mubr.f32.gmra.mrb[0].mxu0 %v633
    %v701 = vpop.f32.mrb[0].mxu0
    %v702 = vadd.f32 0.0, %v701
    %v703 = vpop.f32.mrb[0].mxu0
    %704 = vdwg.mxu0
    %705 = vrot.lane.b32.xlu0 %v367, 112
    %v706 = vpop.permute.xlu0 %705
    %707 = vrot.lane.b32.xlu0 %v367, 80
    %v708 = vpop.permute.xlu0 %707
    %v709 = vsel %vm378, %v706, 0
    %v711 = vsel %vm378, %v708, 0
    %713 = vmatprep.subr.mxu0 0.0
    %714 = vmatpush1.xpose.msra.mxu0 %v711
    %715 = vmatprep.subr.mxu0 0.0
    %716 = vmatpush1.xpose.msra.mxu0 0.0
    %717 = vmatprep.subr.mxu0 0.0
    %718 = vmatpush1.xpose.msra.mxu0 0.0
    %719 = vmatprep.subr.mxu0 0.0
    %720 = vmatpush1.xpose.msra.mxu0 0.0
    %721 = vmatprep.subr.mxu0 0.0
    %722 = vmatpush1.xpose.msra.mxu0 0.0
    %723 = vmatprep.subr.mxu0 0.0
    %724 = vmatpush1.xpose.msra.mxu0 0.0
    %725 = vmatprep.subr.mxu0 0.0
    %726 = vmatpush1.xpose.msra.mxu0 0.0
    %727 = vmatprep.subr.mxu0 0.0
    %728 = vmatpush1.xpose.msra.mxu0 0.0
    %729 = vmatprep.subr.mxu0 0.0
    %730 = vmatpush1.xpose.msra.mxu0 0.0
    %731 = vmatprep.subr.mxu0 0.0
    %732 = vmatpush1.xpose.msra.mxu0 0.0
    %733 = vmatprep.subr.mxu0 0.0
    %734 = vmatpush1.xpose.msra.mxu0 0.0
    %735 = vmatprep.subr.mxu0 0.0
    %736 = vmatpush1.xpose.msra.mxu0 0.0
    %737 = vmatprep.subr.mxu0 0.0
    %738 = vmatpush1.xpose.msra.mxu0 0.0
    %739 = vmatprep.subr.mxu0 0.0
    %740 = vmatpush1.xpose.msra.mxu0 0.0
    %741 = vmatprep.subr.mxu0 0.0
    %742 = vmatpush1.xpose.msra.mxu0 0.0
    %743 = vmatprep.subr.mxu0 0.0
    %744 = vmatpush1.xpose.msra.mxu0 0.0
    %745 = vmatprep.subr.mxu0 0.0
    %746 = vmatpush1.xpose.msra.mxu0 0.0
    %747 = vmatprep.subr.mxu0 0.0
    %748 = vmatpush1.xpose.msra.mxu0 0.0
    %749 = vmatprep.subr.mxu0 0.0
    %750 = vmatpush1.xpose.msra.mxu0 0.0
    %751 = vmatprep.subr.mxu0 0.0
    %752 = vmatpush1.xpose.msra.mxu0 0.0
    %753 = vmatprep.subr.mxu0 0.0
    %754 = vmatpush1.xpose.msra.mxu0 0.0
    %755 = vmatprep.subr.mxu0 0.0
    %756 = vmatpush1.xpose.msra.mxu0 0.0
    %757 = vmatprep.subr.mxu0 0.0
    %758 = vmatpush1.xpose.msra.mxu0 0.0
    %759 = vmatprep.subr.mxu0 0.0
    %760 = vmatpush1.xpose.msra.mxu0 0.0
    %761 = vmatprep.subr.mxu0 0.0
    %762 = vmatpush1.xpose.msra.mxu0 0.0
    %763 = vmatprep.subr.mxu0 0.0
    %764 = vmatpush1.xpose.msra.mxu0 0.0
    %765 = vmatprep.subr.mxu0 0.0
    %766 = vmatpush1.xpose.msra.mxu0 0.0
    %767 = vmatprep.subr.mxu0 0.0
    %768 = vmatpush1.xpose.msra.mxu0 0.0
    %769 = vmatprep.subr.mxu0 0.0
    %770 = vmatpush1.xpose.msra.mxu0 0.0
    %771 = vmatprep.subr.mxu0 0.0
    %772 = vmatpush1.xpose.msra.mxu0 0.0
    %773 = vmatprep.subr.mxu0 0.0
    %774 = vmatpush1.xpose.msra.mxu0 0.0
    %775 = vmatprep.subr.mxu0 0.0
    %776 = vmatpush1.xpose.msra.mxu0 0.0
    %777 = vmatprep.mubr.f32.mxu0 0.0
    %778 = vmatmul.mubr.f32.gmra.mrb[0].mxu0 %v709
    %v779 = vpop.f32.mrb[0].mxu0
    %v780 = vadd.f32 0.0, %v779
    %v781 = vpop.f32.mrb[0].mxu0
    %782 = vdwg.mxu0
    %v783 = vsel %vm378, %v780, -inf
    %784 = vmax.xlane.f32.xlu0 %v783
    %v785 = vpop.xlane.xlu0 %784
    %v786 = vsub.f32 %v780, %v785
    %v787 = vmul.f32 %v786, 1.442695
    %v788 = vpow.pop %v787
    %v789 = vsel %vm378, %v788, 0.0
    %790 = vadd.xlane.f32.xlu0 %v789
    %v791 = vpop.xlane.xlu0 %790
    %v792 = vrcp.pop %v791
    %v793 = vmul.f32 %v788, %v792
    %794 = vrot.lane.b32.xlu0 %v367, 48
    %v795 = vpop.permute.xlu0 %794
    %v798 = vsel %vm378, %v793, 0
    %800 = vmatprep.subr.mxu0 0.0
    %801 = vmatpush1.msra.mxu0 %v795
    %802 = vmatprep.subr.mxu0 0.0
    %803 = vmatpush1.msra.mxu0 0.0
    %804 = vmatprep.subr.mxu0 0.0
    %805 = vmatpush1.msra.mxu0 0.0
    %806 = vmatprep.subr.mxu0 0.0
    %807 = vmatpush1.msra.mxu0 0.0
    %808 = vmatprep.subr.mxu0 0.0
    %809 = vmatpush1.msra.mxu0 0.0
    %810 = vmatprep.subr.mxu0 0.0
    %811 = vmatpush1.msra.mxu0 0.0
    %812 = vmatprep.subr.mxu0 0.0
    %813 = vmatpush1.msra.mxu0 0.0
    %814 = vmatprep.subr.mxu0 0.0
    %815 = vmatpush1.msra.mxu0 0.0
    %816 = vmatprep.subr.mxu0 0.0
    %817 = vmatpush1.msra.mxu0 0.0
    %818 = vmatprep.subr.mxu0 0.0
    %819 = vmatpush1.msra.mxu0 0.0
    %820 = vmatprep.subr.mxu0 0.0
    %821 = vmatpush1.msra.mxu0 0.0
    %822 = vmatprep.subr.mxu0 0.0
    %823 = vmatpush1.msra.mxu0 0.0
    %824 = vmatprep.subr.mxu0 0.0
    %825 = vmatpush1.msra.mxu0 0.0
    %826 = vmatprep.subr.mxu0 0.0
    %827 = vmatpush1.msra.mxu0 0.0
    %828 = vmatprep.subr.mxu0 0.0
    %829 = vmatpush1.msra.mxu0 0.0
    %830 = vmatprep.subr.mxu0 0.0
    %831 = vmatpush1.msra.mxu0 0.0
    %832 = vmatprep.subr.mxu0 0.0
    %833 = vmatpush1.msra.mxu0 0.0
    %834 = vmatprep.subr.mxu0 0.0
    %835 = vmatpush1.msra.mxu0 0.0
    %836 = vmatprep.subr.mxu0 0.0
    %837 = vmatpush1.msra.mxu0 0.0
    %838 = vmatprep.subr.mxu0 0.0
    %839 = vmatpush1.msra.mxu0 0.0
    %840 = vmatprep.subr.mxu0 0.0
    %841 = vmatpush1.msra.mxu0 0.0
    %842 = vmatprep.subr.mxu0 0.0
    %843 = vmatpush1.msra.mxu0 0.0
    %844 = vmatprep.subr.mxu0 0.0
    %845 = vmatpush1.msra.mxu0 0.0
    %846 = vmatprep.subr.mxu0 0.0
    %847 = vmatpush1.msra.mxu0 0.0
    %848 = vmatprep.subr.mxu0 0.0
    %849 = vmatpush1.msra.mxu0 0.0
    %850 = vmatprep.subr.mxu0 0.0
    %851 = vmatpush1.msra.mxu0 0.0
    %852 = vmatprep.subr.mxu0 0.0
    %853 = vmatpush1.msra.mxu0 0.0
    %854 = vmatprep.subr.mxu0 0.0
    %855 = vmatpush1.msra.mxu0 0.0
    %856 = vmatprep.subr.mxu0 0.0
    %857 = vmatpush1.msra.mxu0 0.0
    %858 = vmatprep.subr.mxu0 0.0
    %859 = vmatpush1.msra.mxu0 0.0
    %860 = vmatprep.subr.mxu0 0.0
    %861 = vmatpush1.msra.mxu0 0.0
    %862 = vmatprep.subr.mxu0 0.0
    %863 = vmatpush1.msra.mxu0 0.0
    %864 = vmatprep.mubr.f32.mxu0 0.0
    %865 = vmatmul.mubr.f32.gmra.mrb[0].mxu0 %v798
    %v866 = vpop.f32.mrb[0].mxu0
    %v867 = vadd.f32 0.0, %v866
    %v868 = vpop.f32.mrb[0].mxu0
    %869 = vdwg.mxu0
    %870 = vrot.lane.b32.xlu0 %v367, 104
    %v871 = vpop.permute.xlu0 %870
    %872 = vrot.lane.b32.xlu0 %v367, 72
    %v873 = vpop.permute.xlu0 %872
    %v874 = vsel %vm378, %v871, 0
    %v876 = vsel %vm378, %v873, 0
    %878 = vmatprep.subr.mxu0 0.0
    %879 = vmatpush1.xpose.msra.mxu0 %v876
    %880 = vmatprep.subr.mxu0 0.0
    %881 = vmatpush1.xpose.msra.mxu0 0.0
    %882 = vmatprep.subr.mxu0 0.0
    %883 = vmatpush1.xpose.msra.mxu0 0.0
    %884 = vmatprep.subr.mxu0 0.0
    %885 = vmatpush1.xpose.msra.mxu0 0.0
    %886 = vmatprep.subr.mxu0 0.0
    %887 = vmatpush1.xpose.msra.mxu0 0.0
    %888 = vmatprep.subr.mxu0 0.0
    %889 = vmatpush1.xpose.msra.mxu0 0.0
    %890 = vmatprep.subr.mxu0 0.0
    %891 = vmatpush1.xpose.msra.mxu0 0.0
    %892 = vmatprep.subr.mxu0 0.0
    %893 = vmatpush1.xpose.msra.mxu0 0.0
    %894 = vmatprep.subr.mxu0 0.0
    %895 = vmatpush1.xpose.msra.mxu0 0.0
    %896 = vmatprep.subr.mxu0 0.0
    %897 = vmatpush1.xpose.msra.mxu0 0.0
    %898 = vmatprep.subr.mxu0 0.0
    %899 = vmatpush1.xpose.msra.mxu0 0.0
    %900 = vmatprep.subr.mxu0 0.0
    %901 = vmatpush1.xpose.msra.mxu0 0.0
    %902 = vmatprep.subr.mxu0 0.0
    %903 = vmatpush1.xpose.msra.mxu0 0.0
    %904 = vmatprep.subr.mxu0 0.0
    %905 = vmatpush1.xpose.msra.mxu0 0.0
    %906 = vmatprep.subr.mxu0 0.0
    %907 = vmatpush1.xpose.msra.mxu0 0.0
    %908 = vmatprep.subr.mxu0 0.0
    %909 = vmatpush1.xpose.msra.mxu0 0.0
    %910 = vmatprep.subr.mxu0 0.0
    %911 = vmatpush1.xpose.msra.mxu0 0.0
    %912 = vmatprep.subr.mxu0 0.0
    %913 = vmatpush1.xpose.msra.mxu0 0.0
    %914 = vmatprep.subr.mxu0 0.0
    %915 = vmatpush1.xpose.msra.mxu0 0.0
    %916 = vmatprep.subr.mxu0 0.0
    %917 = vmatpush1.xpose.msra.mxu0 0.0
    %918 = vmatprep.subr.mxu0 0.0
    %919 = vmatpush1.xpose.msra.mxu0 0.0
    %920 = vmatprep.subr.mxu0 0.0
    %921 = vmatpush1.xpose.msra.mxu0 0.0
    %922 = vmatprep.subr.mxu0 0.0
    %923 = vmatpush1.xpose.msra.mxu0 0.0
    %924 = vmatprep.subr.mxu0 0.0
    %925 = vmatpush1.xpose.msra.mxu0 0.0
    %926 = vmatprep.subr.mxu0 0.0
    %927 = vmatpush1.xpose.msra.mxu0 0.0
    %928 = vmatprep.subr.mxu0 0.0
    %929 = vmatpush1.xpose.msra.mxu0 0.0
    %930 = vmatprep.subr.mxu0 0.0
    %931 = vmatpush1.xpose.msra.mxu0 0.0
    %932 = vmatprep.subr.mxu0 0.0
    %933 = vmatpush1.xpose.msra.mxu0 0.0
    %934 = vmatprep.subr.mxu0 0.0
    %935 = vmatpush1.xpose.msra.mxu0 0.0
    %936 = vmatprep.subr.mxu0 0.0
    %937 = vmatpush1.xpose.msra.mxu0 0.0
    %938 = vmatprep.subr.mxu0 0.0
    %939 = vmatpush1.xpose.msra.mxu0 0.0
    %940 = vmatprep.subr.mxu0 0.0
    %941 = vmatpush1.xpose.msra.mxu0 0.0
    %942 = vmatprep.mubr.f32.mxu0 0.0
    %943 = vmatmul.mubr.f32.gmra.mrb[0].mxu0 %v874
    %v944 = vpop.f32.mrb[0].mxu0
    %v945 = vadd.f32 0.0, %v944
    %v946 = vpop.f32.mrb[0].mxu0
    %947 = vdwg.mxu0
    %v948 = vsel %vm378, %v945, -inf
    %949 = vmax.xlane.f32.xlu0 %v948
    %v950 = vpop.xlane.xlu0 %949
    %v951 = vsub.f32 %v945, %v950
    %v952 = vmul.f32 %v951, 1.442695
    %v953 = vpow.pop %v952
    %v954 = vsel %vm378, %v953, 0.0
    %955 = vadd.xlane.f32.xlu0 %v954
    %v956 = vpop.xlane.xlu0 %955
    %v957 = vrcp.pop %v956
    %v958 = vmul.f32 %v953, %v957
    %959 = vrot.lane.b32.xlu0 %v367, 40
    %v960 = vpop.permute.xlu0 %959
    %v963 = vsel %vm378, %v958, 0
    %965 = vmatprep.subr.mxu0 0.0
    %966 = vmatpush1.msra.mxu0 %v960
    %967 = vmatprep.subr.mxu0 0.0
    %968 = vmatpush1.msra.mxu0 0.0
    %969 = vmatprep.subr.mxu0 0.0
    %970 = vmatpush1.msra.mxu0 0.0
    %971 = vmatprep.subr.mxu0 0.0
    %972 = vmatpush1.msra.mxu0 0.0
    %973 = vmatprep.subr.mxu0 0.0
    %974 = vmatpush1.msra.mxu0 0.0
    %975 = vmatprep.subr.mxu0 0.0
    %976 = vmatpush1.msra.mxu0 0.0
    %977 = vmatprep.subr.mxu0 0.0
    %978 = vmatpush1.msra.mxu0 0.0
    %979 = vmatprep.subr.mxu0 0.0
    %980 = vmatpush1.msra.mxu0 0.0
    %981 = vmatprep.subr.mxu0 0.0
    %982 = vmatpush1.msra.mxu0 0.0
    %983 = vmatprep.subr.mxu0 0.0
    %984 = vmatpush1.msra.mxu0 0.0
    %985 = vmatprep.subr.mxu0 0.0
    %986 = vmatpush1.msra.mxu0 0.0
    %987 = vmatprep.subr.mxu0 0.0
    %988 = vmatpush1.msra.mxu0 0.0
    %989 = vmatprep.subr.mxu0 0.0
    %990 = vmatpush1.msra.mxu0 0.0
    %991 = vmatprep.subr.mxu0 0.0
    %992 = vmatpush1.msra.mxu0 0.0
    %993 = vmatprep.subr.mxu0 0.0
    %994 = vmatpush1.msra.mxu0 0.0
    %995 = vmatprep.subr.mxu0 0.0
    %996 = vmatpush1.msra.mxu0 0.0
    %997 = vmatprep.subr.mxu0 0.0
    %998 = vmatpush1.msra.mxu0 0.0
    %999 = vmatprep.subr.mxu0 0.0
    %1000 = vmatpush1.msra.mxu0 0.0
    %1001 = vmatprep.subr.mxu0 0.0
    %1002 = vmatpush1.msra.mxu0 0.0
    %1003 = vmatprep.subr.mxu0 0.0
    %1004 = vmatpush1.msra.mxu0 0.0
    %1005 = vmatprep.subr.mxu0 0.0
    %1006 = vmatpush1.msra.mxu0 0.0
    %1007 = vmatprep.subr.mxu0 0.0
    %1008 = vmatpush1.msra.mxu0 0.0
    %1009 = vmatprep.subr.mxu0 0.0
    %1010 = vmatpush1.msra.mxu0 0.0
    %1011 = vmatprep.subr.mxu0 0.0
    %1012 = vmatpush1.msra.mxu0 0.0
    %1013 = vmatprep.subr.mxu0 0.0
    %1014 = vmatpush1.msra.mxu0 0.0
    %1015 = vmatprep.subr.mxu0 0.0
    %1016 = vmatpush1.msra.mxu0 0.0
    %1017 = vmatprep.subr.mxu0 0.0
    %1018 = vmatpush1.msra.mxu0 0.0
    %1019 = vmatprep.subr.mxu0 0.0
    %1020 = vmatpush1.msra.mxu0 0.0
    %1021 = vmatprep.subr.mxu0 0.0
    %1022 = vmatpush1.msra.mxu0 0.0
    %1023 = vmatprep.subr.mxu0 0.0
    %1024 = vmatpush1.msra.mxu0 0.0
    %1025 = vmatprep.subr.mxu0 0.0
    %1026 = vmatpush1.msra.mxu0 0.0
    %1027 = vmatprep.subr.mxu0 0.0
    %1028 = vmatpush1.msra.mxu0 0.0
    %1029 = vmatprep.mubr.f32.mxu0 0.0
    %1030 = vmatmul.mubr.f32.gmra.mrb[0].mxu0 %v963
    %v1031 = vpop.f32.mrb[0].mxu0
    %v1032 = vadd.f32 0.0, %v1031
    %v1033 = vpop.f32.mrb[0].mxu0
    %1034 = vdwg.mxu0
    %1036 = vrot.lane.b32.xlu0 %v702, 8
    %v1037 = vpop.permute.xlu0 %1036
    %1040 = vrot.lane.b32.xlu0 %v867, 16
    %v1041 = vpop.permute.xlu0 %1040
    %1044 = vrot.lane.b32.xlu0 %v1032, 24
    %v1045 = vpop.permute.xlu0 %1044
    %v1047 = vsel %vm378, %v537, %v1037
    %v1048 = vsel %vm111, %v1047, %v1041
    %vm1049 = vcmask 195584
    %v1050 = vsel %vm1049, %v1048, %v1045
    %1052 = vrot.lane.b32.xlu0 %v372, 96
    %v1053 = vpop.permute.xlu0 %1052
    %v1054 = vsel %vm378, %v372, 0
    %v1056 = vsel %vm378, %v1053, 0
    %1058 = vmatprep.subr.mxu0 0.0
    %1059 = vmatpush1.xpose.msra.mxu0 %v1056
    %1060 = vmatprep.subr.mxu0 0.0
    %1061 = vmatpush1.xpose.msra.mxu0 0.0
    %1062 = vmatprep.subr.mxu0 0.0
    %1063 = vmatpush1.xpose.msra.mxu0 0.0
    %1064 = vmatprep.subr.mxu0 0.0
    %1065 = vmatpush1.xpose.msra.mxu0 0.0
    %1066 = vmatprep.subr.mxu0 0.0
    %1067 = vmatpush1.xpose.msra.mxu0 0.0
    %1068 = vmatprep.subr.mxu0 0.0
    %1069 = vmatpush1.xpose.msra.mxu0 0.0
    %1070 = vmatprep.subr.mxu0 0.0
    %1071 = vmatpush1.xpose.msra.mxu0 0.0
    %1072 = vmatprep.subr.mxu0 0.0
    %1073 = vmatpush1.xpose.msra.mxu0 0.0
    %1074 = vmatprep.subr.mxu0 0.0
    %1075 = vmatpush1.xpose.msra.mxu0 0.0
    %1076 = vmatprep.subr.mxu0 0.0
    %1077 = vmatpush1.xpose.msra.mxu0 0.0
    %1078 = vmatprep.subr.mxu0 0.0
    %1079 = vmatpush1.xpose.msra.mxu0 0.0
    %1080 = vmatprep.subr.mxu0 0.0
    %1081 = vmatpush1.xpose.msra.mxu0 0.0
    %1082 = vmatprep.subr.mxu0 0.0
    %1083 = vmatpush1.xpose.msra.mxu0 0.0
    %1084 = vmatprep.subr.mxu0 0.0
    %1085 = vmatpush1.xpose.msra.mxu0 0.0
    %1086 = vmatprep.subr.mxu0 0.0
    %1087 = vmatpush1.xpose.msra.mxu0 0.0
    %1088 = vmatprep.subr.mxu0 0.0
    %1089 = vmatpush1.xpose.msra.mxu0 0.0
    %1090 = vmatprep.subr.mxu0 0.0
    %1091 = vmatpush1.xpose.msra.mxu0 0.0
    %1092 = vmatprep.subr.mxu0 0.0
    %1093 = vmatpush1.xpose.msra.mxu0 0.0
    %1094 = vmatprep.subr.mxu0 0.0
    %1095 = vmatpush1.xpose.msra.mxu0 0.0
    %1096 = vmatprep.subr.mxu0 0.0
    %1097 = vmatpush1.xpose.msra.mxu0 0.0
    %1098 = vmatprep.subr.mxu0 0.0
    %1099 = vmatpush1.xpose.msra.mxu0 0.0
    %1100 = vmatprep.subr.mxu0 0.0
    %1101 = vmatpush1.xpose.msra.mxu0 0.0
    %1102 = vmatprep.subr.mxu0 0.0
    %1103 = vmatpush1.xpose.msra.mxu0 0.0
    %1104 = vmatprep.subr.mxu0 0.0
    %1105 = vmatpush1.xpose.msra.mxu0 0.0
    %1106 = vmatprep.subr.mxu0 0.0
    %1107 = vmatpush1.xpose.msra.mxu0 0.0
    %1108 = vmatprep.subr.mxu0 0.0
    %1109 = vmatpush1.xpose.msra.mxu0 0.0
    %1110 = vmatprep.subr.mxu0 0.0
    %1111 = vmatpush1.xpose.msra.mxu0 0.0
    %1112 = vmatprep.subr.mxu0 0.0
    %1113 = vmatpush1.xpose.msra.mxu0 0.0
    %1114 = vmatprep.subr.mxu0 0.0
    %1115 = vmatpush1.xpose.msra.mxu0 0.0
    %1116 = vmatprep.subr.mxu0 0.0
    %1117 = vmatpush1.xpose.msra.mxu0 0.0
    %1118 = vmatprep.subr.mxu0 0.0
    %1119 = vmatpush1.xpose.msra.mxu0 0.0
    %1120 = vmatprep.subr.mxu0 0.0
    %1121 = vmatpush1.xpose.msra.mxu0 0.0
    %1122 = vmatprep.mubr.f32.mxu0 0.0
    %1123 = vmatmul.mubr.f32.gmra.mrb[0].mxu0 %v1054
    %v1124 = vpop.f32.mrb[0].mxu0
    %v1125 = vadd.f32 0.0, %v1124
    %v1126 = vpop.f32.mrb[0].mxu0
    %1127 = vdwg.mxu0
    %v1128 = vsel %vm378, %v1125, -inf
    %1129 = vmax.xlane.f32.xlu0 %v1128
    %v1130 = vpop.xlane.xlu0 %1129
    %v1131 = vsub.f32 %v1125, %v1130
    %v1132 = vmul.f32 %v1131, 1.442695
    %v1133 = vpow.pop %v1132
    %v1134 = vsel %vm378, %v1133, 0.0
    %1135 = vadd.xlane.f32.xlu0 %v1134
    %v1136 = vpop.xlane.xlu0 %1135
    %v1137 = vrcp.pop %v1136
    %v1138 = vmul.f32 %v1133, %v1137
    %1139 = vrot.lane.b32.xlu0 %v372, 64
    %v1140 = vpop.permute.xlu0 %1139
    %v1143 = vsel %vm378, %v1138, 0
    %1145 = vmatprep.subr.mxu0 0.0
    %1146 = vmatpush1.msra.mxu0 %v1140
    %1147 = vmatprep.subr.mxu0 0.0
    %1148 = vmatpush1.msra.mxu0 0.0
    %1149 = vmatprep.subr.mxu0 0.0
    %1150 = vmatpush1.msra.mxu0 0.0
    %1151 = vmatprep.subr.mxu0 0.0
    %1152 = vmatpush1.msra.mxu0 0.0
    %1153 = vmatprep.subr.mxu0 0.0
    %1154 = vmatpush1.msra.mxu0 0.0
    %1155 = vmatprep.subr.mxu0 0.0
    %1156 = vmatpush1.msra.mxu0 0.0
    %1157 = vmatprep.subr.mxu0 0.0
    %1158 = vmatpush1.msra.mxu0 0.0
    %1159 = vmatprep.subr.mxu0 0.0
    %1160 = vmatpush1.msra.mxu0 0.0
    %1161 = vmatprep.subr.mxu0 0.0
    %1162 = vmatpush1.msra.mxu0 0.0
    %1163 = vmatprep.subr.mxu0 0.0
    %1164 = vmatpush1.msra.mxu0 0.0
    %1165 = vmatprep.subr.mxu0 0.0
    %1166 = vmatpush1.msra.mxu0 0.0
    %1167 = vmatprep.subr.mxu0 0.0
    %1168 = vmatpush1.msra.mxu0 0.0
    %1169 = vmatprep.subr.mxu0 0.0
    %1170 = vmatpush1.msra.mxu0 0.0
    %1171 = vmatprep.subr.mxu0 0.0
    %1172 = vmatpush1.msra.mxu0 0.0
    %1173 = vmatprep.subr.mxu0 0.0
    %1174 = vmatpush1.msra.mxu0 0.0
    %1175 = vmatprep.subr.mxu0 0.0
    %1176 = vmatpush1.msra.mxu0 0.0
    %1177 = vmatprep.subr.mxu0 0.0
    %1178 = vmatpush1.msra.mxu0 0.0
    %1179 = vmatprep.subr.mxu0 0.0
    %1180 = vmatpush1.msra.mxu0 0.0
    %1181 = vmatprep.subr.mxu0 0.0
    %1182 = vmatpush1.msra.mxu0 0.0
    %1183 = vmatprep.subr.mxu0 0.0
    %1184 = vmatpush1.msra.mxu0 0.0
    %1185 = vmatprep.subr.mxu0 0.0
    %1186 = vmatpush1.msra.mxu0 0.0
    %1187 = vmatprep.subr.mxu0 0.0
    %1188 = vmatpush1.msra.mxu0 0.0
    %1189 = vmatprep.subr.mxu0 0.0
    %1190 = vmatpush1.msra.mxu0 0.0
    %1191 = vmatprep.subr.mxu0 0.0
    %1192 = vmatpush1.msra.mxu0 0.0
    %1193 = vmatprep.subr.mxu0 0.0
    %1194 = vmatpush1.msra.mxu0 0.0
    %1195 = vmatprep.subr.mxu0 0.0
    %1196 = vmatpush1.msra.mxu0 0.0
    %1197 = vmatprep.subr.mxu0 0.0
    %1198 = vmatpush1.msra.mxu0 0.0
    %1199 = vmatprep.subr.mxu0 0.0
    %1200 = vmatpush1.msra.mxu0 0.0
    %1201 = vmatprep.subr.mxu0 0.0
    %1202 = vmatpush1.msra.mxu0 0.0
    %1203 = vmatprep.subr.mxu0 0.0
    %1204 = vmatpush1.msra.mxu0 0.0
    %1205 = vmatprep.subr.mxu0 0.0
    %1206 = vmatpush1.msra.mxu0 0.0
    %1207 = vmatprep.subr.mxu0 0.0
    %1208 = vmatpush1.msra.mxu0 0.0
    %1209 = vmatprep.mubr.f32.mxu0 0.0
    %1210 = vmatmul.mubr.f32.gmra.mrb[0].mxu0 %v1143
    %v1211 = vpop.f32.mrb[0].mxu0
    %v1212 = vadd.f32 0.0, %v1211
    %v1213 = vpop.f32.mrb[0].mxu0
    %1214 = vdwg.mxu0
    %1215 = vrot.lane.b32.xlu0 %v372, 120
    %v1216 = vpop.permute.xlu0 %1215
    %1217 = vrot.lane.b32.xlu0 %v372, 88
    %v1218 = vpop.permute.xlu0 %1217
    %v1219 = vsel %vm378, %v1216, 0
    %v1221 = vsel %vm378, %v1218, 0
    %1223 = vmatprep.subr.mxu0 0.0
    %1224 = vmatpush1.xpose.msra.mxu0 %v1221
    %1225 = vmatprep.subr.mxu0 0.0
    %1226 = vmatpush1.xpose.msra.mxu0 0.0
    %1227 = vmatprep.subr.mxu0 0.0
    %1228 = vmatpush1.xpose.msra.mxu0 0.0
    %1229 = vmatprep.subr.mxu0 0.0
    %1230 = vmatpush1.xpose.msra.mxu0 0.0
    %1231 = vmatprep.subr.mxu0 0.0
    %1232 = vmatpush1.xpose.msra.mxu0 0.0
    %1233 = vmatprep.subr.mxu0 0.0
    %1234 = vmatpush1.xpose.msra.mxu0 0.0
    %1235 = vmatprep.subr.mxu0 0.0
    %1236 = vmatpush1.xpose.msra.mxu0 0.0
    %1237 = vmatprep.subr.mxu0 0.0
    %1238 = vmatpush1.xpose.msra.mxu0 0.0
    %1239 = vmatprep.subr.mxu0 0.0
    %1240 = vmatpush1.xpose.msra.mxu0 0.0
    %1241 = vmatprep.subr.mxu0 0.0
    %1242 = vmatpush1.xpose.msra.mxu0 0.0
    %1243 = vmatprep.subr.mxu0 0.0
    %1244 = vmatpush1.xpose.msra.mxu0 0.0
    %1245 = vmatprep.subr.mxu0 0.0
    %1246 = vmatpush1.xpose.msra.mxu0 0.0
    %1247 = vmatprep.subr.mxu0 0.0
    %1248 = vmatpush1.xpose.msra.mxu0 0.0
    %1249 = vmatprep.subr.mxu0 0.0
    %1250 = vmatpush1.xpose.msra.mxu0 0.0
    %1251 = vmatprep.subr.mxu0 0.0
    %1252 = vmatpush1.xpose.msra.mxu0 0.0
    %1253 = vmatprep.subr.mxu0 0.0
    %1254 = vmatpush1.xpose.msra.mxu0 0.0
    %1255 = vmatprep.subr.mxu0 0.0
    %1256 = vmatpush1.xpose.msra.mxu0 0.0
    %1257 = vmatprep.subr.mxu0 0.0
    %1258 = vmatpush1.xpose.msra.mxu0 0.0
    %1259 = vmatprep.subr.mxu0 0.0
    %1260 = vmatpush1.xpose.msra.mxu0 0.0
    %1261 = vmatprep.subr.mxu0 0.0
    %1262 = vmatpush1.xpose.msra.mxu0 0.0
    %1263 = vmatprep.subr.mxu0 0.0
    %1264 = vmatpush1.xpose.msra.mxu0 0.0
    %1265 = vmatprep.subr.mxu0 0.0
    %1266 = vmatpush1.xpose.msra.mxu0 0.0
    %1267 = vmatprep.subr.mxu0 0.0
    %1268 = vmatpush1.xpose.msra.mxu0 0.0
    %1269 = vmatprep.subr.mxu0 0.0
    %1270 = vmatpush1.xpose.msra.mxu0 0.0
    %1271 = vmatprep.subr.mxu0 0.0
    %1272 = vmatpush1.xpose.msra.mxu0 0.0
    %1273 = vmatprep.subr.mxu0 0.0
    %1274 = vmatpush1.xpose.msra.mxu0 0.0
    %1275 = vmatprep.subr.mxu0 0.0
    %1276 = vmatpush1.xpose.msra.mxu0 0.0
    %1277 = vmatprep.subr.mxu0 0.0
    %1278 = vmatpush1.xpose.msra.mxu0 0.0
    %1279 = vmatprep.subr.mxu0 0.0
    %1280 = vmatpush1.xpose.msra.mxu0 0.0
    %1281 = vmatprep.subr.mxu0 0.0
    %1282 = vmatpush1.xpose.msra.mxu0 0.0
    %1283 = vmatprep.subr.mxu0 0.0
    %1284 = vmatpush1.xpose.msra.mxu0 0.0
    %1285 = vmatprep.subr.mxu0 0.0
    %1286 = vmatpush1.xpose.msra.mxu0 0.0
    %1287 = vmatprep.mubr.f32.mxu0 0.0
    %1288 = vmatmul.mubr.f32.gmra.mrb[0].mxu0 %v1219
    %v1289 = vpop.f32.mrb[0].mxu0
    %v1290 = vadd.f32 0.0, %v1289
    %v1291 = vpop.f32.mrb[0].mxu0
    %1292 = vdwg.mxu0
    %v1293 = vsel %vm378, %v1290, -inf
    %1294 = vmax.xlane.f32.xlu0 %v1293
    %v1295 = vpop.xlane.xlu0 %1294
    %v1296 = vsub.f32 %v1290, %v1295
    %v1297 = vmul.f32 %v1296, 1.442695
    %v1298 = vpow.pop %v1297
    %v1299 = vsel %vm378, %v1298, 0.0
    %1300 = vadd.xlane.f32.xlu0 %v1299
    %v1301 = vpop.xlane.xlu0 %1300
    %v1302 = vrcp.pop %v1301
    %v1303 = vmul.f32 %v1298, %v1302
    %1304 = vrot.lane.b32.xlu0 %v372, 56
    %v1305 = vpop.permute.xlu0 %1304
    %v1308 = vsel %vm378, %v1303, 0
    %1310 = vmatprep.subr.mxu0 0.0
    %1311 = vmatpush1.msra.mxu0 %v1305
    %1312 = vmatprep.subr.mxu0 0.0
    %1313 = vmatpush1.msra.mxu0 0.0
    %1314 = vmatprep.subr.mxu0 0.0
    %1315 = vmatpush1.msra.mxu0 0.0
    %1316 = vmatprep.subr.mxu0 0.0
    %1317 = vmatpush1.msra.mxu0 0.0
    %1318 = vmatprep.subr.mxu0 0.0
    %1319 = vmatpush1.msra.mxu0 0.0
    %1320 = vmatprep.subr.mxu0 0.0
    %1321 = vmatpush1.msra.mxu0 0.0
    %1322 = vmatprep.subr.mxu0 0.0
    %1323 = vmatpush1.msra.mxu0 0.0
    %1324 = vmatprep.subr.mxu0 0.0
    %1325 = vmatpush1.msra.mxu0 0.0
    %1326 = vmatprep.subr.mxu0 0.0
    %1327 = vmatpush1.msra.mxu0 0.0
    %1328 = vmatprep.subr.mxu0 0.0
    %1329 = vmatpush1.msra.mxu0 0.0
    %1330 = vmatprep.subr.mxu0 0.0
    %1331 = vmatpush1.msra.mxu0 0.0
    %1332 = vmatprep.subr.mxu0 0.0
    %1333 = vmatpush1.msra.mxu0 0.0
    %1334 = vmatprep.subr.mxu0 0.0
    %1335 = vmatpush1.msra.mxu0 0.0
    %1336 = vmatprep.subr.mxu0 0.0
    %1337 = vmatpush1.msra.mxu0 0.0
    %1338 = vmatprep.subr.mxu0 0.0
    %1339 = vmatpush1.msra.mxu0 0.0
    %1340 = vmatprep.subr.mxu0 0.0
    %1341 = vmatpush1.msra.mxu0 0.0
    %1342 = vmatprep.subr.mxu0 0.0
    %1343 = vmatpush1.msra.mxu0 0.0
    %1344 = vmatprep.subr.mxu0 0.0
    %1345 = vmatpush1.msra.mxu0 0.0
    %1346 = vmatprep.subr.mxu0 0.0
    %1347 = vmatpush1.msra.mxu0 0.0
    %1348 = vmatprep.subr.mxu0 0.0
    %1349 = vmatpush1.msra.mxu0 0.0
    %1350 = vmatprep.subr.mxu0 0.0
    %1351 = vmatpush1.msra.mxu0 0.0
    %1352 = vmatprep.subr.mxu0 0.0
    %1353 = vmatpush1.msra.mxu0 0.0
    %1354 = vmatprep.subr.mxu0 0.0
    %1355 = vmatpush1.msra.mxu0 0.0
    %1356 = vmatprep.subr.mxu0 0.0
    %1357 = vmatpush1.msra.mxu0 0.0
    %1358 = vmatprep.subr.mxu0 0.0
    %1359 = vmatpush1.msra.mxu0 0.0
    %1360 = vmatprep.subr.mxu0 0.0
    %1361 = vmatpush1.msra.mxu0 0.0
    %1362 = vmatprep.subr.mxu0 0.0
    %1363 = vmatpush1.msra.mxu0 0.0
    %1364 = vmatprep.subr.mxu0 0.0
    %1365 = vmatpush1.msra.mxu0 0.0
    %1366 = vmatprep.subr.mxu0 0.0
    %1367 = vmatpush1.msra.mxu0 0.0
    %1368 = vmatprep.subr.mxu0 0.0
    %1369 = vmatpush1.msra.mxu0 0.0
    %1370 = vmatprep.subr.mxu0 0.0
    %1371 = vmatpush1.msra.mxu0 0.0
    %1372 = vmatprep.subr.mxu0 0.0
    %1373 = vmatpush1.msra.mxu0 0.0
    %1374 = vmatprep.mubr.f32.mxu0 0.0
    %1375 = vmatmul.mubr.f32.gmra.mrb[0].mxu0 %v1308
    %v1376 = vpop.f32.mrb[0].mxu0
    %v1377 = vadd.f32 0.0, %v1376
    %v1378 = vpop.f32.mrb[0].mxu0
    %1379 = vdwg.mxu0
    %1380 = vrot.lane.b32.xlu0 %v372, 112
    %v1381 = vpop.permute.xlu0 %1380
    %1382 = vrot.lane.b32.xlu0 %v372, 80
    %v1383 = vpop.permute.xlu0 %1382
    %v1384 = vsel %vm378, %v1381, 0
    %v1386 = vsel %vm378, %v1383, 0
    %1388 = vmatprep.subr.mxu0 0.0
    %1389 = vmatpush1.xpose.msra.mxu0 %v1386
    %1390 = vmatprep.subr.mxu0 0.0
    %1391 = vmatpush1.xpose.msra.mxu0 0.0
    %1392 = vmatprep.subr.mxu0 0.0
    %1393 = vmatpush1.xpose.msra.mxu0 0.0
    %1394 = vmatprep.subr.mxu0 0.0
    %1395 = vmatpush1.xpose.msra.mxu0 0.0
    %1396 = vmatprep.subr.mxu0 0.0
    %1397 = vmatpush1.xpose.msra.mxu0 0.0
    %1398 = vmatprep.subr.mxu0 0.0
    %1399 = vmatpush1.xpose.msra.mxu0 0.0
    %1400 = vmatprep.subr.mxu0 0.0
    %1401 = vmatpush1.xpose.msra.mxu0 0.0
    %1402 = vmatprep.subr.mxu0 0.0
    %1403 = vmatpush1.xpose.msra.mxu0 0.0
    %1404 = vmatprep.subr.mxu0 0.0
    %1405 = vmatpush1.xpose.msra.mxu0 0.0
    %1406 = vmatprep.subr.mxu0 0.0
    %1407 = vmatpush1.xpose.msra.mxu0 0.0
    %1408 = vmatprep.subr.mxu0 0.0
    %1409 = vmatpush1.xpose.msra.mxu0 0.0
    %1410 = vmatprep.subr.mxu0 0.0
    %1411 = vmatpush1.xpose.msra.mxu0 0.0
    %1412 = vmatprep.subr.mxu0 0.0
    %1413 = vmatpush1.xpose.msra.mxu0 0.0
    %1414 = vmatprep.subr.mxu0 0.0
    %1415 = vmatpush1.xpose.msra.mxu0 0.0
    %1416 = vmatprep.subr.mxu0 0.0
    %1417 = vmatpush1.xpose.msra.mxu0 0.0
    %1418 = vmatprep.subr.mxu0 0.0
    %1419 = vmatpush1.xpose.msra.mxu0 0.0
    %1420 = vmatprep.subr.mxu0 0.0
    %1421 = vmatpush1.xpose.msra.mxu0 0.0
    %1422 = vmatprep.subr.mxu0 0.0
    %1423 = vmatpush1.xpose.msra.mxu0 0.0
    %1424 = vmatprep.subr.mxu0 0.0
    %1425 = vmatpush1.xpose.msra.mxu0 0.0
    %1426 = vmatprep.subr.mxu0 0.0
    %1427 = vmatpush1.xpose.msra.mxu0 0.0
    %1428 = vmatprep.subr.mxu0 0.0
    %1429 = vmatpush1.xpose.msra.mxu0 0.0
    %1430 = vmatprep.subr.mxu0 0.0
    %1431 = vmatpush1.xpose.msra.mxu0 0.0
    %1432 = vmatprep.subr.mxu0 0.0
    %1433 = vmatpush1.xpose.msra.mxu0 0.0
    %1434 = vmatprep.subr.mxu0 0.0
    %1435 = vmatpush1.xpose.msra.mxu0 0.0
    %1436 = vmatprep.subr.mxu0 0.0
    %1437 = vmatpush1.xpose.msra.mxu0 0.0
    %1438 = vmatprep.subr.mxu0 0.0
    %1439 = vmatpush1.xpose.msra.mxu0 0.0
    %1440 = vmatprep.subr.mxu0 0.0
    %1441 = vmatpush1.xpose.msra.mxu0 0.0
    %1442 = vmatprep.subr.mxu0 0.0
    %1443 = vmatpush1.xpose.msra.mxu0 0.0
    %1444 = vmatprep.subr.mxu0 0.0
    %1445 = vmatpush1.xpose.msra.mxu0 0.0
    %1446 = vmatprep.subr.mxu0 0.0
    %1447 = vmatpush1.xpose.msra.mxu0 0.0
    %1448 = vmatprep.subr.mxu0 0.0
    %1449 = vmatpush1.xpose.msra.mxu0 0.0
    %1450 = vmatprep.subr.mxu0 0.0
    %1451 = vmatpush1.xpose.msra.mxu0 0.0
    %1452 = vmatprep.mubr.f32.mxu0 0.0
    %1453 = vmatmul.mubr.f32.gmra.mrb[0].mxu0 %v1384
    %v1454 = vpop.f32.mrb[0].mxu0
    %v1455 = vadd.f32 0.0, %v1454
    %v1456 = vpop.f32.mrb[0].mxu0
    %1457 = vdwg.mxu0
    %v1458 = vsel %vm378, %v1455, -inf
    %1459 = vmax.xlane.f32.xlu0 %v1458
    %v1460 = vpop.xlane.xlu0 %1459
    %v1461 = vsub.f32 %v1455, %v1460
    %v1462 = vmul.f32 %v1461, 1.442695
    %v1463 = vpow.pop %v1462
    %v1464 = vsel %vm378, %v1463, 0.0
    %1465 = vadd.xlane.f32.xlu0 %v1464
    %v1466 = vpop.xlane.xlu0 %1465
    %v1467 = vrcp.pop %v1466
    %v1468 = vmul.f32 %v1463, %v1467
    %1469 = vrot.lane.b32.xlu0 %v372, 48
    %v1470 = vpop.permute.xlu0 %1469
    %v1473 = vsel %vm378, %v1468, 0
    %1475 = vmatprep.subr.mxu0 0.0
    %1476 = vmatpush1.msra.mxu0 %v1470
    %1477 = vmatprep.subr.mxu0 0.0
    %1478 = vmatpush1.msra.mxu0 0.0
    %1479 = vmatprep.subr.mxu0 0.0
    %1480 = vmatpush1.msra.mxu0 0.0
    %1481 = vmatprep.subr.mxu0 0.0
    %1482 = vmatpush1.msra.mxu0 0.0
    %1483 = vmatprep.subr.mxu0 0.0
    %1484 = vmatpush1.msra.mxu0 0.0
    %1485 = vmatprep.subr.mxu0 0.0
    %1486 = vmatpush1.msra.mxu0 0.0
    %1487 = vmatprep.subr.mxu0 0.0
    %1488 = vmatpush1.msra.mxu0 0.0
    %1489 = vmatprep.subr.mxu0 0.0
    %1490 = vmatpush1.msra.mxu0 0.0
    %1491 = vmatprep.subr.mxu0 0.0
    %1492 = vmatpush1.msra.mxu0 0.0
    %1493 = vmatprep.subr.mxu0 0.0
    %1494 = vmatpush1.msra.mxu0 0.0
    %1495 = vmatprep.subr.mxu0 0.0
    %1496 = vmatpush1.msra.mxu0 0.0
    %1497 = vmatprep.subr.mxu0 0.0
    %1498 = vmatpush1.msra.mxu0 0.0
    %1499 = vmatprep.subr.mxu0 0.0
    %1500 = vmatpush1.msra.mxu0 0.0
    %1501 = vmatprep.subr.mxu0 0.0
    %1502 = vmatpush1.msra.mxu0 0.0
    %1503 = vmatprep.subr.mxu0 0.0
    %1504 = vmatpush1.msra.mxu0 0.0
    %1505 = vmatprep.subr.mxu0 0.0
    %1506 = vmatpush1.msra.mxu0 0.0
    %1507 = vmatprep.subr.mxu0 0.0
    %1508 = vmatpush1.msra.mxu0 0.0
    %1509 = vmatprep.subr.mxu0 0.0
    %1510 = vmatpush1.msra.mxu0 0.0
    %1511 = vmatprep.subr.mxu0 0.0
    %1512 = vmatpush1.msra.mxu0 0.0
    %1513 = vmatprep.subr.mxu0 0.0
    %1514 = vmatpush1.msra.mxu0 0.0
    %1515 = vmatprep.subr.mxu0 0.0
    %1516 = vmatpush1.msra.mxu0 0.0
    %1517 = vmatprep.subr.mxu0 0.0
    %1518 = vmatpush1.msra.mxu0 0.0
    %1519 = vmatprep.subr.mxu0 0.0
    %1520 = vmatpush1.msra.mxu0 0.0
    %1521 = vmatprep.subr.mxu0 0.0
    %1522 = vmatpush1.msra.mxu0 0.0
    %1523 = vmatprep.subr.mxu0 0.0
    %1524 = vmatpush1.msra.mxu0 0.0
    %1525 = vmatprep.subr.mxu0 0.0
    %1526 = vmatpush1.msra.mxu0 0.0
    %1527 = vmatprep.subr.mxu0 0.0
    %1528 = vmatpush1.msra.mxu0 0.0
    %1529 = vmatprep.subr.mxu0 0.0
    %1530 = vmatpush1.msra.mxu0 0.0
    %1531 = vmatprep.subr.mxu0 0.0
    %1532 = vmatpush1.msra.mxu0 0.0
    %1533 = vmatprep.subr.mxu0 0.0
    %1534 = vmatpush1.msra.mxu0 0.0
    %1535 = vmatprep.subr.mxu0 0.0
    %1536 = vmatpush1.msra.mxu0 0.0
    %1537 = vmatprep.subr.mxu0 0.0
    %1538 = vmatpush1.msra.mxu0 0.0
    %1539 = vmatprep.mubr.f32.mxu0 0.0
    %1540 = vmatmul.mubr.f32.gmra.mrb[0].mxu0 %v1473
    %v1541 = vpop.f32.mrb[0].mxu0
    %v1542 = vadd.f32 0.0, %v1541
    %v1543 = vpop.f32.mrb[0].mxu0
    %1544 = vdwg.mxu0
    %1545 = vrot.lane.b32.xlu0 %v372, 104
    %v1546 = vpop.permute.xlu0 %1545
    %1547 = vrot.lane.b32.xlu0 %v372, 72
    %v1548 = vpop.permute.xlu0 %1547
    %v1549 = vsel %vm378, %v1546, 0
    %v1551 = vsel %vm378, %v1548, 0
    %1553 = vmatprep.subr.mxu0 0.0
    %1554 = vmatpush1.xpose.msra.mxu0 %v1551
    %1555 = vmatprep.subr.mxu0 0.0
    %1556 = vmatpush1.xpose.msra.mxu0 0.0
    %1557 = vmatprep.subr.mxu0 0.0
    %1558 = vmatpush1.xpose.msra.mxu0 0.0
    %1559 = vmatprep.subr.mxu0 0.0
    %1560 = vmatpush1.xpose.msra.mxu0 0.0
    %1561 = vmatprep.subr.mxu0 0.0
    %1562 = vmatpush1.xpose.msra.mxu0 0.0
    %1563 = vmatprep.subr.mxu0 0.0
    %1564 = vmatpush1.xpose.msra.mxu0 0.0
    %1565 = vmatprep.subr.mxu0 0.0
    %1566 = vmatpush1.xpose.msra.mxu0 0.0
    %1567 = vmatprep.subr.mxu0 0.0
    %1568 = vmatpush1.xpose.msra.mxu0 0.0
    %1569 = vmatprep.subr.mxu0 0.0
    %1570 = vmatpush1.xpose.msra.mxu0 0.0
    %1571 = vmatprep.subr.mxu0 0.0
    %1572 = vmatpush1.xpose.msra.mxu0 0.0
    %1573 = vmatprep.subr.mxu0 0.0
    %1574 = vmatpush1.xpose.msra.mxu0 0.0
    %1575 = vmatprep.subr.mxu0 0.0
    %1576 = vmatpush1.xpose.msra.mxu0 0.0
    %1577 = vmatprep.subr.mxu0 0.0
    %1578 = vmatpush1.xpose.msra.mxu0 0.0
    %1579 = vmatprep.subr.mxu0 0.0
    %1580 = vmatpush1.xpose.msra.mxu0 0.0
    %1581 = vmatprep.subr.mxu0 0.0
    %1582 = vmatpush1.xpose.msra.mxu0 0.0
    %1583 = vmatprep.subr.mxu0 0.0
    %1584 = vmatpush1.xpose.msra.mxu0 0.0
    %1585 = vmatprep.subr.mxu0 0.0
    %1586 = vmatpush1.xpose.msra.mxu0 0.0
    %1587 = vmatprep.subr.mxu0 0.0
    %1588 = vmatpush1.xpose.msra.mxu0 0.0
    %1589 = vmatprep.subr.mxu0 0.0
    %1590 = vmatpush1.xpose.msra.mxu0 0.0
    %1591 = vmatprep.subr.mxu0 0.0
    %1592 = vmatpush1.xpose.msra.mxu0 0.0
    %1593 = vmatprep.subr.mxu0 0.0
    %1594 = vmatpush1.xpose.msra.mxu0 0.0
    %1595 = vmatprep.subr.mxu0 0.0
    %1596 = vmatpush1.xpose.msra.mxu0 0.0
    %1597 = vmatprep.subr.mxu0 0.0
    %1598 = vmatpush1.xpose.msra.mxu0 0.0
    %1599 = vmatprep.subr.mxu0 0.0
    %1600 = vmatpush1.xpose.msra.mxu0 0.0
    %1601 = vmatprep.subr.mxu0 0.0
    %1602 = vmatpush1.xpose.msra.mxu0 0.0
    %1603 = vmatprep.subr.mxu0 0.0
    %1604 = vmatpush1.xpose.msra.mxu0 0.0
    %1605 = vmatprep.subr.mxu0 0.0
    %1606 = vmatpush1.xpose.msra.mxu0 0.0
    %1607 = vmatprep.subr.mxu0 0.0
    %1608 = vmatpush1.xpose.msra.mxu0 0.0
    %1609 = vmatprep.subr.mxu0 0.0
    %1610 = vmatpush1.xpose.msra.mxu0 0.0
    %1611 = vmatprep.subr.mxu0 0.0
    %1612 = vmatpush1.xpose.msra.mxu0 0.0
    %1613 = vmatprep.subr.mxu0 0.0
    %1614 = vmatpush1.xpose.msra.mxu0 0.0
    %1615 = vmatprep.subr.mxu0 0.0
    %1616 = vmatpush1.xpose.msra.mxu0 0.0
    %1617 = vmatprep.mubr.f32.mxu0 0.0
    %1618 = vmatmul.mubr.f32.gmra.mrb[0].mxu0 %v1549
    %v1619 = vpop.f32.mrb[0].mxu0
    %v1620 = vadd.f32 0.0, %v1619
    %v1621 = vpop.f32.mrb[0].mxu0
    %1622 = vdwg.mxu0
    %v1623 = vsel %vm378, %v1620, -inf
    %1624 = vmax.xlane.f32.xlu0 %v1623
    %v1625 = vpop.xlane.xlu0 %1624
    %v1626 = vsub.f32 %v1620, %v1625
    %v1627 = vmul.f32 %v1626, 1.442695
    %v1628 = vpow.pop %v1627
    %v1629 = vsel %vm378, %v1628, 0.0
    %1630 = vadd.xlane.f32.xlu0 %v1629
    %v1631 = vpop.xlane.xlu0 %1630
    %v1632 = vrcp.pop %v1631
    %v1633 = vmul.f32 %v1628, %v1632
    %1634 = vrot.lane.b32.xlu0 %v372, 40
    %v1635 = vpop.permute.xlu0 %1634
    %v1638 = vsel %vm378, %v1633, 0
    %1640 = vmatprep.subr.mxu0 0.0
    %1641 = vmatpush1.msra.mxu0 %v1635
    %1642 = vmatprep.subr.mxu0 0.0
    %1643 = vmatpush1.msra.mxu0 0.0
    %1644 = vmatprep.subr.mxu0 0.0
    %1645 = vmatpush1.msra.mxu0 0.0
    %1646 = vmatprep.subr.mxu0 0.0
    %1647 = vmatpush1.msra.mxu0 0.0
    %1648 = vmatprep.subr.mxu0 0.0
    %1649 = vmatpush1.msra.mxu0 0.0
    %1650 = vmatprep.subr.mxu0 0.0
    %1651 = vmatpush1.msra.mxu0 0.0
    %1652 = vmatprep.subr.mxu0 0.0
    %1653 = vmatpush1.msra.mxu0 0.0
    %1654 = vmatprep.subr.mxu0 0.0
    %1655 = vmatpush1.msra.mxu0 0.0
    %1656 = vmatprep.subr.mxu0 0.0
    %1657 = vmatpush1.msra.mxu0 0.0
    %1658 = vmatprep.subr.mxu0 0.0
    %1659 = vmatpush1.msra.mxu0 0.0
    %1660 = vmatprep.subr.mxu0 0.0
    %1661 = vmatpush1.msra.mxu0 0.0
    %1662 = vmatprep.subr.mxu0 0.0
    %1663 = vmatpush1.msra.mxu0 0.0
    %1664 = vmatprep.subr.mxu0 0.0
    %1665 = vmatpush1.msra.mxu0 0.0
    %1666 = vmatprep.subr.mxu0 0.0
    %1667 = vmatpush1.msra.mxu0 0.0
    %1668 = vmatprep.subr.mxu0 0.0
    %1669 = vmatpush1.msra.mxu0 0.0
    %1670 = vmatprep.subr.mxu0 0.0
    %1671 = vmatpush1.msra.mxu0 0.0
    %1672 = vmatprep.subr.mxu0 0.0
    %1673 = vmatpush1.msra.mxu0 0.0
    %1674 = vmatprep.subr.mxu0 0.0
    %1675 = vmatpush1.msra.mxu0 0.0
    %1676 = vmatprep.subr.mxu0 0.0
    %1677 = vmatpush1.msra.mxu0 0.0
    %1678 = vmatprep.subr.mxu0 0.0
    %1679 = vmatpush1.msra.mxu0 0.0
    %1680 = vmatprep.subr.mxu0 0.0
    %1681 = vmatpush1.msra.mxu0 0.0
    %1682 = vmatprep.subr.mxu0 0.0
    %1683 = vmatpush1.msra.mxu0 0.0
    %1684 = vmatprep.subr.mxu0 0.0
    %1685 = vmatpush1.msra.mxu0 0.0
    %1686 = vmatprep.subr.mxu0 0.0
    %1687 = vmatpush1.msra.mxu0 0.0
    %1688 = vmatprep.subr.mxu0 0.0
    %1689 = vmatpush1.msra.mxu0 0.0
    %1690 = vmatprep.subr.mxu0 0.0
    %1691 = vmatpush1.msra.mxu0 0.0
    %1692 = vmatprep.subr.mxu0 0.0
    %1693 = vmatpush1.msra.mxu0 0.0
    %1694 = vmatprep.subr.mxu0 0.0
    %1695 = vmatpush1.msra.mxu0 0.0
    %1696 = vmatprep.subr.mxu0 0.0
    %1697 = vmatpush1.msra.mxu0 0.0
    %1698 = vmatprep.subr.mxu0 0.0
    %1699 = vmatpush1.msra.mxu0 0.0
    %1700 = vmatprep.subr.mxu0 0.0
    %1701 = vmatpush1.msra.mxu0 0.0
    %1702 = vmatprep.subr.mxu0 0.0
    %1703 = vmatpush1.msra.mxu0 0.0
    %1704 = vmatprep.mubr.f32.mxu0 0.0
    %1705 = vmatmul.mubr.f32.gmra.mrb[0].mxu0 %v1638
    %v1706 = vpop.f32.mrb[0].mxu0
    %v1707 = vadd.f32 0.0, %v1706
    %v1708 = vpop.f32.mrb[0].mxu0
    %1709 = vdwg.mxu0
    %1711 = vrot.lane.b32.xlu0 %v1377, 8
    %v1712 = vpop.permute.xlu0 %1711
    %1715 = vrot.lane.b32.xlu0 %v1542, 16
    %v1716 = vpop.permute.xlu0 %1715
    %1719 = vrot.lane.b32.xlu0 %v1707, 24
    %v1720 = vpop.permute.xlu0 %1719
    %v1722 = vsel %vm378, %v1212, %v1712
    %v1723 = vsel %vm111, %v1722, %v1716
    %v1724 = vsel %vm1049, %v1723, %v1720
    %v1725 = vld [vmem:[%s6] sm:$0xff]
    %v1726 = vld [vmem:[%s6 + $0x8] sm:$0xff]
    %v1727 = vld [vmem:[%s6 + $0x10] sm:$0xff]
    %v1728 = vld [vmem:[%s6 + $0x18] sm:$0xff]
    %v1729 = vlaneseq
    %v1730 = vshrl.u32 %v1729, 7
    %v1731 = vsub.s32 1, %v1730
    %v1732 = vrot.slane %v285, %v1731
    %v1734 = vsel %vm203, %v1050, 0
    %v1737 = vsel %vm203, %v1724, 0
    %1739 = vmatprep.subr.mxu0 0.0
    %1740 = vmatpush1.msra.mxu0 %v1725
    %1741 = vmatprep.subr.mxu0 0.0
    %1742 = vmatpush1.msra.mxu0 %v1726
    %1743 = vmatprep.subr.mxu0 0.0
    %1744 = vmatpush1.msra.mxu0 %v1727
    %1745 = vmatprep.subr.mxu0 0.0
    %1746 = vmatpush1.msra.mxu0 %v1728
    %1747 = vmatprep.subr.mxu0 0.0
    %1748 = vmatpush1.msra.mxu0 0.0
    %1749 = vmatprep.subr.mxu0 0.0
    %1750 = vmatpush1.msra.mxu0 0.0
    %1751 = vmatprep.subr.mxu0 0.0
    %1752 = vmatpush1.msra.mxu0 0.0
    %1753 = vmatprep.subr.mxu0 0.0
    %1754 = vmatpush1.msra.mxu0 0.0
    %1755 = vmatprep.subr.mxu0 0.0
    %1756 = vmatpush1.msra.mxu0 0.0
    %1757 = vmatprep.subr.mxu0 0.0
    %1758 = vmatpush1.msra.mxu0 0.0
    %1759 = vmatprep.subr.mxu0 0.0
    %1760 = vmatpush1.msra.mxu0 0.0
    %1761 = vmatprep.subr.mxu0 0.0
    %1762 = vmatpush1.msra.mxu0 0.0
    %1763 = vmatprep.subr.mxu0 0.0
    %1764 = vmatpush1.msra.mxu0 0.0
    %1765 = vmatprep.subr.mxu0 0.0
    %1766 = vmatpush1.msra.mxu0 0.0
    %1767 = vmatprep.subr.mxu0 0.0
    %1768 = vmatpush1.msra.mxu0 0.0
    %1769 = vmatprep.subr.mxu0 0.0
    %1770 = vmatpush1.msra.mxu0 0.0
    %1771 = vmatprep.subr.mxu0 0.0
    %1772 = vmatpush1.msra.mxu0 0.0
    %1773 = vmatprep.subr.mxu0 0.0
    %1774 = vmatpush1.msra.mxu0 0.0
    %1775 = vmatprep.subr.mxu0 0.0
    %1776 = vmatpush1.msra.mxu0 0.0
    %1777 = vmatprep.subr.mxu0 0.0
    %1778 = vmatpush1.msra.mxu0 0.0
    %1779 = vmatprep.subr.mxu0 0.0
    %1780 = vmatpush1.msra.mxu0 0.0
    %1781 = vmatprep.subr.mxu0 0.0
    %1782 = vmatpush1.msra.mxu0 0.0
    %1783 = vmatprep.subr.mxu0 0.0
    %1784 = vmatpush1.msra.mxu0 0.0
    %1785 = vmatprep.subr.mxu0 0.0
    %1786 = vmatpush1.msra.mxu0 0.0
    %1787 = vmatprep.subr.mxu0 0.0
    %1788 = vmatpush1.msra.mxu0 0.0
    %1789 = vmatprep.subr.mxu0 0.0
    %1790 = vmatpush1.msra.mxu0 0.0
    %1791 = vmatprep.subr.mxu0 0.0
    %1792 = vmatpush1.msra.mxu0 0.0
    %1793 = vmatprep.subr.mxu0 0.0
    %1794 = vmatpush1.msra.mxu0 0.0
    %1795 = vmatprep.subr.mxu0 0.0
    %1796 = vmatpush1.msra.mxu0 0.0
    %1797 = vmatprep.subr.mxu0 0.0
    %1798 = vmatpush1.msra.mxu0 0.0
    %1799 = vmatprep.subr.mxu0 0.0
    %1800 = vmatpush1.msra.mxu0 0.0
    %1801 = vmatprep.subr.mxu0 0.0
    %1802 = vmatpush1.msra.mxu0 0.0
    %1803 = vmatprep.mubr.f32.mxu0 0.0
    %1804 = vmatmul.mubr.f32.gmra.mrb[0].mxu0 %v1734
    %v1805 = vpop.f32.mrb[0].mxu0
    %v1806 = vadd.f32 %v1732, %v1805
    %v1807 = vpop.f32.mrb[0].mxu0
    %1808 = vmatprep.mubr.f32.mxu0 0.0
    %1809 = vmatmul.mubr.f32.gmra.mrb[0].mxu0 %v1737
    %v1810 = vpop.f32.mrb[0].mxu0
    %v1811 = vadd.f32 %v1732, %v1810
    %v1812 = vpop.f32.mrb[0].mxu0
    %1813 = vdwg.mxu0
    %v1814 = vadd.f32 %v1806, %v277
    %v1815 = vadd.f32 %v1811, %v282
    %v1816 = vsel %vm203, %v1814, 0.0
    %1817 = vadd.xlane.f32.xlu0 %v1816
    %v1818 = vpop.xlane.xlu0 %1817
    %v1819 = vsel %vm203, %v1815, 0.0
    %1820 = vadd.xlane.f32.xlu0 %v1819
    %v1821 = vpop.xlane.xlu0 %1820
    %v1822 = vrcp.pop 32.0
    %v1823 = vmul.f32 %v1818, %v1822
    %v1824 = vmul.f32 %v1821, %v1822
    %v1825 = vmul.f32 %v1814, %v1814
    %v1826 = vmul.f32 %v1815, %v1815
    %v1827 = vsel %vm203, %v1825, 0.0
    %1828 = vadd.xlane.f32.xlu0 %v1827
    %v1829 = vpop.xlane.xlu0 %1828
    %v1830 = vsel %vm203, %v1826, 0.0
    %1831 = vadd.xlane.f32.xlu0 %v1830
    %v1832 = vpop.xlane.xlu0 %1831
    %v1833 = vmul.f32 %v1829, %v1822
    %v1834 = vmul.f32 %v1832, %v1822
    %v1835 = vmul.f32 %v1823, %v1823
    %v1836 = vmul.f32 %v1824, %v1824
    %v1837 = vsub.f32 %v1833, %v1835
    %v1838 = vsub.f32 %v1834, %v1836
    %v1839 = vsub.f32 %v1814, %v1823
    %v1840 = vsub.f32 %v1815, %v1824
    %v1841 = vadd.f32 %v1837, 1e-05
    %v1842 = vadd.f32 %v1838, 1e-05
    %v1843 = vrsqrt.pop %v1841
    %v1844 = vrsqrt.pop %v1842
    %v1845 = vmul.f32 %v1839, %v1843
    %v1846 = vmul.f32 %v1840, %v1844
    %v1847 = vlaneseq
    %v1848 = vshrl.u32 %v1847, 7
    %v1849 = vsub.s32 2, %v1848
    %v1850 = vrot.slane %v285, %v1849
    %v1851 = vmul.f32 %v1845, %v1850
    %v1852 = vmul.f32 %v1846, %v1850
    %v1853 = vlaneseq
    %v1854 = vshrl.u32 %v1853, 7
    %v1855 = vsub.s32 3, %v1854
    %v1856 = vrot.slane %v285, %v1855
    %v1857 = vadd.f32 %v1851, %v1856
    %v1858 = vadd.f32 %v1852, %v1856
    %v1859 = vld [vmem:[%s7] sm:$0xff]
    %v1860 = vld [vmem:[%s7 + $0x8] sm:$0xff]
    %v1861 = vld [vmem:[%s7 + $0x10] sm:$0xff]
    %v1862 = vld [vmem:[%s7 + $0x18] sm:$0xff]
    %v1863 = vlaneseq
    %v1864 = vshrl.u32 %v1863, 7
    %v1865 = vsub.s32 4, %v1864
    %v1866 = vrot.slane %v285, %v1865
    %v1868 = vsel %vm203, %v1857, 0
    %v1871 = vsel %vm203, %v1858, 0
    %1873 = vmatprep.subr.mxu0 0.0
    %1874 = vmatpush1.msra.mxu0 %v1859
    %1875 = vmatprep.subr.mxu0 0.0
    %1876 = vmatpush1.msra.mxu0 %v1860
    %1877 = vmatprep.subr.mxu0 0.0
    %1878 = vmatpush1.msra.mxu0 %v1861
    %1879 = vmatprep.subr.mxu0 0.0
    %1880 = vmatpush1.msra.mxu0 %v1862
    %1881 = vmatprep.subr.mxu0 0.0
    %1882 = vmatpush1.msra.mxu0 0.0
    %1883 = vmatprep.subr.mxu0 0.0
    %1884 = vmatpush1.msra.mxu0 0.0
    %1885 = vmatprep.subr.mxu0 0.0
    %1886 = vmatpush1.msra.mxu0 0.0
    %1887 = vmatprep.subr.mxu0 0.0
    %1888 = vmatpush1.msra.mxu0 0.0
    %1889 = vmatprep.subr.mxu0 0.0
    %1890 = vmatpush1.msra.mxu0 0.0
    %1891 = vmatprep.subr.mxu0 0.0
    %1892 = vmatpush1.msra.mxu0 0.0
    %1893 = vmatprep.subr.mxu0 0.0
    %1894 = vmatpush1.msra.mxu0 0.0
    %1895 = vmatprep.subr.mxu0 0.0
    %1896 = vmatpush1.msra.mxu0 0.0
    %1897 = vmatprep.subr.mxu0 0.0
    %1898 = vmatpush1.msra.mxu0 0.0
    %1899 = vmatprep.subr.mxu0 0.0
    %1900 = vmatpush1.msra.mxu0 0.0
    %1901 = vmatprep.subr.mxu0 0.0
    %1902 = vmatpush1.msra.mxu0 0.0
    %1903 = vmatprep.subr.mxu0 0.0
    %1904 = vmatpush1.msra.mxu0 0.0
    %1905 = vmatprep.subr.mxu0 0.0
    %1906 = vmatpush1.msra.mxu0 0.0
    %1907 = vmatprep.subr.mxu0 0.0
    %1908 = vmatpush1.msra.mxu0 0.0
    %1909 = vmatprep.subr.mxu0 0.0
    %1910 = vmatpush1.msra.mxu0 0.0
    %1911 = vmatprep.subr.mxu0 0.0
    %1912 = vmatpush1.msra.mxu0 0.0
    %1913 = vmatprep.subr.mxu0 0.0
    %1914 = vmatpush1.msra.mxu0 0.0
    %1915 = vmatprep.subr.mxu0 0.0
    %1916 = vmatpush1.msra.mxu0 0.0
    %1917 = vmatprep.subr.mxu0 0.0
    %1918 = vmatpush1.msra.mxu0 0.0
    %1919 = vmatprep.subr.mxu0 0.0
    %1920 = vmatpush1.msra.mxu0 0.0
    %1921 = vmatprep.subr.mxu0 0.0
    %1922 = vmatpush1.msra.mxu0 0.0
    %1923 = vmatprep.subr.mxu0 0.0
    %1924 = vmatpush1.msra.mxu0 0.0
    %1925 = vmatprep.subr.mxu0 0.0
    %1926 = vmatpush1.msra.mxu0 0.0
    %1927 = vmatprep.subr.mxu0 0.0
    %1928 = vmatpush1.msra.mxu0 0.0
    %1929 = vmatprep.subr.mxu0 0.0
    %1930 = vmatpush1.msra.mxu0 0.0
    %1931 = vmatprep.subr.mxu0 0.0
    %1932 = vmatpush1.msra.mxu0 0.0
    %1933 = vmatprep.subr.mxu0 0.0
    %1934 = vmatpush1.msra.mxu0 0.0
    %1935 = vmatprep.subr.mxu0 0.0
    %1936 = vmatpush1.msra.mxu0 0.0
    %1937 = vmatprep.mubr.f32.mxu0 0.0
    %1938 = vmatmul.mubr.f32.gmra.mrb[0].mxu0 %v1868
    %v1939 = vpop.f32.mrb[0].mxu0
    %v1940 = vadd.f32 %v1866, %v1939
    %v1941 = vpop.f32.mrb[0].mxu0
    %1942 = vmatprep.mubr.f32.mxu0 0.0
    %1943 = vmatmul.mubr.f32.gmra.mrb[0].mxu0 %v1871
    %v1944 = vpop.f32.mrb[0].mxu0
    %v1945 = vadd.f32 %v1866, %v1944
    %v1946 = vpop.f32.mrb[0].mxu0
    %1947 = vdwg.mxu0
    %v1948 = vmax.f32 %v1940, 0.0
    %v1949 = vmax.f32 %v1945, 0.0
    %v1950 = vld [vmem:[%s8] sm:$0xff]
    %v1951 = vld [vmem:[%s8 + $0x8] sm:$0xff]
    %v1952 = vld [vmem:[%s8 + $0x10] sm:$0xff]
    %v1953 = vld [vmem:[%s8 + $0x18] sm:$0xff]
    %v1954 = vld [vmem:[%s8 + $0x20] sm:$0xff]
    %v1955 = vld [vmem:[%s8 + $0x28] sm:$0xff]
    %v1956 = vld [vmem:[%s8 + $0x30] sm:$0xff]
    %v1957 = vld [vmem:[%s8 + $0x38] sm:$0xff]
    %v1958 = vlaneseq
    %v1959 = vshrl.u32 %v1958, 7
    %v1960 = vsub.s32 5, %v1959
    %v1961 = vrot.slane %v285, %v1960
    %vm1962 = vcmask 523264
    %v1964 = vsel %vm1962, %v1948, 0
    %v1967 = vsel %vm1962, %v1949, 0
    %1969 = vmatprep.subr.mxu0 0.0
    %1970 = vmatpush1.msra.mxu0 %v1950
    %1971 = vmatprep.subr.mxu0 0.0
    %1972 = vmatpush1.msra.mxu0 %v1951
    %1973 = vmatprep.subr.mxu0 0.0
    %1974 = vmatpush1.msra.mxu0 %v1952
    %1975 = vmatprep.subr.mxu0 0.0
    %1976 = vmatpush1.msra.mxu0 %v1953
    %1977 = vmatprep.subr.mxu0 0.0
    %1978 = vmatpush1.msra.mxu0 %v1954
    %1979 = vmatprep.subr.mxu0 0.0
    %1980 = vmatpush1.msra.mxu0 %v1955
    %1981 = vmatprep.subr.mxu0 0.0
    %1982 = vmatpush1.msra.mxu0 %v1956
    %1983 = vmatprep.subr.mxu0 0.0
    %1984 = vmatpush1.msra.mxu0 %v1957
    %1985 = vmatprep.subr.mxu0 0.0
    %1986 = vmatpush1.msra.mxu0 0.0
    %1987 = vmatprep.subr.mxu0 0.0
    %1988 = vmatpush1.msra.mxu0 0.0
    %1989 = vmatprep.subr.mxu0 0.0
    %1990 = vmatpush1.msra.mxu0 0.0
    %1991 = vmatprep.subr.mxu0 0.0
    %1992 = vmatpush1.msra.mxu0 0.0
    %1993 = vmatprep.subr.mxu0 0.0
    %1994 = vmatpush1.msra.mxu0 0.0
    %1995 = vmatprep.subr.mxu0 0.0
    %1996 = vmatpush1.msra.mxu0 0.0
    %1997 = vmatprep.subr.mxu0 0.0
    %1998 = vmatpush1.msra.mxu0 0.0
    %1999 = vmatprep.subr.mxu0 0.0
    %2000 = vmatpush1.msra.mxu0 0.0
    %2001 = vmatprep.subr.mxu0 0.0
    %2002 = vmatpush1.msra.mxu0 0.0
    %2003 = vmatprep.subr.mxu0 0.0
    %2004 = vmatpush1.msra.mxu0 0.0
    %2005 = vmatprep.subr.mxu0 0.0
    %2006 = vmatpush1.msra.mxu0 0.0
    %2007 = vmatprep.subr.mxu0 0.0
    %2008 = vmatpush1.msra.mxu0 0.0
    %2009 = vmatprep.subr.mxu0 0.0
    %2010 = vmatpush1.msra.mxu0 0.0
    %2011 = vmatprep.subr.mxu0 0.0
    %2012 = vmatpush1.msra.mxu0 0.0
    %2013 = vmatprep.subr.mxu0 0.0
    %2014 = vmatpush1.msra.mxu0 0.0
    %2015 = vmatprep.subr.mxu0 0.0
    %2016 = vmatpush1.msra.mxu0 0.0
    %2017 = vmatprep.subr.mxu0 0.0
    %2018 = vmatpush1.msra.mxu0 0.0
    %2019 = vmatprep.subr.mxu0 0.0
    %2020 = vmatpush1.msra.mxu0 0.0
    %2021 = vmatprep.subr.mxu0 0.0
    %2022 = vmatpush1.msra.mxu0 0.0
    %2023 = vmatprep.subr.mxu0 0.0
    %2024 = vmatpush1.msra.mxu0 0.0
    %2025 = vmatprep.subr.mxu0 0.0
    %2026 = vmatpush1.msra.mxu0 0.0
    %2027 = vmatprep.subr.mxu0 0.0
    %2028 = vmatpush1.msra.mxu0 0.0
    %2029 = vmatprep.subr.mxu0 0.0
    %2030 = vmatpush1.msra.mxu0 0.0
    %2031 = vmatprep.subr.mxu0 0.0
    %2032 = vmatpush1.msra.mxu0 0.0
    %2033 = vmatprep.mubr.f32.mxu0 0.0
    %2034 = vmatmul.mubr.f32.gmra.mrb[0].mxu0 %v1964
    %v2035 = vpop.f32.mrb[0].mxu0
    %v2036 = vadd.f32 %v1961, %v2035
    %v2037 = vpop.f32.mrb[0].mxu0
    %2038 = vmatprep.mubr.f32.mxu0 0.0
    %2039 = vmatmul.mubr.f32.gmra.mrb[0].mxu0 %v1967
    %v2040 = vpop.f32.mrb[0].mxu0
    %v2041 = vadd.f32 %v1961, %v2040
    %v2042 = vpop.f32.mrb[0].mxu0
    %2043 = vdwg.mxu0
    %v2044 = vadd.f32 %v2036, %v1857
    %v2045 = vadd.f32 %v2041, %v1858
    %v2046 = vsel %vm203, %v2044, 0.0
    %2047 = vadd.xlane.f32.xlu0 %v2046
    %v2048 = vpop.xlane.xlu0 %2047
    %v2049 = vsel %vm203, %v2045, 0.0
    %2050 = vadd.xlane.f32.xlu0 %v2049
    %v2051 = vpop.xlane.xlu0 %2050
    %v2052 = vmul.f32 %v2048, %v1822
    %v2053 = vmul.f32 %v2051, %v1822
    %v2054 = vmul.f32 %v2044, %v2044
    %v2055 = vmul.f32 %v2045, %v2045
    %v2056 = vsel %vm203, %v2054, 0.0
    %2057 = vadd.xlane.f32.xlu0 %v2056
    %v2058 = vpop.xlane.xlu0 %2057
    %v2059 = vsel %vm203, %v2055, 0.0
    %2060 = vadd.xlane.f32.xlu0 %v2059
    %v2061 = vpop.xlane.xlu0 %2060
    %v2062 = vmul.f32 %v2058, %v1822
    %v2063 = vmul.f32 %v2061, %v1822
    %v2064 = vmul.f32 %v2052, %v2052
    %v2065 = vmul.f32 %v2053, %v2053
    %v2066 = vsub.f32 %v2062, %v2064
    %v2067 = vsub.f32 %v2063, %v2065
    %v2068 = vsub.f32 %v2044, %v2052
    %v2069 = vsub.f32 %v2045, %v2053
    %v2070 = vadd.f32 %v2066, 1e-05
    %v2071 = vadd.f32 %v2067, 1e-05
    %v2072 = vrsqrt.pop %v2070
    %v2073 = vrsqrt.pop %v2071
    %v2074 = vmul.f32 %v2068, %v2072
    %v2075 = vmul.f32 %v2069, %v2073
    %v2076 = vlaneseq
    %v2077 = vshrl.u32 %v2076, 7
    %v2078 = vsub.s32 6, %v2077
    %v2079 = vrot.slane %v285, %v2078
    %v2080 = vmul.f32 %v2074, %v2079
    %v2081 = vmul.f32 %v2075, %v2079
    %v2082 = vlaneseq
    %v2083 = vshrl.u32 %v2082, 7
    %v2084 = vsub.s32 7, %v2083
    %v2085 = vrot.slane %v285, %v2084
    %v2086 = vadd.f32 %v2080, %v2085
    %v2087 = vadd.f32 %v2081, %v2085
    %s2088 = scalar_lea.vmem %s9, 8
    %v2089 = vld [vmem:[%s2088] sm:$0xff]
    %s2090 = scalar_lea.vmem %s5, 32
    %v2091 = vld [vmem:[%s2090] sm:$0xff]
    %v2092 = vld [vmem:[%s2090 + $0x8] sm:$0xff]
    %v2093 = vld [vmem:[%s2090 + $0x10] sm:$0xff]
    %v2094 = vld [vmem:[%s2090 + $0x18] sm:$0xff]
    %v2095 = vlaneseq
    %v2096 = vshrl.u32 %v2095, 7
    %v2097 = vsub.s32 0, %v2096
    %v2098 = vrot.slane %v2089, %v2097
    %v2100 = vsel %vm203, %v2086, 0
    %v2103 = vsel %vm203, %v2087, 0
    %2105 = vmatprep.subr.mxu0 0.0
    %2106 = vmatpush1.msra.mxu0 %v2091
    %2107 = vmatprep.subr.mxu0 0.0
    %2108 = vmatpush1.msra.mxu0 %v2092
    %2109 = vmatprep.subr.mxu0 0.0
    %2110 = vmatpush1.msra.mxu0 %v2093
    %2111 = vmatprep.subr.mxu0 0.0
    %2112 = vmatpush1.msra.mxu0 %v2094
    %2113 = vmatprep.subr.mxu0 0.0
    %2114 = vmatpush1.msra.mxu0 0.0
    %2115 = vmatprep.subr.mxu0 0.0
    %2116 = vmatpush1.msra.mxu0 0.0
    %2117 = vmatprep.subr.mxu0 0.0
    %2118 = vmatpush1.msra.mxu0 0.0
    %2119 = vmatprep.subr.mxu0 0.0
    %2120 = vmatpush1.msra.mxu0 0.0
    %2121 = vmatprep.subr.mxu0 0.0
    %2122 = vmatpush1.msra.mxu0 0.0
    %2123 = vmatprep.subr.mxu0 0.0
    %2124 = vmatpush1.msra.mxu0 0.0
    %2125 = vmatprep.subr.mxu0 0.0
    %2126 = vmatpush1.msra.mxu0 0.0
    %2127 = vmatprep.subr.mxu0 0.0
    %2128 = vmatpush1.msra.mxu0 0.0
    %2129 = vmatprep.subr.mxu0 0.0
    %2130 = vmatpush1.msra.mxu0 0.0
    %2131 = vmatprep.subr.mxu0 0.0
    %2132 = vmatpush1.msra.mxu0 0.0
    %2133 = vmatprep.subr.mxu0 0.0
    %2134 = vmatpush1.msra.mxu0 0.0
    %2135 = vmatprep.subr.mxu0 0.0
    %2136 = vmatpush1.msra.mxu0 0.0
    %2137 = vmatprep.subr.mxu0 0.0
    %2138 = vmatpush1.msra.mxu0 0.0
    %2139 = vmatprep.subr.mxu0 0.0
    %2140 = vmatpush1.msra.mxu0 0.0
    %2141 = vmatprep.subr.mxu0 0.0
    %2142 = vmatpush1.msra.mxu0 0.0
    %2143 = vmatprep.subr.mxu0 0.0
    %2144 = vmatpush1.msra.mxu0 0.0
    %2145 = vmatprep.subr.mxu0 0.0
    %2146 = vmatpush1.msra.mxu0 0.0
    %2147 = vmatprep.subr.mxu0 0.0
    %2148 = vmatpush1.msra.mxu0 0.0
    %2149 = vmatprep.subr.mxu0 0.0
    %2150 = vmatpush1.msra.mxu0 0.0
    %2151 = vmatprep.subr.mxu0 0.0
    %2152 = vmatpush1.msra.mxu0 0.0
    %2153 = vmatprep.subr.mxu0 0.0
    %2154 = vmatpush1.msra.mxu0 0.0
    %2155 = vmatprep.subr.mxu0 0.0
    %2156 = vmatpush1.msra.mxu0 0.0
    %2157 = vmatprep.subr.mxu0 0.0
    %2158 = vmatpush1.msra.mxu0 0.0
    %2159 = vmatprep.subr.mxu0 0.0
    %2160 = vmatpush1.msra.mxu0 0.0
    %2161 = vmatprep.subr.mxu0 0.0
    %2162 = vmatpush1.msra.mxu0 0.0
    %2163 = vmatprep.subr.mxu0 0.0
    %2164 = vmatpush1.msra.mxu0 0.0
    %2165 = vmatprep.subr.mxu0 0.0
    %2166 = vmatpush1.msra.mxu0 0.0
    %2167 = vmatprep.subr.mxu0 0.0
    %2168 = vmatpush1.msra.mxu0 0.0
    %2169 = vmatprep.mubr.f32.mxu0 0.0
    %2170 = vmatmul.mubr.f32.gmra.mrb[0].mxu0 %v2100
    %v2171 = vpop.f32.mrb[0].mxu0
    %v2172 = vadd.f32 %v2098, %v2171
    %v2173 = vpop.f32.mrb[0].mxu0
    %2174 = vmatprep.mubr.f32.mxu0 0.0
    %2175 = vmatmul.mubr.f32.gmra.mrb[0].mxu0 %v2103
    %v2176 = vpop.f32.mrb[0].mxu0
    %v2177 = vadd.f32 %v2098, %v2176
    %v2178 = vpop.f32.mrb[0].mxu0
    %2179 = vdwg.mxu0
    %2181 = vrot.lane.b32.xlu0 %v2172, 96
    %v2182 = vpop.permute.xlu0 %2181
    %v2183 = vsel %vm378, %v2172, 0
    %v2185 = vsel %vm378, %v2182, 0
    %2187 = vmatprep.subr.mxu0 0.0
    %2188 = vmatpush1.xpose.msra.mxu0 %v2185
    %2189 = vmatprep.subr.mxu0 0.0
    %2190 = vmatpush1.xpose.msra.mxu0 0.0
    %2191 = vmatprep.subr.mxu0 0.0
    %2192 = vmatpush1.xpose.msra.mxu0 0.0
    %2193 = vmatprep.subr.mxu0 0.0
    %2194 = vmatpush1.xpose.msra.mxu0 0.0
    %2195 = vmatprep.subr.mxu0 0.0
    %2196 = vmatpush1.xpose.msra.mxu0 0.0
    %2197 = vmatprep.subr.mxu0 0.0
    %2198 = vmatpush1.xpose.msra.mxu0 0.0
    %2199 = vmatprep.subr.mxu0 0.0
    %2200 = vmatpush1.xpose.msra.mxu0 0.0
    %2201 = vmatprep.subr.mxu0 0.0
    %2202 = vmatpush1.xpose.msra.mxu0 0.0
    %2203 = vmatprep.subr.mxu0 0.0
    %2204 = vmatpush1.xpose.msra.mxu0 0.0
    %2205 = vmatprep.subr.mxu0 0.0
    %2206 = vmatpush1.xpose.msra.mxu0 0.0
    %2207 = vmatprep.subr.mxu0 0.0
    %2208 = vmatpush1.xpose.msra.mxu0 0.0
    %2209 = vmatprep.subr.mxu0 0.0
    %2210 = vmatpush1.xpose.msra.mxu0 0.0
    %2211 = vmatprep.subr.mxu0 0.0
    %2212 = vmatpush1.xpose.msra.mxu0 0.0
    %2213 = vmatprep.subr.mxu0 0.0
    %2214 = vmatpush1.xpose.msra.mxu0 0.0
    %2215 = vmatprep.subr.mxu0 0.0
    %2216 = vmatpush1.xpose.msra.mxu0 0.0
    %2217 = vmatprep.subr.mxu0 0.0
    %2218 = vmatpush1.xpose.msra.mxu0 0.0
    %2219 = vmatprep.subr.mxu0 0.0
    %2220 = vmatpush1.xpose.msra.mxu0 0.0
    %2221 = vmatprep.subr.mxu0 0.0
    %2222 = vmatpush1.xpose.msra.mxu0 0.0
    %2223 = vmatprep.subr.mxu0 0.0
    %2224 = vmatpush1.xpose.msra.mxu0 0.0
    %2225 = vmatprep.subr.mxu0 0.0
    %2226 = vmatpush1.xpose.msra.mxu0 0.0
    %2227 = vmatprep.subr.mxu0 0.0
    %2228 = vmatpush1.xpose.msra.mxu0 0.0
    %2229 = vmatprep.subr.mxu0 0.0
    %2230 = vmatpush1.xpose.msra.mxu0 0.0
    %2231 = vmatprep.subr.mxu0 0.0
    %2232 = vmatpush1.xpose.msra.mxu0 0.0
    %2233 = vmatprep.subr.mxu0 0.0
    %2234 = vmatpush1.xpose.msra.mxu0 0.0
    %2235 = vmatprep.subr.mxu0 0.0
    %2236 = vmatpush1.xpose.msra.mxu0 0.0
    %2237 = vmatprep.subr.mxu0 0.0
    %2238 = vmatpush1.xpose.msra.mxu0 0.0
    %2239 = vmatprep.subr.mxu0 0.0
    %2240 = vmatpush1.xpose.msra.mxu0 0.0
    %2241 = vmatprep.subr.mxu0 0.0
    %2242 = vmatpush1.xpose.msra.mxu0 0.0
    %2243 = vmatprep.subr.mxu0 0.0
    %2244 = vmatpush1.xpose.msra.mxu0 0.0
    %2245 = vmatprep.subr.mxu0 0.0
    %2246 = vmatpush1.xpose.msra.mxu0 0.0
    %2247 = vmatprep.subr.mxu0 0.0
    %2248 = vmatpush1.xpose.msra.mxu0 0.0
    %2249 = vmatprep.subr.mxu0 0.0
    %2250 = vmatpush1.xpose.msra.mxu0 0.0
    %2251 = vmatprep.mubr.f32.mxu0 0.0
    %2252 = vmatmul.mubr.f32.gmra.mrb[0].mxu0 %v2183
    %v2253 = vpop.f32.mrb[0].mxu0
    %v2254 = vadd.f32 0.0, %v2253
    %v2255 = vpop.f32.mrb[0].mxu0
    %2256 = vdwg.mxu0
    %v2257 = vsel %vm378, %v2254, -inf
    %2258 = vmax.xlane.f32.xlu0 %v2257
    %v2259 = vpop.xlane.xlu0 %2258
    %v2260 = vsub.f32 %v2254, %v2259
    %v2261 = vmul.f32 %v2260, 1.442695
    %v2262 = vpow.pop %v2261
    %v2263 = vsel %vm378, %v2262, 0.0
    %2264 = vadd.xlane.f32.xlu0 %v2263
    %v2265 = vpop.xlane.xlu0 %2264
    %v2266 = vrcp.pop %v2265
    %v2267 = vmul.f32 %v2262, %v2266
    %2268 = vrot.lane.b32.xlu0 %v2172, 64
    %v2269 = vpop.permute.xlu0 %2268
    %v2272 = vsel %vm378, %v2267, 0
    %2274 = vmatprep.subr.mxu0 0.0
    %2275 = vmatpush1.msra.mxu0 %v2269
    %2276 = vmatprep.subr.mxu0 0.0
    %2277 = vmatpush1.msra.mxu0 0.0
    %2278 = vmatprep.subr.mxu0 0.0
    %2279 = vmatpush1.msra.mxu0 0.0
    %2280 = vmatprep.subr.mxu0 0.0
    %2281 = vmatpush1.msra.mxu0 0.0
    %2282 = vmatprep.subr.mxu0 0.0
    %2283 = vmatpush1.msra.mxu0 0.0
    %2284 = vmatprep.subr.mxu0 0.0
    %2285 = vmatpush1.msra.mxu0 0.0
    %2286 = vmatprep.subr.mxu0 0.0
    %2287 = vmatpush1.msra.mxu0 0.0
    %2288 = vmatprep.subr.mxu0 0.0
    %2289 = vmatpush1.msra.mxu0 0.0
    %2290 = vmatprep.subr.mxu0 0.0
    %2291 = vmatpush1.msra.mxu0 0.0
    %2292 = vmatprep.subr.mxu0 0.0
    %2293 = vmatpush1.msra.mxu0 0.0
    %2294 = vmatprep.subr.mxu0 0.0
    %2295 = vmatpush1.msra.mxu0 0.0
    %2296 = vmatprep.subr.mxu0 0.0
    %2297 = vmatpush1.msra.mxu0 0.0
    %2298 = vmatprep.subr.mxu0 0.0
    %2299 = vmatpush1.msra.mxu0 0.0
    %2300 = vmatprep.subr.mxu0 0.0
    %2301 = vmatpush1.msra.mxu0 0.0
    %2302 = vmatprep.subr.mxu0 0.0
    %2303 = vmatpush1.msra.mxu0 0.0
    %2304 = vmatprep.subr.mxu0 0.0
    %2305 = vmatpush1.msra.mxu0 0.0
    %2306 = vmatprep.subr.mxu0 0.0
    %2307 = vmatpush1.msra.mxu0 0.0
    %2308 = vmatprep.subr.mxu0 0.0
    %2309 = vmatpush1.msra.mxu0 0.0
    %2310 = vmatprep.subr.mxu0 0.0
    %2311 = vmatpush1.msra.mxu0 0.0
    %2312 = vmatprep.subr.mxu0 0.0
    %2313 = vmatpush1.msra.mxu0 0.0
    %2314 = vmatprep.subr.mxu0 0.0
    %2315 = vmatpush1.msra.mxu0 0.0
    %2316 = vmatprep.subr.mxu0 0.0
    %2317 = vmatpush1.msra.mxu0 0.0
    %2318 = vmatprep.subr.mxu0 0.0
    %2319 = vmatpush1.msra.mxu0 0.0
    %2320 = vmatprep.subr.mxu0 0.0
    %2321 = vmatpush1.msra.mxu0 0.0
    %2322 = vmatprep.subr.mxu0 0.0
    %2323 = vmatpush1.msra.mxu0 0.0
    %2324 = vmatprep.subr.mxu0 0.0
    %2325 = vmatpush1.msra.mxu0 0.0
    %2326 = vmatprep.subr.mxu0 0.0
    %2327 = vmatpush1.msra.mxu0 0.0
    %2328 = vmatprep.subr.mxu0 0.0
    %2329 = vmatpush1.msra.mxu0 0.0
    %2330 = vmatprep.subr.mxu0 0.0
    %2331 = vmatpush1.msra.mxu0 0.0
    %2332 = vmatprep.subr.mxu0 0.0
    %2333 = vmatpush1.msra.mxu0 0.0
    %2334 = vmatprep.subr.mxu0 0.0
    %2335 = vmatpush1.msra.mxu0 0.0
    %2336 = vmatprep.subr.mxu0 0.0
    %2337 = vmatpush1.msra.mxu0 0.0
    %2338 = vmatprep.mubr.f32.mxu0 0.0
    %2339 = vmatmul.mubr.f32.gmra.mrb[0].mxu0 %v2272
    %v2340 = vpop.f32.mrb[0].mxu0
    %v2341 = vadd.f32 0.0, %v2340
    %v2342 = vpop.f32.mrb[0].mxu0
    %2343 = vdwg.mxu0
    %2344 = vrot.lane.b32.xlu0 %v2172, 120
    %v2345 = vpop.permute.xlu0 %2344
    %2346 = vrot.lane.b32.xlu0 %v2172, 88
    %v2347 = vpop.permute.xlu0 %2346
    %v2348 = vsel %vm378, %v2345, 0
    %v2350 = vsel %vm378, %v2347, 0
    %2352 = vmatprep.subr.mxu0 0.0
    %2353 = vmatpush1.xpose.msra.mxu0 %v2350
    %2354 = vmatprep.subr.mxu0 0.0
    %2355 = vmatpush1.xpose.msra.mxu0 0.0
    %2356 = vmatprep.subr.mxu0 0.0
    %2357 = vmatpush1.xpose.msra.mxu0 0.0
    %2358 = vmatprep.subr.mxu0 0.0
    %2359 = vmatpush1.xpose.msra.mxu0 0.0
    %2360 = vmatprep.subr.mxu0 0.0
    %2361 = vmatpush1.xpose.msra.mxu0 0.0
    %2362 = vmatprep.subr.mxu0 0.0
    %2363 = vmatpush1.xpose.msra.mxu0 0.0
    %2364 = vmatprep.subr.mxu0 0.0
    %2365 = vmatpush1.xpose.msra.mxu0 0.0
    %2366 = vmatprep.subr.mxu0 0.0
    %2367 = vmatpush1.xpose.msra.mxu0 0.0
    %2368 = vmatprep.subr.mxu0 0.0
    %2369 = vmatpush1.xpose.msra.mxu0 0.0
    %2370 = vmatprep.subr.mxu0 0.0
    %2371 = vmatpush1.xpose.msra.mxu0 0.0
    %2372 = vmatprep.subr.mxu0 0.0
    %2373 = vmatpush1.xpose.msra.mxu0 0.0
    %2374 = vmatprep.subr.mxu0 0.0
    %2375 = vmatpush1.xpose.msra.mxu0 0.0
    %2376 = vmatprep.subr.mxu0 0.0
    %2377 = vmatpush1.xpose.msra.mxu0 0.0
    %2378 = vmatprep.subr.mxu0 0.0
    %2379 = vmatpush1.xpose.msra.mxu0 0.0
    %2380 = vmatprep.subr.mxu0 0.0
    %2381 = vmatpush1.xpose.msra.mxu0 0.0
    %2382 = vmatprep.subr.mxu0 0.0
    %2383 = vmatpush1.xpose.msra.mxu0 0.0
    %2384 = vmatprep.subr.mxu0 0.0
    %2385 = vmatpush1.xpose.msra.mxu0 0.0
    %2386 = vmatprep.subr.mxu0 0.0
    %2387 = vmatpush1.xpose.msra.mxu0 0.0
    %2388 = vmatprep.subr.mxu0 0.0
    %2389 = vmatpush1.xpose.msra.mxu0 0.0
    %2390 = vmatprep.subr.mxu0 0.0
    %2391 = vmatpush1.xpose.msra.mxu0 0.0
    %2392 = vmatprep.subr.mxu0 0.0
    %2393 = vmatpush1.xpose.msra.mxu0 0.0
    %2394 = vmatprep.subr.mxu0 0.0
    %2395 = vmatpush1.xpose.msra.mxu0 0.0
    %2396 = vmatprep.subr.mxu0 0.0
    %2397 = vmatpush1.xpose.msra.mxu0 0.0
    %2398 = vmatprep.subr.mxu0 0.0
    %2399 = vmatpush1.xpose.msra.mxu0 0.0
    %2400 = vmatprep.subr.mxu0 0.0
    %2401 = vmatpush1.xpose.msra.mxu0 0.0
    %2402 = vmatprep.subr.mxu0 0.0
    %2403 = vmatpush1.xpose.msra.mxu0 0.0
    %2404 = vmatprep.subr.mxu0 0.0
    %2405 = vmatpush1.xpose.msra.mxu0 0.0
    %2406 = vmatprep.subr.mxu0 0.0
    %2407 = vmatpush1.xpose.msra.mxu0 0.0
    %2408 = vmatprep.subr.mxu0 0.0
    %2409 = vmatpush1.xpose.msra.mxu0 0.0
    %2410 = vmatprep.subr.mxu0 0.0
    %2411 = vmatpush1.xpose.msra.mxu0 0.0
    %2412 = vmatprep.subr.mxu0 0.0
    %2413 = vmatpush1.xpose.msra.mxu0 0.0
    %2414 = vmatprep.subr.mxu0 0.0
    %2415 = vmatpush1.xpose.msra.mxu0 0.0
    %2416 = vmatprep.mubr.f32.mxu0 0.0
    %2417 = vmatmul.mubr.f32.gmra.mrb[0].mxu0 %v2348
    %v2418 = vpop.f32.mrb[0].mxu0
    %v2419 = vadd.f32 0.0, %v2418
    %v2420 = vpop.f32.mrb[0].mxu0
    %2421 = vdwg.mxu0
    %v2422 = vsel %vm378, %v2419, -inf
    %2423 = vmax.xlane.f32.xlu0 %v2422
    %v2424 = vpop.xlane.xlu0 %2423
    %v2425 = vsub.f32 %v2419, %v2424
    %v2426 = vmul.f32 %v2425, 1.442695
    %v2427 = vpow.pop %v2426
    %v2428 = vsel %vm378, %v2427, 0.0
    %2429 = vadd.xlane.f32.xlu0 %v2428
    %v2430 = vpop.xlane.xlu0 %2429
    %v2431 = vrcp.pop %v2430
    %v2432 = vmul.f32 %v2427, %v2431
    %2433 = vrot.lane.b32.xlu0 %v2172, 56
    %v2434 = vpop.permute.xlu0 %2433
    %v2437 = vsel %vm378, %v2432, 0
    %2439 = vmatprep.subr.mxu0 0.0
    %2440 = vmatpush1.msra.mxu0 %v2434
    %2441 = vmatprep.subr.mxu0 0.0
    %2442 = vmatpush1.msra.mxu0 0.0
    %2443 = vmatprep.subr.mxu0 0.0
    %2444 = vmatpush1.msra.mxu0 0.0
    %2445 = vmatprep.subr.mxu0 0.0
    %2446 = vmatpush1.msra.mxu0 0.0
    %2447 = vmatprep.subr.mxu0 0.0
    %2448 = vmatpush1.msra.mxu0 0.0
    %2449 = vmatprep.subr.mxu0 0.0
    %2450 = vmatpush1.msra.mxu0 0.0
    %2451 = vmatprep.subr.mxu0 0.0
    %2452 = vmatpush1.msra.mxu0 0.0
    %2453 = vmatprep.subr.mxu0 0.0
    %2454 = vmatpush1.msra.mxu0 0.0
    %2455 = vmatprep.subr.mxu0 0.0
    %2456 = vmatpush1.msra.mxu0 0.0
    %2457 = vmatprep.subr.mxu0 0.0
    %2458 = vmatpush1.msra.mxu0 0.0
    %2459 = vmatprep.subr.mxu0 0.0
    %2460 = vmatpush1.msra.mxu0 0.0
    %2461 = vmatprep.subr.mxu0 0.0
    %2462 = vmatpush1.msra.mxu0 0.0
    %2463 = vmatprep.subr.mxu0 0.0
    %2464 = vmatpush1.msra.mxu0 0.0
    %2465 = vmatprep.subr.mxu0 0.0
    %2466 = vmatpush1.msra.mxu0 0.0
    %2467 = vmatprep.subr.mxu0 0.0
    %2468 = vmatpush1.msra.mxu0 0.0
    %2469 = vmatprep.subr.mxu0 0.0
    %2470 = vmatpush1.msra.mxu0 0.0
    %2471 = vmatprep.subr.mxu0 0.0
    %2472 = vmatpush1.msra.mxu0 0.0
    %2473 = vmatprep.subr.mxu0 0.0
    %2474 = vmatpush1.msra.mxu0 0.0
    %2475 = vmatprep.subr.mxu0 0.0
    %2476 = vmatpush1.msra.mxu0 0.0
    %2477 = vmatprep.subr.mxu0 0.0
    %2478 = vmatpush1.msra.mxu0 0.0
    %2479 = vmatprep.subr.mxu0 0.0
    %2480 = vmatpush1.msra.mxu0 0.0
    %2481 = vmatprep.subr.mxu0 0.0
    %2482 = vmatpush1.msra.mxu0 0.0
    %2483 = vmatprep.subr.mxu0 0.0
    %2484 = vmatpush1.msra.mxu0 0.0
    %2485 = vmatprep.subr.mxu0 0.0
    %2486 = vmatpush1.msra.mxu0 0.0
    %2487 = vmatprep.subr.mxu0 0.0
    %2488 = vmatpush1.msra.mxu0 0.0
    %2489 = vmatprep.subr.mxu0 0.0
    %2490 = vmatpush1.msra.mxu0 0.0
    %2491 = vmatprep.subr.mxu0 0.0
    %2492 = vmatpush1.msra.mxu0 0.0
    %2493 = vmatprep.subr.mxu0 0.0
    %2494 = vmatpush1.msra.mxu0 0.0
    %2495 = vmatprep.subr.mxu0 0.0
    %2496 = vmatpush1.msra.mxu0 0.0
    %2497 = vmatprep.subr.mxu0 0.0
    %2498 = vmatpush1.msra.mxu0 0.0
    %2499 = vmatprep.subr.mxu0 0.0
    %2500 = vmatpush1.msra.mxu0 0.0
    %2501 = vmatprep.subr.mxu0 0.0
    %2502 = vmatpush1.msra.mxu0 0.0
    %2503 = vmatprep.mubr.f32.mxu0 0.0
    %2504 = vmatmul.mubr.f32.gmra.mrb[0].mxu0 %v2437
    %v2505 = vpop.f32.mrb[0].mxu0
    %v2506 = vadd.f32 0.0, %v2505
    %v2507 = vpop.f32.mrb[0].mxu0
    %2508 = vdwg.mxu0
    %2509 = vrot.lane.b32.xlu0 %v2172, 112
    %v2510 = vpop.permute.xlu0 %2509
    %2511 = vrot.lane.b32.xlu0 %v2172, 80
    %v2512 = vpop.permute.xlu0 %2511
    %v2513 = vsel %vm378, %v2510, 0
    %v2515 = vsel %vm378, %v2512, 0
    %2517 = vmatprep.subr.mxu0 0.0
    %2518 = vmatpush1.xpose.msra.mxu0 %v2515
    %2519 = vmatprep.subr.mxu0 0.0
    %2520 = vmatpush1.xpose.msra.mxu0 0.0
    %2521 = vmatprep.subr.mxu0 0.0
    %2522 = vmatpush1.xpose.msra.mxu0 0.0
    %2523 = vmatprep.subr.mxu0 0.0
    %2524 = vmatpush1.xpose.msra.mxu0 0.0
    %2525 = vmatprep.subr.mxu0 0.0
    %2526 = vmatpush1.xpose.msra.mxu0 0.0
    %2527 = vmatprep.subr.mxu0 0.0
    %2528 = vmatpush1.xpose.msra.mxu0 0.0
    %2529 = vmatprep.subr.mxu0 0.0
    %2530 = vmatpush1.xpose.msra.mxu0 0.0
    %2531 = vmatprep.subr.mxu0 0.0
    %2532 = vmatpush1.xpose.msra.mxu0 0.0
    %2533 = vmatprep.subr.mxu0 0.0
    %2534 = vmatpush1.xpose.msra.mxu0 0.0
    %2535 = vmatprep.subr.mxu0 0.0
    %2536 = vmatpush1.xpose.msra.mxu0 0.0
    %2537 = vmatprep.subr.mxu0 0.0
    %2538 = vmatpush1.xpose.msra.mxu0 0.0
    %2539 = vmatprep.subr.mxu0 0.0
    %2540 = vmatpush1.xpose.msra.mxu0 0.0
    %2541 = vmatprep.subr.mxu0 0.0
    %2542 = vmatpush1.xpose.msra.mxu0 0.0
    %2543 = vmatprep.subr.mxu0 0.0
    %2544 = vmatpush1.xpose.msra.mxu0 0.0
    %2545 = vmatprep.subr.mxu0 0.0
    %2546 = vmatpush1.xpose.msra.mxu0 0.0
    %2547 = vmatprep.subr.mxu0 0.0
    %2548 = vmatpush1.xpose.msra.mxu0 0.0
    %2549 = vmatprep.subr.mxu0 0.0
    %2550 = vmatpush1.xpose.msra.mxu0 0.0
    %2551 = vmatprep.subr.mxu0 0.0
    %2552 = vmatpush1.xpose.msra.mxu0 0.0
    %2553 = vmatprep.subr.mxu0 0.0
    %2554 = vmatpush1.xpose.msra.mxu0 0.0
    %2555 = vmatprep.subr.mxu0 0.0
    %2556 = vmatpush1.xpose.msra.mxu0 0.0
    %2557 = vmatprep.subr.mxu0 0.0
    %2558 = vmatpush1.xpose.msra.mxu0 0.0
    %2559 = vmatprep.subr.mxu0 0.0
    %2560 = vmatpush1.xpose.msra.mxu0 0.0
    %2561 = vmatprep.subr.mxu0 0.0
    %2562 = vmatpush1.xpose.msra.mxu0 0.0
    %2563 = vmatprep.subr.mxu0 0.0
    %2564 = vmatpush1.xpose.msra.mxu0 0.0
    %2565 = vmatprep.subr.mxu0 0.0
    %2566 = vmatpush1.xpose.msra.mxu0 0.0
    %2567 = vmatprep.subr.mxu0 0.0
    %2568 = vmatpush1.xpose.msra.mxu0 0.0
    %2569 = vmatprep.subr.mxu0 0.0
    %2570 = vmatpush1.xpose.msra.mxu0 0.0
    %2571 = vmatprep.subr.mxu0 0.0
    %2572 = vmatpush1.xpose.msra.mxu0 0.0
    %2573 = vmatprep.subr.mxu0 0.0
    %2574 = vmatpush1.xpose.msra.mxu0 0.0
    %2575 = vmatprep.subr.mxu0 0.0
    %2576 = vmatpush1.xpose.msra.mxu0 0.0
    %2577 = vmatprep.subr.mxu0 0.0
    %2578 = vmatpush1.xpose.msra.mxu0 0.0
    %2579 = vmatprep.subr.mxu0 0.0
    %2580 = vmatpush1.xpose.msra.mxu0 0.0
    %2581 = vmatprep.mubr.f32.mxu0 0.0
    %2582 = vmatmul.mubr.f32.gmra.mrb[0].mxu0 %v2513
    %v2583 = vpop.f32.mrb[0].mxu0
    %v2584 = vadd.f32 0.0, %v2583
    %v2585 = vpop.f32.mrb[0].mxu0
    %2586 = vdwg.mxu0
    %v2587 = vsel %vm378, %v2584, -inf
    %2588 = vmax.xlane.f32.xlu0 %v2587
    %v2589 = vpop.xlane.xlu0 %2588
    %v2590 = vsub.f32 %v2584, %v2589
    %v2591 = vmul.f32 %v2590, 1.442695
    %v2592 = vpow.pop %v2591
    %v2593 = vsel %vm378, %v2592, 0.0
    %2594 = vadd.xlane.f32.xlu0 %v2593
    %v2595 = vpop.xlane.xlu0 %2594
    %v2596 = vrcp.pop %v2595
    %v2597 = vmul.f32 %v2592, %v2596
    %2598 = vrot.lane.b32.xlu0 %v2172, 48
    %v2599 = vpop.permute.xlu0 %2598
    %v2602 = vsel %vm378, %v2597, 0
    %2604 = vmatprep.subr.mxu0 0.0
    %2605 = vmatpush1.msra.mxu0 %v2599
    %2606 = vmatprep.subr.mxu0 0.0
    %2607 = vmatpush1.msra.mxu0 0.0
    %2608 = vmatprep.subr.mxu0 0.0
    %2609 = vmatpush1.msra.mxu0 0.0
    %2610 = vmatprep.subr.mxu0 0.0
    %2611 = vmatpush1.msra.mxu0 0.0
    %2612 = vmatprep.subr.mxu0 0.0
    %2613 = vmatpush1.msra.mxu0 0.0
    %2614 = vmatprep.subr.mxu0 0.0
    %2615 = vmatpush1.msra.mxu0 0.0
    %2616 = vmatprep.subr.mxu0 0.0
    %2617 = vmatpush1.msra.mxu0 0.0
    %2618 = vmatprep.subr.mxu0 0.0
    %2619 = vmatpush1.msra.mxu0 0.0
    %2620 = vmatprep.subr.mxu0 0.0
    %2621 = vmatpush1.msra.mxu0 0.0
    %2622 = vmatprep.subr.mxu0 0.0
    %2623 = vmatpush1.msra.mxu0 0.0
    %2624 = vmatprep.subr.mxu0 0.0
    %2625 = vmatpush1.msra.mxu0 0.0
    %2626 = vmatprep.subr.mxu0 0.0
    %2627 = vmatpush1.msra.mxu0 0.0
    %2628 = vmatprep.subr.mxu0 0.0
    %2629 = vmatpush1.msra.mxu0 0.0
    %2630 = vmatprep.subr.mxu0 0.0
    %2631 = vmatpush1.msra.mxu0 0.0
    %2632 = vmatprep.subr.mxu0 0.0
    %2633 = vmatpush1.msra.mxu0 0.0
    %2634 = vmatprep.subr.mxu0 0.0
    %2635 = vmatpush1.msra.mxu0 0.0
    %2636 = vmatprep.subr.mxu0 0.0
    %2637 = vmatpush1.msra.mxu0 0.0
    %2638 = vmatprep.subr.mxu0 0.0
    %2639 = vmatpush1.msra.mxu0 0.0
    %2640 = vmatprep.subr.mxu0 0.0
    %2641 = vmatpush1.msra.mxu0 0.0
    %2642 = vmatprep.subr.mxu0 0.0
    %2643 = vmatpush1.msra.mxu0 0.0
    %2644 = vmatprep.subr.mxu0 0.0
    %2645 = vmatpush1.msra.mxu0 0.0
    %2646 = vmatprep.subr.mxu0 0.0
    %2647 = vmatpush1.msra.mxu0 0.0
    %2648 = vmatprep.subr.mxu0 0.0
    %2649 = vmatpush1.msra.mxu0 0.0
    %2650 = vmatprep.subr.mxu0 0.0
    %2651 = vmatpush1.msra.mxu0 0.0
    %2652 = vmatprep.subr.mxu0 0.0
    %2653 = vmatpush1.msra.mxu0 0.0
    %2654 = vmatprep.subr.mxu0 0.0
    %2655 = vmatpush1.msra.mxu0 0.0
    %2656 = vmatprep.subr.mxu0 0.0
    %2657 = vmatpush1.msra.mxu0 0.0
    %2658 = vmatprep.subr.mxu0 0.0
    %2659 = vmatpush1.msra.mxu0 0.0
    %2660 = vmatprep.subr.mxu0 0.0
    %2661 = vmatpush1.msra.mxu0 0.0
    %2662 = vmatprep.subr.mxu0 0.0
    %2663 = vmatpush1.msra.mxu0 0.0
    %2664 = vmatprep.subr.mxu0 0.0
    %2665 = vmatpush1.msra.mxu0 0.0
    %2666 = vmatprep.subr.mxu0 0.0
    %2667 = vmatpush1.msra.mxu0 0.0
    %2668 = vmatprep.mubr.f32.mxu0 0.0
    %2669 = vmatmul.mubr.f32.gmra.mrb[0].mxu0 %v2602
    %v2670 = vpop.f32.mrb[0].mxu0
    %v2671 = vadd.f32 0.0, %v2670
    %v2672 = vpop.f32.mrb[0].mxu0
    %2673 = vdwg.mxu0
    %2674 = vrot.lane.b32.xlu0 %v2172, 104
    %v2675 = vpop.permute.xlu0 %2674
    %2676 = vrot.lane.b32.xlu0 %v2172, 72
    %v2677 = vpop.permute.xlu0 %2676
    %v2678 = vsel %vm378, %v2675, 0
    %v2680 = vsel %vm378, %v2677, 0
    %2682 = vmatprep.subr.mxu0 0.0
    %2683 = vmatpush1.xpose.msra.mxu0 %v2680
    %2684 = vmatprep.subr.mxu0 0.0
    %2685 = vmatpush1.xpose.msra.mxu0 0.0
    %2686 = vmatprep.subr.mxu0 0.0
    %2687 = vmatpush1.xpose.msra.mxu0 0.0
    %2688 = vmatprep.subr.mxu0 0.0
    %2689 = vmatpush1.xpose.msra.mxu0 0.0
    %2690 = vmatprep.subr.mxu0 0.0
    %2691 = vmatpush1.xpose.msra.mxu0 0.0
    %2692 = vmatprep.subr.mxu0 0.0
    %2693 = vmatpush1.xpose.msra.mxu0 0.0
    %2694 = vmatprep.subr.mxu0 0.0
    %2695 = vmatpush1.xpose.msra.mxu0 0.0
    %2696 = vmatprep.subr.mxu0 0.0
    %2697 = vmatpush1.xpose.msra.mxu0 0.0
    %2698 = vmatprep.subr.mxu0 0.0
    %2699 = vmatpush1.xpose.msra.mxu0 0.0
    %2700 = vmatprep.subr.mxu0 0.0
    %2701 = vmatpush1.xpose.msra.mxu0 0.0
    %2702 = vmatprep.subr.mxu0 0.0
    %2703 = vmatpush1.xpose.msra.mxu0 0.0
    %2704 = vmatprep.subr.mxu0 0.0
    %2705 = vmatpush1.xpose.msra.mxu0 0.0
    %2706 = vmatprep.subr.mxu0 0.0
    %2707 = vmatpush1.xpose.msra.mxu0 0.0
    %2708 = vmatprep.subr.mxu0 0.0
    %2709 = vmatpush1.xpose.msra.mxu0 0.0
    %2710 = vmatprep.subr.mxu0 0.0
    %2711 = vmatpush1.xpose.msra.mxu0 0.0
    %2712 = vmatprep.subr.mxu0 0.0
    %2713 = vmatpush1.xpose.msra.mxu0 0.0
    %2714 = vmatprep.subr.mxu0 0.0
    %2715 = vmatpush1.xpose.msra.mxu0 0.0
    %2716 = vmatprep.subr.mxu0 0.0
    %2717 = vmatpush1.xpose.msra.mxu0 0.0
    %2718 = vmatprep.subr.mxu0 0.0
    %2719 = vmatpush1.xpose.msra.mxu0 0.0
    %2720 = vmatprep.subr.mxu0 0.0
    %2721 = vmatpush1.xpose.msra.mxu0 0.0
    %2722 = vmatprep.subr.mxu0 0.0
    %2723 = vmatpush1.xpose.msra.mxu0 0.0
    %2724 = vmatprep.subr.mxu0 0.0
    %2725 = vmatpush1.xpose.msra.mxu0 0.0
    %2726 = vmatprep.subr.mxu0 0.0
    %2727 = vmatpush1.xpose.msra.mxu0 0.0
    %2728 = vmatprep.subr.mxu0 0.0
    %2729 = vmatpush1.xpose.msra.mxu0 0.0
    %2730 = vmatprep.subr.mxu0 0.0
    %2731 = vmatpush1.xpose.msra.mxu0 0.0
    %2732 = vmatprep.subr.mxu0 0.0
    %2733 = vmatpush1.xpose.msra.mxu0 0.0
    %2734 = vmatprep.subr.mxu0 0.0
    %2735 = vmatpush1.xpose.msra.mxu0 0.0
    %2736 = vmatprep.subr.mxu0 0.0
    %2737 = vmatpush1.xpose.msra.mxu0 0.0
    %2738 = vmatprep.subr.mxu0 0.0
    %2739 = vmatpush1.xpose.msra.mxu0 0.0
    %2740 = vmatprep.subr.mxu0 0.0
    %2741 = vmatpush1.xpose.msra.mxu0 0.0
    %2742 = vmatprep.subr.mxu0 0.0
    %2743 = vmatpush1.xpose.msra.mxu0 0.0
    %2744 = vmatprep.subr.mxu0 0.0
    %2745 = vmatpush1.xpose.msra.mxu0 0.0
    %2746 = vmatprep.mubr.f32.mxu0 0.0
    %2747 = vmatmul.mubr.f32.gmra.mrb[0].mxu0 %v2678
    %v2748 = vpop.f32.mrb[0].mxu0
    %v2749 = vadd.f32 0.0, %v2748
    %v2750 = vpop.f32.mrb[0].mxu0
    %2751 = vdwg.mxu0
    %v2752 = vsel %vm378, %v2749, -inf
    %2753 = vmax.xlane.f32.xlu0 %v2752
    %v2754 = vpop.xlane.xlu0 %2753
    %v2755 = vsub.f32 %v2749, %v2754
    %v2756 = vmul.f32 %v2755, 1.442695
    %v2757 = vpow.pop %v2756
    %v2758 = vsel %vm378, %v2757, 0.0
    %2759 = vadd.xlane.f32.xlu0 %v2758
    %v2760 = vpop.xlane.xlu0 %2759
    %v2761 = vrcp.pop %v2760
    %v2762 = vmul.f32 %v2757, %v2761
    %2763 = vrot.lane.b32.xlu0 %v2172, 40
    %v2764 = vpop.permute.xlu0 %2763
    %v2767 = vsel %vm378, %v2762, 0
    %2769 = vmatprep.subr.mxu0 0.0
    %2770 = vmatpush1.msra.mxu0 %v2764
    %2771 = vmatprep.subr.mxu0 0.0
    %2772 = vmatpush1.msra.mxu0 0.0
    %2773 = vmatprep.subr.mxu0 0.0
    %2774 = vmatpush1.msra.mxu0 0.0
    %2775 = vmatprep.subr.mxu0 0.0
    %2776 = vmatpush1.msra.mxu0 0.0
    %2777 = vmatprep.subr.mxu0 0.0
    %2778 = vmatpush1.msra.mxu0 0.0
    %2779 = vmatprep.subr.mxu0 0.0
    %2780 = vmatpush1.msra.mxu0 0.0
    %2781 = vmatprep.subr.mxu0 0.0
    %2782 = vmatpush1.msra.mxu0 0.0
    %2783 = vmatprep.subr.mxu0 0.0
    %2784 = vmatpush1.msra.mxu0 0.0
    %2785 = vmatprep.subr.mxu0 0.0
    %2786 = vmatpush1.msra.mxu0 0.0
    %2787 = vmatprep.subr.mxu0 0.0
    %2788 = vmatpush1.msra.mxu0 0.0
    %2789 = vmatprep.subr.mxu0 0.0
    %2790 = vmatpush1.msra.mxu0 0.0
    %2791 = vmatprep.subr.mxu0 0.0
    %2792 = vmatpush1.msra.mxu0 0.0
    %2793 = vmatprep.subr.mxu0 0.0
    %2794 = vmatpush1.msra.mxu0 0.0
    %2795 = vmatprep.subr.mxu0 0.0
    %2796 = vmatpush1.msra.mxu0 0.0
    %2797 = vmatprep.subr.mxu0 0.0
    %2798 = vmatpush1.msra.mxu0 0.0
    %2799 = vmatprep.subr.mxu0 0.0
    %2800 = vmatpush1.msra.mxu0 0.0
    %2801 = vmatprep.subr.mxu0 0.0
    %2802 = vmatpush1.msra.mxu0 0.0
    %2803 = vmatprep.subr.mxu0 0.0
    %2804 = vmatpush1.msra.mxu0 0.0
    %2805 = vmatprep.subr.mxu0 0.0
    %2806 = vmatpush1.msra.mxu0 0.0
    %2807 = vmatprep.subr.mxu0 0.0
    %2808 = vmatpush1.msra.mxu0 0.0
    %2809 = vmatprep.subr.mxu0 0.0
    %2810 = vmatpush1.msra.mxu0 0.0
    %2811 = vmatprep.subr.mxu0 0.0
    %2812 = vmatpush1.msra.mxu0 0.0
    %2813 = vmatprep.subr.mxu0 0.0
    %2814 = vmatpush1.msra.mxu0 0.0
    %2815 = vmatprep.subr.mxu0 0.0
    %2816 = vmatpush1.msra.mxu0 0.0
    %2817 = vmatprep.subr.mxu0 0.0
    %2818 = vmatpush1.msra.mxu0 0.0
    %2819 = vmatprep.subr.mxu0 0.0
    %2820 = vmatpush1.msra.mxu0 0.0
    %2821 = vmatprep.subr.mxu0 0.0
    %2822 = vmatpush1.msra.mxu0 0.0
    %2823 = vmatprep.subr.mxu0 0.0
    %2824 = vmatpush1.msra.mxu0 0.0
    %2825 = vmatprep.subr.mxu0 0.0
    %2826 = vmatpush1.msra.mxu0 0.0
    %2827 = vmatprep.subr.mxu0 0.0
    %2828 = vmatpush1.msra.mxu0 0.0
    %2829 = vmatprep.subr.mxu0 0.0
    %2830 = vmatpush1.msra.mxu0 0.0
    %2831 = vmatprep.subr.mxu0 0.0
    %2832 = vmatpush1.msra.mxu0 0.0
    %2833 = vmatprep.mubr.f32.mxu0 0.0
    %2834 = vmatmul.mubr.f32.gmra.mrb[0].mxu0 %v2767
    %v2835 = vpop.f32.mrb[0].mxu0
    %v2836 = vadd.f32 0.0, %v2835
    %v2837 = vpop.f32.mrb[0].mxu0
    %2838 = vdwg.mxu0
    %2840 = vrot.lane.b32.xlu0 %v2506, 8
    %v2841 = vpop.permute.xlu0 %2840
    %2844 = vrot.lane.b32.xlu0 %v2671, 16
    %v2845 = vpop.permute.xlu0 %2844
    %2848 = vrot.lane.b32.xlu0 %v2836, 24
    %v2849 = vpop.permute.xlu0 %2848
    %v2851 = vsel %vm378, %v2341, %v2841
    %v2852 = vsel %vm111, %v2851, %v2845
    %v2853 = vsel %vm1049, %v2852, %v2849
    %2855 = vrot.lane.b32.xlu0 %v2177, 96
    %v2856 = vpop.permute.xlu0 %2855
    %v2857 = vsel %vm378, %v2177, 0
    %v2859 = vsel %vm378, %v2856, 0
    %2861 = vmatprep.subr.mxu0 0.0
    %2862 = vmatpush1.xpose.msra.mxu0 %v2859
    %2863 = vmatprep.subr.mxu0 0.0
    %2864 = vmatpush1.xpose.msra.mxu0 0.0
    %2865 = vmatprep.subr.mxu0 0.0
    %2866 = vmatpush1.xpose.msra.mxu0 0.0
    %2867 = vmatprep.subr.mxu0 0.0
    %2868 = vmatpush1.xpose.msra.mxu0 0.0
    %2869 = vmatprep.subr.mxu0 0.0
    %2870 = vmatpush1.xpose.msra.mxu0 0.0
    %2871 = vmatprep.subr.mxu0 0.0
    %2872 = vmatpush1.xpose.msra.mxu0 0.0
    %2873 = vmatprep.subr.mxu0 0.0
    %2874 = vmatpush1.xpose.msra.mxu0 0.0
    %2875 = vmatprep.subr.mxu0 0.0
    %2876 = vmatpush1.xpose.msra.mxu0 0.0
    %2877 = vmatprep.subr.mxu0 0.0
    %2878 = vmatpush1.xpose.msra.mxu0 0.0
    %2879 = vmatprep.subr.mxu0 0.0
    %2880 = vmatpush1.xpose.msra.mxu0 0.0
    %2881 = vmatprep.subr.mxu0 0.0
    %2882 = vmatpush1.xpose.msra.mxu0 0.0
    %2883 = vmatprep.subr.mxu0 0.0
    %2884 = vmatpush1.xpose.msra.mxu0 0.0
    %2885 = vmatprep.subr.mxu0 0.0
    %2886 = vmatpush1.xpose.msra.mxu0 0.0
    %2887 = vmatprep.subr.mxu0 0.0
    %2888 = vmatpush1.xpose.msra.mxu0 0.0
    %2889 = vmatprep.subr.mxu0 0.0
    %2890 = vmatpush1.xpose.msra.mxu0 0.0
    %2891 = vmatprep.subr.mxu0 0.0
    %2892 = vmatpush1.xpose.msra.mxu0 0.0
    %2893 = vmatprep.subr.mxu0 0.0
    %2894 = vmatpush1.xpose.msra.mxu0 0.0
    %2895 = vmatprep.subr.mxu0 0.0
    %2896 = vmatpush1.xpose.msra.mxu0 0.0
    %2897 = vmatprep.subr.mxu0 0.0
    %2898 = vmatpush1.xpose.msra.mxu0 0.0
    %2899 = vmatprep.subr.mxu0 0.0
    %2900 = vmatpush1.xpose.msra.mxu0 0.0
    %2901 = vmatprep.subr.mxu0 0.0
    %2902 = vmatpush1.xpose.msra.mxu0 0.0
    %2903 = vmatprep.subr.mxu0 0.0
    %2904 = vmatpush1.xpose.msra.mxu0 0.0
    %2905 = vmatprep.subr.mxu0 0.0
    %2906 = vmatpush1.xpose.msra.mxu0 0.0
    %2907 = vmatprep.subr.mxu0 0.0
    %2908 = vmatpush1.xpose.msra.mxu0 0.0
    %2909 = vmatprep.subr.mxu0 0.0
    %2910 = vmatpush1.xpose.msra.mxu0 0.0
    %2911 = vmatprep.subr.mxu0 0.0
    %2912 = vmatpush1.xpose.msra.mxu0 0.0
    %2913 = vmatprep.subr.mxu0 0.0
    %2914 = vmatpush1.xpose.msra.mxu0 0.0
    %2915 = vmatprep.subr.mxu0 0.0
    %2916 = vmatpush1.xpose.msra.mxu0 0.0
    %2917 = vmatprep.subr.mxu0 0.0
    %2918 = vmatpush1.xpose.msra.mxu0 0.0
    %2919 = vmatprep.subr.mxu0 0.0
    %2920 = vmatpush1.xpose.msra.mxu0 0.0
    %2921 = vmatprep.subr.mxu0 0.0
    %2922 = vmatpush1.xpose.msra.mxu0 0.0
    %2923 = vmatprep.subr.mxu0 0.0
    %2924 = vmatpush1.xpose.msra.mxu0 0.0
    %2925 = vmatprep.mubr.f32.mxu0 0.0
    %2926 = vmatmul.mubr.f32.gmra.mrb[0].mxu0 %v2857
    %v2927 = vpop.f32.mrb[0].mxu0
    %v2928 = vadd.f32 0.0, %v2927
    %v2929 = vpop.f32.mrb[0].mxu0
    %2930 = vdwg.mxu0
    %v2931 = vsel %vm378, %v2928, -inf
    %2932 = vmax.xlane.f32.xlu0 %v2931
    %v2933 = vpop.xlane.xlu0 %2932
    %v2934 = vsub.f32 %v2928, %v2933
    %v2935 = vmul.f32 %v2934, 1.442695
    %v2936 = vpow.pop %v2935
    %v2937 = vsel %vm378, %v2936, 0.0
    %2938 = vadd.xlane.f32.xlu0 %v2937
    %v2939 = vpop.xlane.xlu0 %2938
    %v2940 = vrcp.pop %v2939
    %v2941 = vmul.f32 %v2936, %v2940
    %2942 = vrot.lane.b32.xlu0 %v2177, 64
    %v2943 = vpop.permute.xlu0 %2942
    %v2946 = vsel %vm378, %v2941, 0
    %2948 = vmatprep.subr.mxu0 0.0
    %2949 = vmatpush1.msra.mxu0 %v2943
    %2950 = vmatprep.subr.mxu0 0.0
    %2951 = vmatpush1.msra.mxu0 0.0
    %2952 = vmatprep.subr.mxu0 0.0
    %2953 = vmatpush1.msra.mxu0 0.0
    %2954 = vmatprep.subr.mxu0 0.0
    %2955 = vmatpush1.msra.mxu0 0.0
    %2956 = vmatprep.subr.mxu0 0.0
    %2957 = vmatpush1.msra.mxu0 0.0
    %2958 = vmatprep.subr.mxu0 0.0
    %2959 = vmatpush1.msra.mxu0 0.0
    %2960 = vmatprep.subr.mxu0 0.0
    %2961 = vmatpush1.msra.mxu0 0.0
    %2962 = vmatprep.subr.mxu0 0.0
    %2963 = vmatpush1.msra.mxu0 0.0
    %2964 = vmatprep.subr.mxu0 0.0
    %2965 = vmatpush1.msra.mxu0 0.0
    %2966 = vmatprep.subr.mxu0 0.0
    %2967 = vmatpush1.msra.mxu0 0.0
    %2968 = vmatprep.subr.mxu0 0.0
    %2969 = vmatpush1.msra.mxu0 0.0
    %2970 = vmatprep.subr.mxu0 0.0
    %2971 = vmatpush1.msra.mxu0 0.0
    %2972 = vmatprep.subr.mxu0 0.0
    %2973 = vmatpush1.msra.mxu0 0.0
    %2974 = vmatprep.subr.mxu0 0.0
    %2975 = vmatpush1.msra.mxu0 0.0
    %2976 = vmatprep.subr.mxu0 0.0
    %2977 = vmatpush1.msra.mxu0 0.0
    %2978 = vmatprep.subr.mxu0 0.0
    %2979 = vmatpush1.msra.mxu0 0.0
    %2980 = vmatprep.subr.mxu0 0.0
    %2981 = vmatpush1.msra.mxu0 0.0
    %2982 = vmatprep.subr.mxu0 0.0
    %2983 = vmatpush1.msra.mxu0 0.0
    %2984 = vmatprep.subr.mxu0 0.0
    %2985 = vmatpush1.msra.mxu0 0.0
    %2986 = vmatprep.subr.mxu0 0.0
    %2987 = vmatpush1.msra.mxu0 0.0
    %2988 = vmatprep.subr.mxu0 0.0
    %2989 = vmatpush1.msra.mxu0 0.0
    %2990 = vmatprep.subr.mxu0 0.0
    %2991 = vmatpush1.msra.mxu0 0.0
    %2992 = vmatprep.subr.mxu0 0.0
    %2993 = vmatpush1.msra.mxu0 0.0
    %2994 = vmatprep.subr.mxu0 0.0
    %2995 = vmatpush1.msra.mxu0 0.0
    %2996 = vmatprep.subr.mxu0 0.0
    %2997 = vmatpush1.msra.mxu0 0.0
    %2998 = vmatprep.subr.mxu0 0.0
    %2999 = vmatpush1.msra.mxu0 0.0
    %3000 = vmatprep.subr.mxu0 0.0
    %3001 = vmatpush1.msra.mxu0 0.0
    %3002 = vmatprep.subr.mxu0 0.0
    %3003 = vmatpush1.msra.mxu0 0.0
    %3004 = vmatprep.subr.mxu0 0.0
    %3005 = vmatpush1.msra.mxu0 0.0
    %3006 = vmatprep.subr.mxu0 0.0
    %3007 = vmatpush1.msra.mxu0 0.0
    %3008 = vmatprep.subr.mxu0 0.0
    %3009 = vmatpush1.msra.mxu0 0.0
    %3010 = vmatprep.subr.mxu0 0.0
    %3011 = vmatpush1.msra.mxu0 0.0
    %3012 = vmatprep.mubr.f32.mxu0 0.0
    %3013 = vmatmul.mubr.f32.gmra.mrb[0].mxu0 %v2946
    %v3014 = vpop.f32.mrb[0].mxu0
    %v3015 = vadd.f32 0.0, %v3014
    %v3016 = vpop.f32.mrb[0].mxu0
    %3017 = vdwg.mxu0
    %3018 = vrot.lane.b32.xlu0 %v2177, 120
    %v3019 = vpop.permute.xlu0 %3018
    %3020 = vrot.lane.b32.xlu0 %v2177, 88
    %v3021 = vpop.permute.xlu0 %3020
    %v3022 = vsel %vm378, %v3019, 0
    %v3024 = vsel %vm378, %v3021, 0
    %3026 = vmatprep.subr.mxu0 0.0
    %3027 = vmatpush1.xpose.msra.mxu0 %v3024
    %3028 = vmatprep.subr.mxu0 0.0
    %3029 = vmatpush1.xpose.msra.mxu0 0.0
    %3030 = vmatprep.subr.mxu0 0.0
    %3031 = vmatpush1.xpose.msra.mxu0 0.0
    %3032 = vmatprep.subr.mxu0 0.0
    %3033 = vmatpush1.xpose.msra.mxu0 0.0
    %3034 = vmatprep.subr.mxu0 0.0
    %3035 = vmatpush1.xpose.msra.mxu0 0.0
    %3036 = vmatprep.subr.mxu0 0.0
    %3037 = vmatpush1.xpose.msra.mxu0 0.0
    %3038 = vmatprep.subr.mxu0 0.0
    %3039 = vmatpush1.xpose.msra.mxu0 0.0
    %3040 = vmatprep.subr.mxu0 0.0
    %3041 = vmatpush1.xpose.msra.mxu0 0.0
    %3042 = vmatprep.subr.mxu0 0.0
    %3043 = vmatpush1.xpose.msra.mxu0 0.0
    %3044 = vmatprep.subr.mxu0 0.0
    %3045 = vmatpush1.xpose.msra.mxu0 0.0
    %3046 = vmatprep.subr.mxu0 0.0
    %3047 = vmatpush1.xpose.msra.mxu0 0.0
    %3048 = vmatprep.subr.mxu0 0.0
    %3049 = vmatpush1.xpose.msra.mxu0 0.0
    %3050 = vmatprep.subr.mxu0 0.0
    %3051 = vmatpush1.xpose.msra.mxu0 0.0
    %3052 = vmatprep.subr.mxu0 0.0
    %3053 = vmatpush1.xpose.msra.mxu0 0.0
    %3054 = vmatprep.subr.mxu0 0.0
    %3055 = vmatpush1.xpose.msra.mxu0 0.0
    %3056 = vmatprep.subr.mxu0 0.0
    %3057 = vmatpush1.xpose.msra.mxu0 0.0
    %3058 = vmatprep.subr.mxu0 0.0
    %3059 = vmatpush1.xpose.msra.mxu0 0.0
    %3060 = vmatprep.subr.mxu0 0.0
    %3061 = vmatpush1.xpose.msra.mxu0 0.0
    %3062 = vmatprep.subr.mxu0 0.0
    %3063 = vmatpush1.xpose.msra.mxu0 0.0
    %3064 = vmatprep.subr.mxu0 0.0
    %3065 = vmatpush1.xpose.msra.mxu0 0.0
    %3066 = vmatprep.subr.mxu0 0.0
    %3067 = vmatpush1.xpose.msra.mxu0 0.0
    %3068 = vmatprep.subr.mxu0 0.0
    %3069 = vmatpush1.xpose.msra.mxu0 0.0
    %3070 = vmatprep.subr.mxu0 0.0
    %3071 = vmatpush1.xpose.msra.mxu0 0.0
    %3072 = vmatprep.subr.mxu0 0.0
    %3073 = vmatpush1.xpose.msra.mxu0 0.0
    %3074 = vmatprep.subr.mxu0 0.0
    %3075 = vmatpush1.xpose.msra.mxu0 0.0
    %3076 = vmatprep.subr.mxu0 0.0
    %3077 = vmatpush1.xpose.msra.mxu0 0.0
    %3078 = vmatprep.subr.mxu0 0.0
    %3079 = vmatpush1.xpose.msra.mxu0 0.0
    %3080 = vmatprep.subr.mxu0 0.0
    %3081 = vmatpush1.xpose.msra.mxu0 0.0
    %3082 = vmatprep.subr.mxu0 0.0
    %3083 = vmatpush1.xpose.msra.mxu0 0.0
    %3084 = vmatprep.subr.mxu0 0.0
    %3085 = vmatpush1.xpose.msra.mxu0 0.0
    %3086 = vmatprep.subr.mxu0 0.0
    %3087 = vmatpush1.xpose.msra.mxu0 0.0
    %3088 = vmatprep.subr.mxu0 0.0
    %3089 = vmatpush1.xpose.msra.mxu0 0.0
    %3090 = vmatprep.mubr.f32.mxu0 0.0
    %3091 = vmatmul.mubr.f32.gmra.mrb[0].mxu0 %v3022
    %v3092 = vpop.f32.mrb[0].mxu0
    %v3093 = vadd.f32 0.0, %v3092
    %v3094 = vpop.f32.mrb[0].mxu0
    %3095 = vdwg.mxu0
    %v3096 = vsel %vm378, %v3093, -inf
    %3097 = vmax.xlane.f32.xlu0 %v3096
    %v3098 = vpop.xlane.xlu0 %3097
    %v3099 = vsub.f32 %v3093, %v3098
    %v3100 = vmul.f32 %v3099, 1.442695
    %v3101 = vpow.pop %v3100
    %v3102 = vsel %vm378, %v3101, 0.0
    %3103 = vadd.xlane.f32.xlu0 %v3102
    %v3104 = vpop.xlane.xlu0 %3103
    %v3105 = vrcp.pop %v3104
    %v3106 = vmul.f32 %v3101, %v3105
    %3107 = vrot.lane.b32.xlu0 %v2177, 56
    %v3108 = vpop.permute.xlu0 %3107
    %v3111 = vsel %vm378, %v3106, 0
    %3113 = vmatprep.subr.mxu0 0.0
    %3114 = vmatpush1.msra.mxu0 %v3108
    %3115 = vmatprep.subr.mxu0 0.0
    %3116 = vmatpush1.msra.mxu0 0.0
    %3117 = vmatprep.subr.mxu0 0.0
    %3118 = vmatpush1.msra.mxu0 0.0
    %3119 = vmatprep.subr.mxu0 0.0
    %3120 = vmatpush1.msra.mxu0 0.0
    %3121 = vmatprep.subr.mxu0 0.0
    %3122 = vmatpush1.msra.mxu0 0.0
    %3123 = vmatprep.subr.mxu0 0.0
    %3124 = vmatpush1.msra.mxu0 0.0
    %3125 = vmatprep.subr.mxu0 0.0
    %3126 = vmatpush1.msra.mxu0 0.0
    %3127 = vmatprep.subr.mxu0 0.0
    %3128 = vmatpush1.msra.mxu0 0.0
    %3129 = vmatprep.subr.mxu0 0.0
    %3130 = vmatpush1.msra.mxu0 0.0
    %3131 = vmatprep.subr.mxu0 0.0
    %3132 = vmatpush1.msra.mxu0 0.0
    %3133 = vmatprep.subr.mxu0 0.0
    %3134 = vmatpush1.msra.mxu0 0.0
    %3135 = vmatprep.subr.mxu0 0.0
    %3136 = vmatpush1.msra.mxu0 0.0
    %3137 = vmatprep.subr.mxu0 0.0
    %3138 = vmatpush1.msra.mxu0 0.0
    %3139 = vmatprep.subr.mxu0 0.0
    %3140 = vmatpush1.msra.mxu0 0.0
    %3141 = vmatprep.subr.mxu0 0.0
    %3142 = vmatpush1.msra.mxu0 0.0
    %3143 = vmatprep.subr.mxu0 0.0
    %3144 = vmatpush1.msra.mxu0 0.0
    %3145 = vmatprep.subr.mxu0 0.0
    %3146 = vmatpush1.msra.mxu0 0.0
    %3147 = vmatprep.subr.mxu0 0.0
    %3148 = vmatpush1.msra.mxu0 0.0
    %3149 = vmatprep.subr.mxu0 0.0
    %3150 = vmatpush1.msra.mxu0 0.0
    %3151 = vmatprep.subr.mxu0 0.0
    %3152 = vmatpush1.msra.mxu0 0.0
    %3153 = vmatprep.subr.mxu0 0.0
    %3154 = vmatpush1.msra.mxu0 0.0
    %3155 = vmatprep.subr.mxu0 0.0
    %3156 = vmatpush1.msra.mxu0 0.0
    %3157 = vmatprep.subr.mxu0 0.0
    %3158 = vmatpush1.msra.mxu0 0.0
    %3159 = vmatprep.subr.mxu0 0.0
    %3160 = vmatpush1.msra.mxu0 0.0
    %3161 = vmatprep.subr.mxu0 0.0
    %3162 = vmatpush1.msra.mxu0 0.0
    %3163 = vmatprep.subr.mxu0 0.0
    %3164 = vmatpush1.msra.mxu0 0.0
    %3165 = vmatprep.subr.mxu0 0.0
    %3166 = vmatpush1.msra.mxu0 0.0
    %3167 = vmatprep.subr.mxu0 0.0
    %3168 = vmatpush1.msra.mxu0 0.0
    %3169 = vmatprep.subr.mxu0 0.0
    %3170 = vmatpush1.msra.mxu0 0.0
    %3171 = vmatprep.subr.mxu0 0.0
    %3172 = vmatpush1.msra.mxu0 0.0
    %3173 = vmatprep.subr.mxu0 0.0
    %3174 = vmatpush1.msra.mxu0 0.0
    %3175 = vmatprep.subr.mxu0 0.0
    %3176 = vmatpush1.msra.mxu0 0.0
    %3177 = vmatprep.mubr.f32.mxu0 0.0
    %3178 = vmatmul.mubr.f32.gmra.mrb[0].mxu0 %v3111
    %v3179 = vpop.f32.mrb[0].mxu0
    %v3180 = vadd.f32 0.0, %v3179
    %v3181 = vpop.f32.mrb[0].mxu0
    %3182 = vdwg.mxu0
    %3183 = vrot.lane.b32.xlu0 %v2177, 112
    %v3184 = vpop.permute.xlu0 %3183
    %3185 = vrot.lane.b32.xlu0 %v2177, 80
    %v3186 = vpop.permute.xlu0 %3185
    %v3187 = vsel %vm378, %v3184, 0
    %v3189 = vsel %vm378, %v3186, 0
    %3191 = vmatprep.subr.mxu0 0.0
    %3192 = vmatpush1.xpose.msra.mxu0 %v3189
    %3193 = vmatprep.subr.mxu0 0.0
    %3194 = vmatpush1.xpose.msra.mxu0 0.0
    %3195 = vmatprep.subr.mxu0 0.0
    %3196 = vmatpush1.xpose.msra.mxu0 0.0
    %3197 = vmatprep.subr.mxu0 0.0
    %3198 = vmatpush1.xpose.msra.mxu0 0.0
    %3199 = vmatprep.subr.mxu0 0.0
    %3200 = vmatpush1.xpose.msra.mxu0 0.0
    %3201 = vmatprep.subr.mxu0 0.0
    %3202 = vmatpush1.xpose.msra.mxu0 0.0
    %3203 = vmatprep.subr.mxu0 0.0
    %3204 = vmatpush1.xpose.msra.mxu0 0.0
    %3205 = vmatprep.subr.mxu0 0.0
    %3206 = vmatpush1.xpose.msra.mxu0 0.0
    %3207 = vmatprep.subr.mxu0 0.0
    %3208 = vmatpush1.xpose.msra.mxu0 0.0
    %3209 = vmatprep.subr.mxu0 0.0
    %3210 = vmatpush1.xpose.msra.mxu0 0.0
    %3211 = vmatprep.subr.mxu0 0.0
    %3212 = vmatpush1.xpose.msra.mxu0 0.0
    %3213 = vmatprep.subr.mxu0 0.0
    %3214 = vmatpush1.xpose.msra.mxu0 0.0
    %3215 = vmatprep.subr.mxu0 0.0
    %3216 = vmatpush1.xpose.msra.mxu0 0.0
    %3217 = vmatprep.subr.mxu0 0.0
    %3218 = vmatpush1.xpose.msra.mxu0 0.0
    %3219 = vmatprep.subr.mxu0 0.0
    %3220 = vmatpush1.xpose.msra.mxu0 0.0
    %3221 = vmatprep.subr.mxu0 0.0
    %3222 = vmatpush1.xpose.msra.mxu0 0.0
    %3223 = vmatprep.subr.mxu0 0.0
    %3224 = vmatpush1.xpose.msra.mxu0 0.0
    %3225 = vmatprep.subr.mxu0 0.0
    %3226 = vmatpush1.xpose.msra.mxu0 0.0
    %3227 = vmatprep.subr.mxu0 0.0
    %3228 = vmatpush1.xpose.msra.mxu0 0.0
    %3229 = vmatprep.subr.mxu0 0.0
    %3230 = vmatpush1.xpose.msra.mxu0 0.0
    %3231 = vmatprep.subr.mxu0 0.0
    %3232 = vmatpush1.xpose.msra.mxu0 0.0
    %3233 = vmatprep.subr.mxu0 0.0
    %3234 = vmatpush1.xpose.msra.mxu0 0.0
    %3235 = vmatprep.subr.mxu0 0.0
    %3236 = vmatpush1.xpose.msra.mxu0 0.0
    %3237 = vmatprep.subr.mxu0 0.0
    %3238 = vmatpush1.xpose.msra.mxu0 0.0
    %3239 = vmatprep.subr.mxu0 0.0
    %3240 = vmatpush1.xpose.msra.mxu0 0.0
    %3241 = vmatprep.subr.mxu0 0.0
    %3242 = vmatpush1.xpose.msra.mxu0 0.0
    %3243 = vmatprep.subr.mxu0 0.0
    %3244 = vmatpush1.xpose.msra.mxu0 0.0
    %3245 = vmatprep.subr.mxu0 0.0
    %3246 = vmatpush1.xpose.msra.mxu0 0.0
    %3247 = vmatprep.subr.mxu0 0.0
    %3248 = vmatpush1.xpose.msra.mxu0 0.0
    %3249 = vmatprep.subr.mxu0 0.0
    %3250 = vmatpush1.xpose.msra.mxu0 0.0
    %3251 = vmatprep.subr.mxu0 0.0
    %3252 = vmatpush1.xpose.msra.mxu0 0.0
    %3253 = vmatprep.subr.mxu0 0.0
    %3254 = vmatpush1.xpose.msra.mxu0 0.0
    %3255 = vmatprep.mubr.f32.mxu0 0.0
    %3256 = vmatmul.mubr.f32.gmra.mrb[0].mxu0 %v3187
    %v3257 = vpop.f32.mrb[0].mxu0
    %v3258 = vadd.f32 0.0, %v3257
    %v3259 = vpop.f32.mrb[0].mxu0
    %3260 = vdwg.mxu0
    %v3261 = vsel %vm378, %v3258, -inf
    %3262 = vmax.xlane.f32.xlu0 %v3261
    %v3263 = vpop.xlane.xlu0 %3262
    %v3264 = vsub.f32 %v3258, %v3263
    %v3265 = vmul.f32 %v3264, 1.442695
    %v3266 = vpow.pop %v3265
    %v3267 = vsel %vm378, %v3266, 0.0
    %3268 = vadd.xlane.f32.xlu0 %v3267
    %v3269 = vpop.xlane.xlu0 %3268
    %v3270 = vrcp.pop %v3269
    %v3271 = vmul.f32 %v3266, %v3270
    %3272 = vrot.lane.b32.xlu0 %v2177, 48
    %v3273 = vpop.permute.xlu0 %3272
    %v3276 = vsel %vm378, %v3271, 0
    %3278 = vmatprep.subr.mxu0 0.0
    %3279 = vmatpush1.msra.mxu0 %v3273
    %3280 = vmatprep.subr.mxu0 0.0
    %3281 = vmatpush1.msra.mxu0 0.0
    %3282 = vmatprep.subr.mxu0 0.0
    %3283 = vmatpush1.msra.mxu0 0.0
    %3284 = vmatprep.subr.mxu0 0.0
    %3285 = vmatpush1.msra.mxu0 0.0
    %3286 = vmatprep.subr.mxu0 0.0
    %3287 = vmatpush1.msra.mxu0 0.0
    %3288 = vmatprep.subr.mxu0 0.0
    %3289 = vmatpush1.msra.mxu0 0.0
    %3290 = vmatprep.subr.mxu0 0.0
    %3291 = vmatpush1.msra.mxu0 0.0
    %3292 = vmatprep.subr.mxu0 0.0
    %3293 = vmatpush1.msra.mxu0 0.0
    %3294 = vmatprep.subr.mxu0 0.0
    %3295 = vmatpush1.msra.mxu0 0.0
    %3296 = vmatprep.subr.mxu0 0.0
    %3297 = vmatpush1.msra.mxu0 0.0
    %3298 = vmatprep.subr.mxu0 0.0
    %3299 = vmatpush1.msra.mxu0 0.0
    %3300 = vmatprep.subr.mxu0 0.0
    %3301 = vmatpush1.msra.mxu0 0.0
    %3302 = vmatprep.subr.mxu0 0.0
    %3303 = vmatpush1.msra.mxu0 0.0
    %3304 = vmatprep.subr.mxu0 0.0
    %3305 = vmatpush1.msra.mxu0 0.0
    %3306 = vmatprep.subr.mxu0 0.0
    %3307 = vmatpush1.msra.mxu0 0.0
    %3308 = vmatprep.subr.mxu0 0.0
    %3309 = vmatpush1.msra.mxu0 0.0
    %3310 = vmatprep.subr.mxu0 0.0
    %3311 = vmatpush1.msra.mxu0 0.0
    %3312 = vmatprep.subr.mxu0 0.0
    %3313 = vmatpush1.msra.mxu0 0.0
    %3314 = vmatprep.subr.mxu0 0.0
    %3315 = vmatpush1.msra.mxu0 0.0
    %3316 = vmatprep.subr.mxu0 0.0
    %3317 = vmatpush1.msra.mxu0 0.0
    %3318 = vmatprep.subr.mxu0 0.0
    %3319 = vmatpush1.msra.mxu0 0.0
    %3320 = vmatprep.subr.mxu0 0.0
    %3321 = vmatpush1.msra.mxu0 0.0
    %3322 = vmatprep.subr.mxu0 0.0
    %3323 = vmatpush1.msra.mxu0 0.0
    %3324 = vmatprep.subr.mxu0 0.0
    %3325 = vmatpush1.msra.mxu0 0.0
    %3326 = vmatprep.subr.mxu0 0.0
    %3327 = vmatpush1.msra.mxu0 0.0
    %3328 = vmatprep.subr.mxu0 0.0
    %3329 = vmatpush1.msra.mxu0 0.0
    %3330 = vmatprep.subr.mxu0 0.0
    %3331 = vmatpush1.msra.mxu0 0.0
    %3332 = vmatprep.subr.mxu0 0.0
    %3333 = vmatpush1.msra.mxu0 0.0
    %3334 = vmatprep.subr.mxu0 0.0
    %3335 = vmatpush1.msra.mxu0 0.0
    %3336 = vmatprep.subr.mxu0 0.0
    %3337 = vmatpush1.msra.mxu0 0.0
    %3338 = vmatprep.subr.mxu0 0.0
    %3339 = vmatpush1.msra.mxu0 0.0
    %3340 = vmatprep.subr.mxu0 0.0
    %3341 = vmatpush1.msra.mxu0 0.0
    %3342 = vmatprep.mubr.f32.mxu0 0.0
    %3343 = vmatmul.mubr.f32.gmra.mrb[0].mxu0 %v3276
    %v3344 = vpop.f32.mrb[0].mxu0
    %v3345 = vadd.f32 0.0, %v3344
    %v3346 = vpop.f32.mrb[0].mxu0
    %3347 = vdwg.mxu0
    %3348 = vrot.lane.b32.xlu0 %v2177, 104
    %v3349 = vpop.permute.xlu0 %3348
    %3350 = vrot.lane.b32.xlu0 %v2177, 72
    %v3351 = vpop.permute.xlu0 %3350
    %v3352 = vsel %vm378, %v3349, 0
    %v3354 = vsel %vm378, %v3351, 0
    %3356 = vmatprep.subr.mxu0 0.0
    %3357 = vmatpush1.xpose.msra.mxu0 %v3354
    %3358 = vmatprep.subr.mxu0 0.0
    %3359 = vmatpush1.xpose.msra.mxu0 0.0
    %3360 = vmatprep.subr.mxu0 0.0
    %3361 = vmatpush1.xpose.msra.mxu0 0.0
    %3362 = vmatprep.subr.mxu0 0.0
    %3363 = vmatpush1.xpose.msra.mxu0 0.0
    %3364 = vmatprep.subr.mxu0 0.0
    %3365 = vmatpush1.xpose.msra.mxu0 0.0
    %3366 = vmatprep.subr.mxu0 0.0
    %3367 = vmatpush1.xpose.msra.mxu0 0.0
    %3368 = vmatprep.subr.mxu0 0.0
    %3369 = vmatpush1.xpose.msra.mxu0 0.0
    %3370 = vmatprep.subr.mxu0 0.0
    %3371 = vmatpush1.xpose.msra.mxu0 0.0
    %3372 = vmatprep.subr.mxu0 0.0
    %3373 = vmatpush1.xpose.msra.mxu0 0.0
    %3374 = vmatprep.subr.mxu0 0.0
    %3375 = vmatpush1.xpose.msra.mxu0 0.0
    %3376 = vmatprep.subr.mxu0 0.0
    %3377 = vmatpush1.xpose.msra.mxu0 0.0
    %3378 = vmatprep.subr.mxu0 0.0
    %3379 = vmatpush1.xpose.msra.mxu0 0.0
    %3380 = vmatprep.subr.mxu0 0.0
    %3381 = vmatpush1.xpose.msra.mxu0 0.0
    %3382 = vmatprep.subr.mxu0 0.0
    %3383 = vmatpush1.xpose.msra.mxu0 0.0
    %3384 = vmatprep.subr.mxu0 0.0
    %3385 = vmatpush1.xpose.msra.mxu0 0.0
    %3386 = vmatprep.subr.mxu0 0.0
    %3387 = vmatpush1.xpose.msra.mxu0 0.0
    %3388 = vmatprep.subr.mxu0 0.0
    %3389 = vmatpush1.xpose.msra.mxu0 0.0
    %3390 = vmatprep.subr.mxu0 0.0
    %3391 = vmatpush1.xpose.msra.mxu0 0.0
    %3392 = vmatprep.subr.mxu0 0.0
    %3393 = vmatpush1.xpose.msra.mxu0 0.0
    %3394 = vmatprep.subr.mxu0 0.0
    %3395 = vmatpush1.xpose.msra.mxu0 0.0
    %3396 = vmatprep.subr.mxu0 0.0
    %3397 = vmatpush1.xpose.msra.mxu0 0.0
    %3398 = vmatprep.subr.mxu0 0.0
    %3399 = vmatpush1.xpose.msra.mxu0 0.0
    %3400 = vmatprep.subr.mxu0 0.0
    %3401 = vmatpush1.xpose.msra.mxu0 0.0
    %3402 = vmatprep.subr.mxu0 0.0
    %3403 = vmatpush1.xpose.msra.mxu0 0.0
    %3404 = vmatprep.subr.mxu0 0.0
    %3405 = vmatpush1.xpose.msra.mxu0 0.0
    %3406 = vmatprep.subr.mxu0 0.0
    %3407 = vmatpush1.xpose.msra.mxu0 0.0
    %3408 = vmatprep.subr.mxu0 0.0
    %3409 = vmatpush1.xpose.msra.mxu0 0.0
    %3410 = vmatprep.subr.mxu0 0.0
    %3411 = vmatpush1.xpose.msra.mxu0 0.0
    %3412 = vmatprep.subr.mxu0 0.0
    %3413 = vmatpush1.xpose.msra.mxu0 0.0
    %3414 = vmatprep.subr.mxu0 0.0
    %3415 = vmatpush1.xpose.msra.mxu0 0.0
    %3416 = vmatprep.subr.mxu0 0.0
    %3417 = vmatpush1.xpose.msra.mxu0 0.0
    %3418 = vmatprep.subr.mxu0 0.0
    %3419 = vmatpush1.xpose.msra.mxu0 0.0
    %3420 = vmatprep.mubr.f32.mxu0 0.0
    %3421 = vmatmul.mubr.f32.gmra.mrb[0].mxu0 %v3352
    %v3422 = vpop.f32.mrb[0].mxu0
    %v3423 = vadd.f32 0.0, %v3422
    %v3424 = vpop.f32.mrb[0].mxu0
    %3425 = vdwg.mxu0
    %v3426 = vsel %vm378, %v3423, -inf
    %3427 = vmax.xlane.f32.xlu0 %v3426
    %v3428 = vpop.xlane.xlu0 %3427
    %v3429 = vsub.f32 %v3423, %v3428
    %v3430 = vmul.f32 %v3429, 1.442695
    %v3431 = vpow.pop %v3430
    %v3432 = vsel %vm378, %v3431, 0.0
    %3433 = vadd.xlane.f32.xlu0 %v3432
    %v3434 = vpop.xlane.xlu0 %3433
    %v3435 = vrcp.pop %v3434
    %v3436 = vmul.f32 %v3431, %v3435
    %3437 = vrot.lane.b32.xlu0 %v2177, 40
    %v3438 = vpop.permute.xlu0 %3437
    %v3441 = vsel %vm378, %v3436, 0
    %3443 = vmatprep.subr.mxu0 0.0
    %3444 = vmatpush1.msra.mxu0 %v3438
    %3445 = vmatprep.subr.mxu0 0.0
    %3446 = vmatpush1.msra.mxu0 0.0
    %3447 = vmatprep.subr.mxu0 0.0
    %3448 = vmatpush1.msra.mxu0 0.0
    %3449 = vmatprep.subr.mxu0 0.0
    %3450 = vmatpush1.msra.mxu0 0.0
    %3451 = vmatprep.subr.mxu0 0.0
    %3452 = vmatpush1.msra.mxu0 0.0
    %3453 = vmatprep.subr.mxu0 0.0
    %3454 = vmatpush1.msra.mxu0 0.0
    %3455 = vmatprep.subr.mxu0 0.0
    %3456 = vmatpush1.msra.mxu0 0.0
    %3457 = vmatprep.subr.mxu0 0.0
    %3458 = vmatpush1.msra.mxu0 0.0
    %3459 = vmatprep.subr.mxu0 0.0
    %3460 = vmatpush1.msra.mxu0 0.0
    %3461 = vmatprep.subr.mxu0 0.0
    %3462 = vmatpush1.msra.mxu0 0.0
    %3463 = vmatprep.subr.mxu0 0.0
    %3464 = vmatpush1.msra.mxu0 0.0
    %3465 = vmatprep.subr.mxu0 0.0
    %3466 = vmatpush1.msra.mxu0 0.0
    %3467 = vmatprep.subr.mxu0 0.0
    %3468 = vmatpush1.msra.mxu0 0.0
    %3469 = vmatprep.subr.mxu0 0.0
    %3470 = vmatpush1.msra.mxu0 0.0
    %3471 = vmatprep.subr.mxu0 0.0
    %3472 = vmatpush1.msra.mxu0 0.0
    %3473 = vmatprep.subr.mxu0 0.0
    %3474 = vmatpush1.msra.mxu0 0.0
    %3475 = vmatprep.subr.mxu0 0.0
    %3476 = vmatpush1.msra.mxu0 0.0
    %3477 = vmatprep.subr.mxu0 0.0
    %3478 = vmatpush1.msra.mxu0 0.0
    %3479 = vmatprep.subr.mxu0 0.0
    %3480 = vmatpush1.msra.mxu0 0.0
    %3481 = vmatprep.subr.mxu0 0.0
    %3482 = vmatpush1.msra.mxu0 0.0
    %3483 = vmatprep.subr.mxu0 0.0
    %3484 = vmatpush1.msra.mxu0 0.0
    %3485 = vmatprep.subr.mxu0 0.0
    %3486 = vmatpush1.msra.mxu0 0.0
    %3487 = vmatprep.subr.mxu0 0.0
    %3488 = vmatpush1.msra.mxu0 0.0
    %3489 = vmatprep.subr.mxu0 0.0
    %3490 = vmatpush1.msra.mxu0 0.0
    %3491 = vmatprep.subr.mxu0 0.0
    %3492 = vmatpush1.msra.mxu0 0.0
    %3493 = vmatprep.subr.mxu0 0.0
    %3494 = vmatpush1.msra.mxu0 0.0
    %3495 = vmatprep.subr.mxu0 0.0
    %3496 = vmatpush1.msra.mxu0 0.0
    %3497 = vmatprep.subr.mxu0 0.0
    %3498 = vmatpush1.msra.mxu0 0.0
    %3499 = vmatprep.subr.mxu0 0.0
    %3500 = vmatpush1.msra.mxu0 0.0
    %3501 = vmatprep.subr.mxu0 0.0
    %3502 = vmatpush1.msra.mxu0 0.0
    %3503 = vmatprep.subr.mxu0 0.0
    %3504 = vmatpush1.msra.mxu0 0.0
    %3505 = vmatprep.subr.mxu0 0.0
    %3506 = vmatpush1.msra.mxu0 0.0
    %3507 = vmatprep.mubr.f32.mxu0 0.0
    %3508 = vmatmul.mubr.f32.gmra.mrb[0].mxu0 %v3441
    %v3509 = vpop.f32.mrb[0].mxu0
    %v3510 = vadd.f32 0.0, %v3509
    %v3511 = vpop.f32.mrb[0].mxu0
    %3512 = vdwg.mxu0
    %3514 = vrot.lane.b32.xlu0 %v3180, 8
    %v3515 = vpop.permute.xlu0 %3514
    %3518 = vrot.lane.b32.xlu0 %v3345, 16
    %v3519 = vpop.permute.xlu0 %3518
    %3522 = vrot.lane.b32.xlu0 %v3510, 24
    %v3523 = vpop.permute.xlu0 %3522
    %v3525 = vsel %vm378, %v3015, %v3515
    %v3526 = vsel %vm111, %v3525, %v3519
    %v3527 = vsel %vm1049, %v3526, %v3523
    %s3528 = scalar_lea.vmem %s6, 32
    %v3529 = vld [vmem:[%s3528] sm:$0xff]
    %v3530 = vld [vmem:[%s3528 + $0x8] sm:$0xff]
    %v3531 = vld [vmem:[%s3528 + $0x10] sm:$0xff]
    %v3532 = vld [vmem:[%s3528 + $0x18] sm:$0xff]
    %v3533 = vlaneseq
    %v3534 = vshrl.u32 %v3533, 7
    %v3535 = vsub.s32 1, %v3534
    %v3536 = vrot.slane %v2089, %v3535
    %v3538 = vsel %vm203, %v2853, 0
    %v3541 = vsel %vm203, %v3527, 0
    %3543 = vmatprep.subr.mxu0 0.0
    %3544 = vmatpush1.msra.mxu0 %v3529
    %3545 = vmatprep.subr.mxu0 0.0
    %3546 = vmatpush1.msra.mxu0 %v3530
    %3547 = vmatprep.subr.mxu0 0.0
    %3548 = vmatpush1.msra.mxu0 %v3531
    %3549 = vmatprep.subr.mxu0 0.0
    %3550 = vmatpush1.msra.mxu0 %v3532
    %3551 = vmatprep.subr.mxu0 0.0
    %3552 = vmatpush1.msra.mxu0 0.0
    %3553 = vmatprep.subr.mxu0 0.0
    %3554 = vmatpush1.msra.mxu0 0.0
    %3555 = vmatprep.subr.mxu0 0.0
    %3556 = vmatpush1.msra.mxu0 0.0
    %3557 = vmatprep.subr.mxu0 0.0
    %3558 = vmatpush1.msra.mxu0 0.0
    %3559 = vmatprep.subr.mxu0 0.0
    %3560 = vmatpush1.msra.mxu0 0.0
    %3561 = vmatprep.subr.mxu0 0.0
    %3562 = vmatpush1.msra.mxu0 0.0
    %3563 = vmatprep.subr.mxu0 0.0
    %3564 = vmatpush1.msra.mxu0 0.0
    %3565 = vmatprep.subr.mxu0 0.0
    %3566 = vmatpush1.msra.mxu0 0.0
    %3567 = vmatprep.subr.mxu0 0.0
    %3568 = vmatpush1.msra.mxu0 0.0
    %3569 = vmatprep.subr.mxu0 0.0
    %3570 = vmatpush1.msra.mxu0 0.0
    %3571 = vmatprep.subr.mxu0 0.0
    %3572 = vmatpush1.msra.mxu0 0.0
    %3573 = vmatprep.subr.mxu0 0.0
    %3574 = vmatpush1.msra.mxu0 0.0
    %3575 = vmatprep.subr.mxu0 0.0
    %3576 = vmatpush1.msra.mxu0 0.0
    %3577 = vmatprep.subr.mxu0 0.0
    %3578 = vmatpush1.msra.mxu0 0.0
    %3579 = vmatprep.subr.mxu0 0.0
    %3580 = vmatpush1.msra.mxu0 0.0
    %3581 = vmatprep.subr.mxu0 0.0
    %3582 = vmatpush1.msra.mxu0 0.0
    %3583 = vmatprep.subr.mxu0 0.0
    %3584 = vmatpush1.msra.mxu0 0.0
    %3585 = vmatprep.subr.mxu0 0.0
    %3586 = vmatpush1.msra.mxu0 0.0
    %3587 = vmatprep.subr.mxu0 0.0
    %3588 = vmatpush1.msra.mxu0 0.0
    %3589 = vmatprep.subr.mxu0 0.0
    %3590 = vmatpush1.msra.mxu0 0.0
    %3591 = vmatprep.subr.mxu0 0.0
    %3592 = vmatpush1.msra.mxu0 0.0
    %3593 = vmatprep.subr.mxu0 0.0
    %3594 = vmatpush1.msra.mxu0 0.0
    %3595 = vmatprep.subr.mxu0 0.0
    %3596 = vmatpush1.msra.mxu0 0.0
    %3597 = vmatprep.subr.mxu0 0.0
    %3598 = vmatpush1.msra.mxu0 0.0
    %3599 = vmatprep.subr.mxu0 0.0
    %3600 = vmatpush1.msra.mxu0 0.0
    %3601 = vmatprep.subr.mxu0 0.0
    %3602 = vmatpush1.msra.mxu0 0.0
    %3603 = vmatprep.subr.mxu0 0.0
    %3604 = vmatpush1.msra.mxu0 0.0
    %3605 = vmatprep.subr.mxu0 0.0
    %3606 = vmatpush1.msra.mxu0 0.0
    %3607 = vmatprep.mubr.f32.mxu0 0.0
    %3608 = vmatmul.mubr.f32.gmra.mrb[0].mxu0 %v3538
    %v3609 = vpop.f32.mrb[0].mxu0
    %v3610 = vadd.f32 %v3536, %v3609
    %v3611 = vpop.f32.mrb[0].mxu0
    %3612 = vmatprep.mubr.f32.mxu0 0.0
    %3613 = vmatmul.mubr.f32.gmra.mrb[0].mxu0 %v3541
    %v3614 = vpop.f32.mrb[0].mxu0
    %v3615 = vadd.f32 %v3536, %v3614
    %v3616 = vpop.f32.mrb[0].mxu0
    %3617 = vdwg.mxu0
    %v3618 = vadd.f32 %v3610, %v2086
    %v3619 = vadd.f32 %v3615, %v2087
    %v3620 = vsel %vm203, %v3618, 0.0
    %3621 = vadd.xlane.f32.xlu0 %v3620
    %v3622 = vpop.xlane.xlu0 %3621
    %v3623 = vsel %vm203, %v3619, 0.0
    %3624 = vadd.xlane.f32.xlu0 %v3623
    %v3625 = vpop.xlane.xlu0 %3624
    %v3626 = vmul.f32 %v3622, %v1822
    %v3627 = vmul.f32 %v3625, %v1822
    %v3628 = vmul.f32 %v3618, %v3618
    %v3629 = vmul.f32 %v3619, %v3619
    %v3630 = vsel %vm203, %v3628, 0.0
    %3631 = vadd.xlane.f32.xlu0 %v3630
    %v3632 = vpop.xlane.xlu0 %3631
    %v3633 = vsel %vm203, %v3629, 0.0
    %3634 = vadd.xlane.f32.xlu0 %v3633
    %v3635 = vpop.xlane.xlu0 %3634
    %v3636 = vmul.f32 %v3632, %v1822
    %v3637 = vmul.f32 %v3635, %v1822
    %v3638 = vmul.f32 %v3626, %v3626
    %v3639 = vmul.f32 %v3627, %v3627
    %v3640 = vsub.f32 %v3636, %v3638
    %v3641 = vsub.f32 %v3637, %v3639
    %v3642 = vsub.f32 %v3618, %v3626
    %v3643 = vsub.f32 %v3619, %v3627
    %v3644 = vadd.f32 %v3640, 1e-05
    %v3645 = vadd.f32 %v3641, 1e-05
    %v3646 = vrsqrt.pop %v3644
    %v3647 = vrsqrt.pop %v3645
    %v3648 = vmul.f32 %v3642, %v3646
    %v3649 = vmul.f32 %v3643, %v3647
    %v3650 = vlaneseq
    %v3651 = vshrl.u32 %v3650, 7
    %v3652 = vsub.s32 2, %v3651
    %v3653 = vrot.slane %v2089, %v3652
    %v3654 = vmul.f32 %v3648, %v3653
    %v3655 = vmul.f32 %v3649, %v3653
    %v3656 = vlaneseq
    %v3657 = vshrl.u32 %v3656, 7
    %v3658 = vsub.s32 3, %v3657
    %v3659 = vrot.slane %v2089, %v3658
    %v3660 = vadd.f32 %v3654, %v3659
    %v3661 = vadd.f32 %v3655, %v3659
    %s3662 = scalar_lea.vmem %s7, 32
    %v3663 = vld [vmem:[%s3662] sm:$0xff]
    %v3664 = vld [vmem:[%s3662 + $0x8] sm:$0xff]
    %v3665 = vld [vmem:[%s3662 + $0x10] sm:$0xff]
    %v3666 = vld [vmem:[%s3662 + $0x18] sm:$0xff]
    %v3667 = vlaneseq
    %v3668 = vshrl.u32 %v3667, 7
    %v3669 = vsub.s32 4, %v3668
    %v3670 = vrot.slane %v2089, %v3669
    %v3672 = vsel %vm203, %v3660, 0
    %v3675 = vsel %vm203, %v3661, 0
    %3677 = vmatprep.subr.mxu0 0.0
    %3678 = vmatpush1.msra.mxu0 %v3663
    %3679 = vmatprep.subr.mxu0 0.0
    %3680 = vmatpush1.msra.mxu0 %v3664
    %3681 = vmatprep.subr.mxu0 0.0
    %3682 = vmatpush1.msra.mxu0 %v3665
    %3683 = vmatprep.subr.mxu0 0.0
    %3684 = vmatpush1.msra.mxu0 %v3666
    %3685 = vmatprep.subr.mxu0 0.0
    %3686 = vmatpush1.msra.mxu0 0.0
    %3687 = vmatprep.subr.mxu0 0.0
    %3688 = vmatpush1.msra.mxu0 0.0
    %3689 = vmatprep.subr.mxu0 0.0
    %3690 = vmatpush1.msra.mxu0 0.0
    %3691 = vmatprep.subr.mxu0 0.0
    %3692 = vmatpush1.msra.mxu0 0.0
    %3693 = vmatprep.subr.mxu0 0.0
    %3694 = vmatpush1.msra.mxu0 0.0
    %3695 = vmatprep.subr.mxu0 0.0
    %3696 = vmatpush1.msra.mxu0 0.0
    %3697 = vmatprep.subr.mxu0 0.0
    %3698 = vmatpush1.msra.mxu0 0.0
    %3699 = vmatprep.subr.mxu0 0.0
    %3700 = vmatpush1.msra.mxu0 0.0
    %3701 = vmatprep.subr.mxu0 0.0
    %3702 = vmatpush1.msra.mxu0 0.0
    %3703 = vmatprep.subr.mxu0 0.0
    %3704 = vmatpush1.msra.mxu0 0.0
    %3705 = vmatprep.subr.mxu0 0.0
    %3706 = vmatpush1.msra.mxu0 0.0
    %3707 = vmatprep.subr.mxu0 0.0
    %3708 = vmatpush1.msra.mxu0 0.0
    %3709 = vmatprep.subr.mxu0 0.0
    %3710 = vmatpush1.msra.mxu0 0.0
    %3711 = vmatprep.subr.mxu0 0.0
    %3712 = vmatpush1.msra.mxu0 0.0
    %3713 = vmatprep.subr.mxu0 0.0
    %3714 = vmatpush1.msra.mxu0 0.0
    %3715 = vmatprep.subr.mxu0 0.0
    %3716 = vmatpush1.msra.mxu0 0.0
    %3717 = vmatprep.subr.mxu0 0.0
    %3718 = vmatpush1.msra.mxu0 0.0
    %3719 = vmatprep.subr.mxu0 0.0
    %3720 = vmatpush1.msra.mxu0 0.0
    %3721 = vmatprep.subr.mxu0 0.0
    %3722 = vmatpush1.msra.mxu0 0.0
    %3723 = vmatprep.subr.mxu0 0.0
    %3724 = vmatpush1.msra.mxu0 0.0
    %3725 = vmatprep.subr.mxu0 0.0
    %3726 = vmatpush1.msra.mxu0 0.0
    %3727 = vmatprep.subr.mxu0 0.0
    %3728 = vmatpush1.msra.mxu0 0.0
    %3729 = vmatprep.subr.mxu0 0.0
    %3730 = vmatpush1.msra.mxu0 0.0
    %3731 = vmatprep.subr.mxu0 0.0
    %3732 = vmatpush1.msra.mxu0 0.0
    %3733 = vmatprep.subr.mxu0 0.0
    %3734 = vmatpush1.msra.mxu0 0.0
    %3735 = vmatprep.subr.mxu0 0.0
    %3736 = vmatpush1.msra.mxu0 0.0
    %3737 = vmatprep.subr.mxu0 0.0
    %3738 = vmatpush1.msra.mxu0 0.0
    %3739 = vmatprep.subr.mxu0 0.0
    %3740 = vmatpush1.msra.mxu0 0.0
    %3741 = vmatprep.mubr.f32.mxu0 0.0
    %3742 = vmatmul.mubr.f32.gmra.mrb[0].mxu0 %v3672
    %v3743 = vpop.f32.mrb[0].mxu0
    %v3744 = vadd.f32 %v3670, %v3743
    %v3745 = vpop.f32.mrb[0].mxu0
    %3746 = vmatprep.mubr.f32.mxu0 0.0
    %3747 = vmatmul.mubr.f32.gmra.mrb[0].mxu0 %v3675
    %v3748 = vpop.f32.mrb[0].mxu0
    %v3749 = vadd.f32 %v3670, %v3748
    %v3750 = vpop.f32.mrb[0].mxu0
    %3751 = vdwg.mxu0
    %v3752 = vmax.f32 %v3744, 0.0
    %v3753 = vmax.f32 %v3749, 0.0
    %s3754 = scalar_lea.vmem %s8, 64
    %v3755 = vld [vmem:[%s3754] sm:$0xff]
    %v3756 = vld [vmem:[%s3754 + $0x8] sm:$0xff]
    %v3757 = vld [vmem:[%s3754 + $0x10] sm:$0xff]
    %v3758 = vld [vmem:[%s3754 + $0x18] sm:$0xff]
    %v3759 = vld [vmem:[%s3754 + $0x20] sm:$0xff]
    %v3760 = vld [vmem:[%s3754 + $0x28] sm:$0xff]
    %v3761 = vld [vmem:[%s3754 + $0x30] sm:$0xff]
    %v3762 = vld [vmem:[%s3754 + $0x38] sm:$0xff]
    %v3763 = vlaneseq
    %v3764 = vshrl.u32 %v3763, 7
    %v3765 = vsub.s32 5, %v3764
    %v3766 = vrot.slane %v2089, %v3765
    %v3768 = vsel %vm1962, %v3752, 0
    %v3771 = vsel %vm1962, %v3753, 0
    %3773 = vmatprep.subr.mxu0 0.0
    %3774 = vmatpush1.msra.mxu0 %v3755
    %3775 = vmatprep.subr.mxu0 0.0
    %3776 = vmatpush1.msra.mxu0 %v3756
    %3777 = vmatprep.subr.mxu0 0.0
    %3778 = vmatpush1.msra.mxu0 %v3757
    %3779 = vmatprep.subr.mxu0 0.0
    %3780 = vmatpush1.msra.mxu0 %v3758
    %3781 = vmatprep.subr.mxu0 0.0
    %3782 = vmatpush1.msra.mxu0 %v3759
    %3783 = vmatprep.subr.mxu0 0.0
    %3784 = vmatpush1.msra.mxu0 %v3760
    %3785 = vmatprep.subr.mxu0 0.0
    %3786 = vmatpush1.msra.mxu0 %v3761
    %3787 = vmatprep.subr.mxu0 0.0
    %3788 = vmatpush1.msra.mxu0 %v3762
    %3789 = vmatprep.subr.mxu0 0.0
    %3790 = vmatpush1.msra.mxu0 0.0
    %3791 = vmatprep.subr.mxu0 0.0
    %3792 = vmatpush1.msra.mxu0 0.0
    %3793 = vmatprep.subr.mxu0 0.0
    %3794 = vmatpush1.msra.mxu0 0.0
    %3795 = vmatprep.subr.mxu0 0.0
    %3796 = vmatpush1.msra.mxu0 0.0
    %3797 = vmatprep.subr.mxu0 0.0
    %3798 = vmatpush1.msra.mxu0 0.0
    %3799 = vmatprep.subr.mxu0 0.0
    %3800 = vmatpush1.msra.mxu0 0.0
    %3801 = vmatprep.subr.mxu0 0.0
    %3802 = vmatpush1.msra.mxu0 0.0
    %3803 = vmatprep.subr.mxu0 0.0
    %3804 = vmatpush1.msra.mxu0 0.0
    %3805 = vmatprep.subr.mxu0 0.0
    %3806 = vmatpush1.msra.mxu0 0.0
    %3807 = vmatprep.subr.mxu0 0.0
    %3808 = vmatpush1.msra.mxu0 0.0
    %3809 = vmatprep.subr.mxu0 0.0
    %3810 = vmatpush1.msra.mxu0 0.0
    %3811 = vmatprep.subr.mxu0 0.0
    %3812 = vmatpush1.msra.mxu0 0.0
    %3813 = vmatprep.subr.mxu0 0.0
    %3814 = vmatpush1.msra.mxu0 0.0
    %3815 = vmatprep.subr.mxu0 0.0
    %3816 = vmatpush1.msra.mxu0 0.0
    %3817 = vmatprep.subr.mxu0 0.0
    %3818 = vmatpush1.msra.mxu0 0.0
    %3819 = vmatprep.subr.mxu0 0.0
    %3820 = vmatpush1.msra.mxu0 0.0
    %3821 = vmatprep.subr.mxu0 0.0
    %3822 = vmatpush1.msra.mxu0 0.0
    %3823 = vmatprep.subr.mxu0 0.0
    %3824 = vmatpush1.msra.mxu0 0.0
    %3825 = vmatprep.subr.mxu0 0.0
    %3826 = vmatpush1.msra.mxu0 0.0
    %3827 = vmatprep.subr.mxu0 0.0
    %3828 = vmatpush1.msra.mxu0 0.0
    %3829 = vmatprep.subr.mxu0 0.0
    %3830 = vmatpush1.msra.mxu0 0.0
    %3831 = vmatprep.subr.mxu0 0.0
    %3832 = vmatpush1.msra.mxu0 0.0
    %3833 = vmatprep.subr.mxu0 0.0
    %3834 = vmatpush1.msra.mxu0 0.0
    %3835 = vmatprep.subr.mxu0 0.0
    %3836 = vmatpush1.msra.mxu0 0.0
    %3837 = vmatprep.mubr.f32.mxu0 0.0
    %3838 = vmatmul.mubr.f32.gmra.mrb[0].mxu0 %v3768
    %v3839 = vpop.f32.mrb[0].mxu0
    %v3840 = vadd.f32 %v3766, %v3839
    %v3841 = vpop.f32.mrb[0].mxu0
    %3842 = vmatprep.mubr.f32.mxu0 0.0
    %3843 = vmatmul.mubr.f32.gmra.mrb[0].mxu0 %v3771
    %v3844 = vpop.f32.mrb[0].mxu0
    %v3845 = vadd.f32 %v3766, %v3844
    %v3846 = vpop.f32.mrb[0].mxu0
    %3847 = vdwg.mxu0
    %v3848 = vadd.f32 %v3840, %v3660
    %v3849 = vadd.f32 %v3845, %v3661
    %v3850 = vsel %vm203, %v3848, 0.0
    %3851 = vadd.xlane.f32.xlu0 %v3850
    %v3852 = vpop.xlane.xlu0 %3851
    %v3853 = vsel %vm203, %v3849, 0.0
    %3854 = vadd.xlane.f32.xlu0 %v3853
    %v3855 = vpop.xlane.xlu0 %3854
    %v3856 = vmul.f32 %v3852, %v1822
    %v3857 = vmul.f32 %v3855, %v1822
    %v3858 = vmul.f32 %v3848, %v3848
    %v3859 = vmul.f32 %v3849, %v3849
    %v3860 = vsel %vm203, %v3858, 0.0
    %3861 = vadd.xlane.f32.xlu0 %v3860
    %v3862 = vpop.xlane.xlu0 %3861
    %v3863 = vsel %vm203, %v3859, 0.0
    %3864 = vadd.xlane.f32.xlu0 %v3863
    %v3865 = vpop.xlane.xlu0 %3864
    %v3866 = vmul.f32 %v3862, %v1822
    %v3867 = vmul.f32 %v3865, %v1822
    %v3868 = vmul.f32 %v3856, %v3856
    %v3869 = vmul.f32 %v3857, %v3857
    %v3870 = vsub.f32 %v3866, %v3868
    %v3871 = vsub.f32 %v3867, %v3869
    %v3872 = vsub.f32 %v3848, %v3856
    %v3873 = vsub.f32 %v3849, %v3857
    %v3874 = vadd.f32 %v3870, 1e-05
    %v3875 = vadd.f32 %v3871, 1e-05
    %v3876 = vrsqrt.pop %v3874
    %v3877 = vrsqrt.pop %v3875
    %v3878 = vmul.f32 %v3872, %v3876
    %v3879 = vmul.f32 %v3873, %v3877
    %v3880 = vlaneseq
    %v3881 = vshrl.u32 %v3880, 7
    %v3882 = vsub.s32 6, %v3881
    %v3883 = vrot.slane %v2089, %v3882
    %v3884 = vmul.f32 %v3878, %v3883
    %v3885 = vmul.f32 %v3879, %v3883
    %v3886 = vlaneseq
    %v3887 = vshrl.u32 %v3886, 7
    %v3888 = vsub.s32 7, %v3887
    %v3889 = vrot.slane %v2089, %v3888
    %v3890 = vadd.f32 %v3884, %v3889
    %v3891 = vadd.f32 %v3885, %v3889
    %v3892 = vld [vmem:[#allocation8] sm:$0xff]
    %v3893 = vld [vmem:[#allocation8 + $0x8] sm:$0xff]
    %v3894 = vld [vmem:[#allocation8 + $0x10] sm:$0xff]
    %v3895 = vld [vmem:[#allocation8 + $0x18] sm:$0xff]
    %v3896 = vlaneseq
    %v3897 = vshrl.u32 %v3896, 7
    %v3898 = vsub.s32 2, %v3897
    %v3899 = vrot.slane %v102, %v3898
    %v3901 = vsel %vm203, %v3890, 0
    %v3904 = vsel %vm203, %v3891, 0
    %3906 = vmatprep.subr.mxu0 0.0
    %3907 = vmatpush1.msra.mxu0 %v3892
    %3908 = vmatprep.subr.mxu0 0.0
    %3909 = vmatpush1.msra.mxu0 %v3893
    %3910 = vmatprep.subr.mxu0 0.0
    %3911 = vmatpush1.msra.mxu0 %v3894
    %3912 = vmatprep.subr.mxu0 0.0
    %3913 = vmatpush1.msra.mxu0 %v3895
    %3914 = vmatprep.subr.mxu0 0.0
    %3915 = vmatpush1.msra.mxu0 0.0
    %3916 = vmatprep.subr.mxu0 0.0
    %3917 = vmatpush1.msra.mxu0 0.0
    %3918 = vmatprep.subr.mxu0 0.0
    %3919 = vmatpush1.msra.mxu0 0.0
    %3920 = vmatprep.subr.mxu0 0.0
    %3921 = vmatpush1.msra.mxu0 0.0
    %3922 = vmatprep.subr.mxu0 0.0
    %3923 = vmatpush1.msra.mxu0 0.0
    %3924 = vmatprep.subr.mxu0 0.0
    %3925 = vmatpush1.msra.mxu0 0.0
    %3926 = vmatprep.subr.mxu0 0.0
    %3927 = vmatpush1.msra.mxu0 0.0
    %3928 = vmatprep.subr.mxu0 0.0
    %3929 = vmatpush1.msra.mxu0 0.0
    %3930 = vmatprep.subr.mxu0 0.0
    %3931 = vmatpush1.msra.mxu0 0.0
    %3932 = vmatprep.subr.mxu0 0.0
    %3933 = vmatpush1.msra.mxu0 0.0
    %3934 = vmatprep.subr.mxu0 0.0
    %3935 = vmatpush1.msra.mxu0 0.0
    %3936 = vmatprep.subr.mxu0 0.0
    %3937 = vmatpush1.msra.mxu0 0.0
    %3938 = vmatprep.subr.mxu0 0.0
    %3939 = vmatpush1.msra.mxu0 0.0
    %3940 = vmatprep.subr.mxu0 0.0
    %3941 = vmatpush1.msra.mxu0 0.0
    %3942 = vmatprep.subr.mxu0 0.0
    %3943 = vmatpush1.msra.mxu0 0.0
    %3944 = vmatprep.subr.mxu0 0.0
    %3945 = vmatpush1.msra.mxu0 0.0
    %3946 = vmatprep.subr.mxu0 0.0
    %3947 = vmatpush1.msra.mxu0 0.0
    %3948 = vmatprep.subr.mxu0 0.0
    %3949 = vmatpush1.msra.mxu0 0.0
    %3950 = vmatprep.subr.mxu0 0.0
    %3951 = vmatpush1.msra.mxu0 0.0
    %3952 = vmatprep.subr.mxu0 0.0
    %3953 = vmatpush1.msra.mxu0 0.0
    %3954 = vmatprep.subr.mxu0 0.0
    %3955 = vmatpush1.msra.mxu0 0.0
    %3956 = vmatprep.subr.mxu0 0.0
    %3957 = vmatpush1.msra.mxu0 0.0
    %3958 = vmatprep.subr.mxu0 0.0
    %3959 = vmatpush1.msra.mxu0 0.0
    %3960 = vmatprep.subr.mxu0 0.0
    %3961 = vmatpush1.msra.mxu0 0.0
    %3962 = vmatprep.subr.mxu0 0.0
    %3963 = vmatpush1.msra.mxu0 0.0
    %3964 = vmatprep.subr.mxu0 0.0
    %3965 = vmatpush1.msra.mxu0 0.0
    %3966 = vmatprep.subr.mxu0 0.0
    %3967 = vmatpush1.msra.mxu0 0.0
    %3968 = vmatprep.subr.mxu0 0.0
    %3969 = vmatpush1.msra.mxu0 0.0
    %3970 = vmatprep.mubr.f32.mxu0 0.0
    %3971 = vmatmul.mubr.f32.gmra.mrb[0].mxu0 %v3901
    %v3972 = vpop.f32.mrb[0].mxu0
    %v3973 = vadd.f32 %v3899, %v3972
    %v3974 = vpop.f32.mrb[0].mxu0
    %3975 = vmatprep.mubr.f32.mxu0 0.0
    %3976 = vmatmul.mubr.f32.gmra.mrb[0].mxu0 %v3904
    %v3977 = vpop.f32.mrb[0].mxu0
    %v3978 = vadd.f32 %v3899, %v3977
    %v3979 = vpop.f32.mrb[0].mxu0
    %3980 = vdwg.mxu0
    %3981 = vst.msk [vmem:[#allocation11] sm:$0xff] %vm203, %v3973
    %3982 = vst.msk [vmem:[#allocation11 + $0x8] sm:$0xff] %vm203, %v3978
    // Predicated region
    $region62: #{tpu_custom_call.1} parent=1 // pred_check
      _
    $region63: #{tpu_custom_call.1} parent=1 // pred_check_branch
      %3984 = sbr.rel (0) target = $region65
    $region64: #{tpu_custom_call.1} parent=1 // pred_region
      %s3986 = ssub.s32 256, 256
      %3987 = vsyncadd [#allocation4], %s3986
      %s3988 = sshll.u32 [#allocation11], 4
      %s3989 = int_to_ptr.vmem [resolvable:$true] %s3988
      %3994 = dma.vmem_to_hbm [thread:$0]  %s3989, 256, %s10, [#allocation4], 128, 128, 8
    $region65: #{tpu_custom_call.1} parent=1 // pred_fallthru
      _
    // Predicated region
    $region66: #{tpu_custom_call.1} parent=1 // pred_check
      _
    $region67: #{tpu_custom_call.1} parent=1 // pred_check_branch
      %3996 = sbr.rel (0) target = $region69
    $region68: #{tpu_custom_call.1} parent=1 // pred_region
      %3997 = dma.done [#allocation4], 256
    $region69: #{tpu_custom_call.1} parent=1 // pred_fallthru
      _
    %3998 = vsyncpa [#allocation3], 1
    %3999 = vsyncpa [#allocation6], 1
    %4000 = vsyncpa [#allocation9], 1
    %4001 = vsyncpa [#allocation4], 1

</llo_original>
